<compile_context>
chip_gen: v6e
topology: v6e:2x2x1
jax: 0.10.0
libtpu: 0.0.40
codegen_flags: <defaults>
</compile_context>

<pallas_src>
import math

import jax
import jax.numpy as jnp
from jax import lax
from jax.experimental import pallas as pl
from jax.experimental.pallas import tpu as pltpu

# ----------------------------- small config ---------------------------------
NUM_CLASS = 8            # unused by forward()
SEQ_LEN = 8              # seq_len
NUM_CLIPS = 4            # num_clips
VISUAL_INPUT_DIM = 64    # visual_input_dim
D_MODEL = 128            # d_model
DIM_FF = 256             # dim_feedforward
NHEAD = 4                # nhead
NUM_LAYERS = 2           # num_layers
MODALITIES = ["rgb"]
BATCH = 2


# ----------------------------- fused Pallas kernel --------------------------
def _fused_forward_kernel(
    x_ref,                                   # (1, S, C*V)  one batch's raw clips
    rel_w_ref, rel_b_ref,                    # RelationModule MLP
    emb_w_ref, emb_b_ref, pos_ref,           # FeatureEmbedding + positional emb
    wqkv_ref, bqkv_ref, wo_ref, bo_ref,      # per-layer attention weights (stacked on L)
    ln1_g_ref, ln1_b_ref,
    w1_ref, b1_ref, w2_ref, b2_ref,          # per-layer FFN weights (stacked on L)
    ln2_g_ref, ln2_b_ref,
    o_ref,                                   # (1, S, D) output for this batch
    attn_ref,                                # (S, D) VMEM scratch: packed attention out
):
    f32 = jnp.float32
    S, D = pos_ref.shape
    H = NHEAD
    Dh = D // H
    scale = 1.0 / math.sqrt(Dh)

    # --- representation():  RelationModule (assumed ReLU -> Linear -> ReLU) ---
    # TODO(synk): RelationModule source not provided; assumed TRN-style relation
    #   MLP Sequential(ReLU, Linear(num_clips*visual_input_dim -> d_model), ReLU).
    xm = jnp.maximum(x_ref[0], 0.0)                                     # (S, C*V)
    rel = jnp.dot(xm, rel_w_ref[...], preferred_element_type=f32) + rel_b_ref[...]
    rel = jnp.maximum(rel, 0.0)                                         # (S, D)

    # --- FeatureEmbedding (assumed Linear + learned positional embedding) ---
    # TODO(synk): FeatureEmbedding source not provided; assumed
    #   Linear(d_model*M -> d_model) + learned positional embedding.
    x = jnp.dot(rel, emb_w_ref[...], preferred_element_type=f32) + emb_b_ref[...]
    x = x + pos_ref[...]                                                # (S, D)

    def layer_norm(y, g, b):
        mean = jnp.mean(y, axis=-1, keepdims=True)
        yc = y - mean
        var = jnp.mean(yc * yc, axis=-1, keepdims=True)
        return yc * lax.rsqrt(var + 1e-5) * g + b

    # --- post-norm PyTorch-style TransformerEncoderLayer x NUM_LAYERS --------
    for li in range(NUM_LAYERS):                       # static unroll (L = 2)
        # fused QKV projection: one (S,D) @ (D,3D) MXU matmul
        qkv = jnp.dot(x, wqkv_ref[li], preferred_element_type=f32) + bqkv_ref[li]

        # multi-head attention via static lane slices; packed lane-dense output
        for h in range(H):                             # static unroll (H = 4)
            lo = h * Dh
            q = qkv[:, lo:lo + Dh]                     # (S, Dh)
            k = qkv[:, D + lo:D + lo + Dh]
            v = qkv[:, 2 * D + lo:2 * D + lo + Dh]
            s = lax.dot_general(q, k, (((1,), (1,)), ((), ())),
                                preferred_element_type=f32) * scale     # (S, S)
            s = s - jnp.max(s, axis=-1, keepdims=True)
            p = jnp.exp(s)
            p = p * pl.reciprocal(jnp.sum(p, axis=-1, keepdims=True), approx=True)
            attn_ref[:, lo:lo + Dh] = jnp.dot(p, v, preferred_element_type=f32)

        attn_out = jnp.dot(attn_ref[...], wo_ref[li],
                           preferred_element_type=f32) + bo_ref[li]
        x = layer_norm(attn_out + x, ln1_g_ref[li], ln1_b_ref[li])

        ff = jnp.dot(x, w1_ref[li], preferred_element_type=f32) + b1_ref[li]
        ff = jnp.maximum(ff, 0.0)
        ff = jnp.dot(ff, w2_ref[li], preferred_element_type=f32) + b2_ref[li]
        x = layer_norm(ff + x, ln2_g_ref[li], ln2_b_ref[li])

    o_ref[0] = x.astype(o_ref.dtype)


def fused_forward(xm, p):
    """xm: (B, S, num_clips*visual_input_dim) for the single modality.
    Returns (B, S, D_MODEL) -- batch-major; caller transposes to seq-first."""
    B, S, CV = xm.shape
    D = D_MODEL
    L = NUM_LAYERS

    def rep(shape):  # replicated (grid-invariant) full-array block
        return pl.BlockSpec(shape, lambda b, _n=len(shape): (0,) * _n)

    in_specs = [
        pl.BlockSpec((1, S, CV), lambda b: (b, 0, 0)),   # per-batch input slab
        rep((CV, D)), rep((1, D)),                       # rel_w, rel_b
        rep((D, D)), rep((1, D)),                        # emb_w, emb_b
        rep((S, D)),                                     # pos
        rep((L, D, 3 * D)), rep((L, 1, 3 * D)),          # wqkv, bqkv
        rep((L, D, D)), rep((L, 1, D)),                  # wo, bo
        rep((L, 1, D)), rep((L, 1, D)),                  # ln1_g, ln1_b
        rep((L, D, DIM_FF)), rep((L, 1, DIM_FF)),        # w1, b1
        rep((L, DIM_FF, D)), rep((L, 1, D)),             # w2, b2
        rep((L, 1, D)), rep((L, 1, D)),                  # ln2_g, ln2_b
    ]

    return pl.pallas_call(
        _fused_forward_kernel,
        grid=(B,),
        out_shape=jax.ShapeDtypeStruct((B, S, D), jnp.float32),
        in_specs=in_specs,
        out_specs=pl.BlockSpec((1, S, D), lambda b: (b, 0, 0)),
        scratch_shapes=[pltpu.VMEM((S, D), jnp.float32)],
        compiler_params=pltpu.CompilerParams(
            dimension_semantics=("parallel",)),          # v7x: one batch per core
    )(xm, p["rel_w"], p["rel_b"], p["emb_w"], p["emb_b"], p["pos"],
      p["wqkv"], p["bqkv"], p["wo"], p["bo"], p["ln1_g"], p["ln1_b"],
      p["w1"], p["b1"], p["w2"], p["b2"], p["ln2_g"], p["ln2_b"])


# ----------------------------- model glue ------------------------------------
def video_encoder_forward(params, inputs, encode_label=False):
    B = inputs.shape[0]
    x = inputs.reshape(B, len(MODALITIES), SEQ_LEN, NUM_CLIPS * VISUAL_INPUT_DIM)
    # TODO(synk): only the single-modality ('rgb') configuration is fused here;
    #   multiple modalities would concatenate per-modality RelationModule outputs.
    xm = x[:, 0]                                        # (B, S, C*V)

    out_bsd = fused_forward(xm, params)                 # (B, S, D), batch-major
    out = jnp.transpose(out_bsd, (1, 0, 2))             # (S, B, D), seq-first

    if encode_label:
        enc = out[SEQ_LEN // 2, :, :]                   # (B, D)
        enc = enc.T                                     # (D, B) == transpose(0, 1)
        enc = enc.reshape(B, 1, -1)                     # matches reference reshape
        return enc
    return out


# ----------------------------- deterministic params --------------------------
def init_params(key):
    def dense(k, fin, fout):
        k1, k2 = jax.random.split(k)
        bound = 1.0 / math.sqrt(fin)
        w = jax.random.uniform(k1, (fin, fout), jnp.float32, -bound, bound)
        b = jax.random.uniform(k2, (1, fout), jnp.float32, -bound, bound)
        return w, b

    keys = jax.random.split(key, 3 + NUM_LAYERS)
    params = {}
    params["rel_w"], params["rel_b"] = dense(keys[0], NUM_CLIPS * VISUAL_INPUT_DIM, D_MODEL)
    params["emb_w"], params["emb_b"] = dense(keys[1], D_MODEL * len(MODALITIES), D_MODEL)
    params["pos"] = 0.02 * jax.random.normal(keys[2], (SEQ_LEN, D_MODEL), jnp.float32)

    wqkv, bqkv, wo, bo = [], [], [], []
    w1, b1, w2, b2 = [], [], [], []
    ln1_g, ln1_b, ln2_g, ln2_b = [], [], [], []
    for li in range(NUM_LAYERS):
        lk = jax.random.split(keys[3 + li], 6)
        wq, bq = dense(lk[0], D_MODEL, D_MODEL)
        wk, bk = dense(lk[1], D_MODEL, D_MODEL)
        wv, bv = dense(lk[2], D_MODEL, D_MODEL)
        wqkv.append(jnp.concatenate([wq, wk, wv], axis=1))      # (D, 3D)
        bqkv.append(jnp.concatenate([bq, bk, bv], axis=1))      # (1, 3D)
        w, b = dense(lk[3], D_MODEL, D_MODEL); wo.append(w); bo.append(b)
        w, b = dense(lk[4], D_MODEL, DIM_FF);  w1.append(w); b1.append(b)
        w, b = dense(lk[5], DIM_FF, D_MODEL);  w2.append(w); b2.append(b)
        ln1_g.append(jnp.ones((1, D_MODEL), jnp.float32))
        ln1_b.append(jnp.zeros((1, D_MODEL), jnp.float32))
        ln2_g.append(jnp.ones((1, D_MODEL), jnp.float32))
        ln2_b.append(jnp.zeros((1, D_MODEL), jnp.float32))

    stack = lambda xs: jnp.stack(xs, axis=0)
    params.update(dict(
        wqkv=stack(wqkv), bqkv=stack(bqkv), wo=stack(wo), bo=stack(bo),
        w1=stack(w1), b1=stack(b1), w2=stack(w2), b2=stack(b2),
        ln1_g=stack(ln1_g), ln1_b=stack(ln1_b),
        ln2_g=stack(ln2_g), ln2_b=stack(ln2_b)))
    return params


# ----------------------------- main ------------------------------------------
if __name__ == "__main__":
    root = jax.random.PRNGKey(0)
    pkey, dkey = jax.random.split(root)
    params = init_params(pkey)

    inputs = jax.random.normal(
        dkey, (BATCH, len(MODALITIES), SEQ_LEN, NUM_CLIPS, VISUAL_INPUT_DIM),
        jnp.float32)

    fwd = jax.jit(lambda p, x: video_encoder_forward(p, x, encode_label=False))
    out = jax.block_until_ready(fwd(params, inputs))
    assert out.shape == (SEQ_LEN, BATCH, D_MODEL), out.shape
    assert bool(jnp.all(jnp.isfinite(out)))

    # also exercise the encode_label path once
    enc = jax.block_until_ready(
        jax.jit(lambda p, x: video_encoder_forward(p, x, encode_label=True))(params, inputs))
    assert enc.shape == (BATCH, 1, D_MODEL), enc.shape

    print("KERNEL_OK")
</pallas_src>

<mosaic_0001>
module attributes {stable_mosaic.version = 11 : i64} {
  func.func @_fused_forward_kernel(%arg0: i32, %arg1: memref<1x8x256xf32, #tpu.memory_space<vmem>>, %arg2: memref<256x128xf32, #tpu.memory_space<vmem>>, %arg3: memref<1x128xf32, #tpu.memory_space<vmem>>, %arg4: memref<128x128xf32, #tpu.memory_space<vmem>>, %arg5: memref<1x128xf32, #tpu.memory_space<vmem>>, %arg6: memref<8x128xf32, #tpu.memory_space<vmem>>, %arg7: memref<2x128x384xf32, #tpu.memory_space<vmem>>, %arg8: memref<2x1x384xf32, #tpu.memory_space<vmem>>, %arg9: memref<2x128x128xf32, #tpu.memory_space<vmem>>, %arg10: memref<2x1x128xf32, #tpu.memory_space<vmem>>, %arg11: memref<2x1x128xf32, #tpu.memory_space<vmem>>, %arg12: memref<2x1x128xf32, #tpu.memory_space<vmem>>, %arg13: memref<2x128x256xf32, #tpu.memory_space<vmem>>, %arg14: memref<2x1x256xf32, #tpu.memory_space<vmem>>, %arg15: memref<2x256x128xf32, #tpu.memory_space<vmem>>, %arg16: memref<2x1x128xf32, #tpu.memory_space<vmem>>, %arg17: memref<2x1x128xf32, #tpu.memory_space<vmem>>, %arg18: memref<2x1x128xf32, #tpu.memory_space<vmem>>, %arg19: memref<1x8x128xf32, #tpu.memory_space<vmem>>, %arg20: memref<8x128xf32, #tpu.memory_space<vmem>>) attributes {dimension_semantics = [#tpu.dimension_semantics<parallel>], iteration_bounds = array<i64: 2>, scalar_prefetch = 0 : i64, scratch_operands = 1 : i64, tpu.core_type = #tpu.core_type<tc>, window_params = [{transform_indices = @transform_0, window_bounds = array<i64: 1, 8, 256>}, {pipeline_mode = #tpu.pipeline_mode<synchronous>, transform_indices = @transform_1, window_bounds = array<i64: 256, 128>}, {pipeline_mode = #tpu.pipeline_mode<synchronous>, transform_indices = @transform_2, window_bounds = array<i64: 1, 128>}, {pipeline_mode = #tpu.pipeline_mode<synchronous>, transform_indices = @transform_3, window_bounds = array<i64: 128, 128>}, {pipeline_mode = #tpu.pipeline_mode<synchronous>, transform_indices = @transform_4, window_bounds = array<i64: 1, 128>}, {pipeline_mode = #tpu.pipeline_mode<synchronous>, transform_indices = @transform_5, window_bounds = array<i64: 8, 128>}, {pipeline_mode = #tpu.pipeline_mode<synchronous>, transform_indices = @transform_6, window_bounds = array<i64: 2, 128, 384>}, {pipeline_mode = #tpu.pipeline_mode<synchronous>, transform_indices = @transform_7, window_bounds = array<i64: 2, 1, 384>}, {pipeline_mode = #tpu.pipeline_mode<synchronous>, transform_indices = @transform_8, window_bounds = array<i64: 2, 128, 128>}, {pipeline_mode = #tpu.pipeline_mode<synchronous>, transform_indices = @transform_9, window_bounds = array<i64: 2, 1, 128>}, {pipeline_mode = #tpu.pipeline_mode<synchronous>, transform_indices = @transform_10, window_bounds = array<i64: 2, 1, 128>}, {pipeline_mode = #tpu.pipeline_mode<synchronous>, transform_indices = @transform_11, window_bounds = array<i64: 2, 1, 128>}, {pipeline_mode = #tpu.pipeline_mode<synchronous>, transform_indices = @transform_12, window_bounds = array<i64: 2, 128, 256>}, {pipeline_mode = #tpu.pipeline_mode<synchronous>, transform_indices = @transform_13, window_bounds = array<i64: 2, 1, 256>}, {pipeline_mode = #tpu.pipeline_mode<synchronous>, transform_indices = @transform_14, window_bounds = array<i64: 2, 256, 128>}, {pipeline_mode = #tpu.pipeline_mode<synchronous>, transform_indices = @transform_15, window_bounds = array<i64: 2, 1, 128>}, {pipeline_mode = #tpu.pipeline_mode<synchronous>, transform_indices = @transform_16, window_bounds = array<i64: 2, 1, 128>}, {pipeline_mode = #tpu.pipeline_mode<synchronous>, transform_indices = @transform_17, window_bounds = array<i64: 2, 1, 128>}, {transform_indices = @transform_18, window_bounds = array<i64: 1, 8, 128>}]} {
    %c0 = arith.constant 0 : index
    %c0_0 = arith.constant 0 : index
    %c0_1 = arith.constant 0 : index
    %0 = vector.load %arg1[%c0, %c0_0, %c0_1] : memref<1x8x256xf32, #tpu.memory_space<vmem>>, vector<1x8x256xf32>
    %1 = vector.shape_cast %0 : vector<1x8x256xf32> to vector<8x256xf32>
    %cst = arith.constant 0.000000e+00 : f32
    %2 = vector.broadcast %cst : f32 to vector<8x256xf32>
    %3 = arith.maximumf %1, %2 : vector<8x256xf32>
    %c0_2 = arith.constant 0 : index
    %c0_3 = arith.constant 0 : index
    %4 = vector.load %arg2[%c0_2, %c0_3] : memref<256x128xf32, #tpu.memory_space<vmem>>, vector<256x128xf32>
    %cst_4 = arith.constant dense<0.000000e+00> : vector<8x128xf32>
    %5 = tpu.matmul %3, %4, %cst_4 {dimension_numbers = #tpu.dot_dimension_numbers<[1], [0], [0], [1], [0, 0, 1, 1], [], []>} : vector<8x256xf32>, vector<256x128xf32>, vector<8x128xf32> -> vector<8x128xf32>
    %c0_5 = arith.constant 0 : index
    %c0_6 = arith.constant 0 : index
    %6 = vector.load %arg3[%c0_5, %c0_6] : memref<1x128xf32, #tpu.memory_space<vmem>>, vector<1x128xf32>
    %7 = vector.broadcast %6 : vector<1x128xf32> to vector<8x128xf32>
    %8 = arith.addf %5, %7 : vector<8x128xf32>
    %cst_7 = arith.constant 0.000000e+00 : f32
    %9 = vector.broadcast %cst_7 : f32 to vector<8x128xf32>
    %10 = arith.maximumf %8, %9 : vector<8x128xf32>
    %c0_8 = arith.constant 0 : index
    %c0_9 = arith.constant 0 : index
    %11 = vector.load %arg4[%c0_8, %c0_9] : memref<128x128xf32, #tpu.memory_space<vmem>>, vector<128x128xf32>
    %cst_10 = arith.constant dense<0.000000e+00> : vector<8x128xf32>
    %12 = tpu.matmul %10, %11, %cst_10 {dimension_numbers = #tpu.dot_dimension_numbers<[1], [0], [0], [1], [0, 0, 1, 1], [], []>} : vector<8x128xf32>, vector<128x128xf32>, vector<8x128xf32> -> vector<8x128xf32>
    %c0_11 = arith.constant 0 : index
    %c0_12 = arith.constant 0 : index
    %13 = vector.load %arg5[%c0_11, %c0_12] : memref<1x128xf32, #tpu.memory_space<vmem>>, vector<1x128xf32>
    %14 = vector.broadcast %13 : vector<1x128xf32> to vector<8x128xf32>
    %15 = arith.addf %12, %14 : vector<8x128xf32>
    %c0_13 = arith.constant 0 : index
    %c0_14 = arith.constant 0 : index
    %16 = vector.load %arg6[%c0_13, %c0_14] : memref<8x128xf32, #tpu.memory_space<vmem>>, vector<8x128xf32>
    %17 = arith.addf %15, %16 : vector<8x128xf32>
    %c0_15 = arith.constant 0 : index
    %c0_16 = arith.constant 0 : index
    %c0_17 = arith.constant 0 : index
    %18 = vector.load %arg7[%c0_15, %c0_16, %c0_17] : memref<2x128x384xf32, #tpu.memory_space<vmem>>, vector<1x128x384xf32>
    %19 = vector.shape_cast %18 : vector<1x128x384xf32> to vector<128x384xf32>
    %cst_18 = arith.constant dense<0.000000e+00> : vector<8x384xf32>
    %20 = tpu.matmul %17, %19, %cst_18 {dimension_numbers = #tpu.dot_dimension_numbers<[1], [0], [0], [1], [0, 0, 1, 1], [], []>} : vector<8x128xf32>, vector<128x384xf32>, vector<8x384xf32> -> vector<8x384xf32>
    %c0_19 = arith.constant 0 : index
    %c0_20 = arith.constant 0 : index
    %c0_21 = arith.constant 0 : index
    %21 = vector.load %arg8[%c0_19, %c0_20, %c0_21] : memref<2x1x384xf32, #tpu.memory_space<vmem>>, vector<1x1x384xf32>
    %22 = vector.shape_cast %21 : vector<1x1x384xf32> to vector<1x384xf32>
    %23 = vector.broadcast %22 : vector<1x384xf32> to vector<8x384xf32>
    %24 = arith.addf %20, %23 : vector<8x384xf32>
    %25 = vector.extract_strided_slice %24 {offsets = [0, 0], sizes = [8, 32], strides = [1, 1]} : vector<8x384xf32> to vector<8x32xf32>
    %26 = vector.extract_strided_slice %24 {offsets = [0, 128], sizes = [8, 32], strides = [1, 1]} : vector<8x384xf32> to vector<8x32xf32>
    %27 = vector.extract_strided_slice %24 {offsets = [0, 256], sizes = [8, 32], strides = [1, 1]} : vector<8x384xf32> to vector<8x32xf32>
    %cst_22 = arith.constant dense<0.000000e+00> : vector<8x8xf32>
    %28 = tpu.matmul %25, %26, %cst_22 {dimension_numbers = #tpu.dot_dimension_numbers<[1], [1], [0], [0], [0, 0, 1, 0], [], []>} : vector<8x32xf32>, vector<8x32xf32>, vector<8x8xf32> -> vector<8x8xf32>
    %cst_23 = arith.constant 0.176776692 : f32
    %29 = vector.broadcast %cst_23 : f32 to vector<8x8xf32>
    %30 = arith.mulf %28, %29 : vector<8x8xf32>
    %cst_24 = arith.constant dense<0xFF800000> : vector<8xf32>
    %31 = vector.multi_reduction <maximumf>, %30, %cst_24 [1] : vector<8x8xf32> to vector<8xf32>
    %32 = vector.shape_cast %31 : vector<8xf32> to vector<8x1xf32>
    %33 = vector.broadcast %32 : vector<8x1xf32> to vector<8x8xf32>
    %34 = arith.subf %30, %33 : vector<8x8xf32>
    %35 = math.exp %34 : vector<8x8xf32>
    %cst_25 = arith.constant dense<0.000000e+00> : vector<8xf32>
    %36 = vector.multi_reduction <add>, %35, %cst_25 [1] : vector<8x8xf32> to vector<8xf32>
    %37 = vector.shape_cast %36 : vector<8xf32> to vector<8x1xf32>
    %38 = tpu.reciprocal %37 {approx = true} : vector<8x1xf32> -> vector<8x1xf32>
    %39 = vector.broadcast %38 : vector<8x1xf32> to vector<8x8xf32>
    %40 = arith.mulf %35, %39 : vector<8x8xf32>
    %cst_26 = arith.constant dense<0.000000e+00> : vector<8x32xf32>
    %41 = tpu.matmul %40, %27, %cst_26 {dimension_numbers = #tpu.dot_dimension_numbers<[1], [0], [0], [1], [0, 0, 1, 1], [], []>} : vector<8x8xf32>, vector<8x32xf32>, vector<8x32xf32> -> vector<8x32xf32>
    %c0_27 = arith.constant 0 : index
    %c0_28 = arith.constant 0 : index
    %42 = vector.load %arg20[%c0_27, %c0_28] : memref<8x128xf32, #tpu.memory_space<vmem>>, vector<8x32xf32>
    tpu.vector_store %arg20[%c0_27, %c0_28], %41 {strides = array<i32>} : memref<8x128xf32, #tpu.memory_space<vmem>>, vector<8x32xf32>,
    %43 = vector.extract_strided_slice %24 {offsets = [0, 32], sizes = [8, 32], strides = [1, 1]} : vector<8x384xf32> to vector<8x32xf32>
    %44 = vector.extract_strided_slice %24 {offsets = [0, 160], sizes = [8, 32], strides = [1, 1]} : vector<8x384xf32> to vector<8x32xf32>
    %45 = vector.extract_strided_slice %24 {offsets = [0, 288], sizes = [8, 32], strides = [1, 1]} : vector<8x384xf32> to vector<8x32xf32>
    %cst_29 = arith.constant dense<0.000000e+00> : vector<8x8xf32>
    %46 = tpu.matmul %43, %44, %cst_29 {dimension_numbers = #tpu.dot_dimension_numbers<[1], [1], [0], [0], [0, 0, 1, 0], [], []>} : vector<8x32xf32>, vector<8x32xf32>, vector<8x8xf32> -> vector<8x8xf32>
    %cst_30 = arith.constant 0.176776692 : f32
    %47 = vector.broadcast %cst_30 : f32 to vector<8x8xf32>
    %48 = arith.mulf %46, %47 : vector<8x8xf32>
    %cst_31 = arith.constant dense<0xFF800000> : vector<8xf32>
    %49 = vector.multi_reduction <maximumf>, %48, %cst_31 [1] : vector<8x8xf32> to vector<8xf32>
    %50 = vector.shape_cast %49 : vector<8xf32> to vector<8x1xf32>
    %51 = vector.broadcast %50 : vector<8x1xf32> to vector<8x8xf32>
    %52 = arith.subf %48, %51 : vector<8x8xf32>
    %53 = math.exp %52 : vector<8x8xf32>
    %cst_32 = arith.constant dense<0.000000e+00> : vector<8xf32>
    %54 = vector.multi_reduction <add>, %53, %cst_32 [1] : vector<8x8xf32> to vector<8xf32>
    %55 = vector.shape_cast %54 : vector<8xf32> to vector<8x1xf32>
    %56 = tpu.reciprocal %55 {approx = true} : vector<8x1xf32> -> vector<8x1xf32>
    %57 = vector.broadcast %56 : vector<8x1xf32> to vector<8x8xf32>
    %58 = arith.mulf %53, %57 : vector<8x8xf32>
    %cst_33 = arith.constant dense<0.000000e+00> : vector<8x32xf32>
    %59 = tpu.matmul %58, %45, %cst_33 {dimension_numbers = #tpu.dot_dimension_numbers<[1], [0], [0], [1], [0, 0, 1, 1], [], []>} : vector<8x8xf32>, vector<8x32xf32>, vector<8x32xf32> -> vector<8x32xf32>
    %c0_34 = arith.constant 0 : index
    %c32 = arith.constant 32 : index
    %60 = vector.load %arg20[%c0_34, %c32] : memref<8x128xf32, #tpu.memory_space<vmem>>, vector<8x32xf32>
    tpu.vector_store %arg20[%c0_34, %c32], %59 {strides = array<i32>} : memref<8x128xf32, #tpu.memory_space<vmem>>, vector<8x32xf32>,
    %61 = vector.extract_strided_slice %24 {offsets = [0, 64], sizes = [8, 32], strides = [1, 1]} : vector<8x384xf32> to vector<8x32xf32>
    %62 = vector.extract_strided_slice %24 {offsets = [0, 192], sizes = [8, 32], strides = [1, 1]} : vector<8x384xf32> to vector<8x32xf32>
    %63 = vector.extract_strided_slice %24 {offsets = [0, 320], sizes = [8, 32], strides = [1, 1]} : vector<8x384xf32> to vector<8x32xf32>
    %cst_35 = arith.constant dense<0.000000e+00> : vector<8x8xf32>
    %64 = tpu.matmul %61, %62, %cst_35 {dimension_numbers = #tpu.dot_dimension_numbers<[1], [1], [0], [0], [0, 0, 1, 0], [], []>} : vector<8x32xf32>, vector<8x32xf32>, vector<8x8xf32> -> vector<8x8xf32>
    %cst_36 = arith.constant 0.176776692 : f32
    %65 = vector.broadcast %cst_36 : f32 to vector<8x8xf32>
    %66 = arith.mulf %64, %65 : vector<8x8xf32>
    %cst_37 = arith.constant dense<0xFF800000> : vector<8xf32>
    %67 = vector.multi_reduction <maximumf>, %66, %cst_37 [1] : vector<8x8xf32> to vector<8xf32>
    %68 = vector.shape_cast %67 : vector<8xf32> to vector<8x1xf32>
    %69 = vector.broadcast %68 : vector<8x1xf32> to vector<8x8xf32>
    %70 = arith.subf %66, %69 : vector<8x8xf32>
    %71 = math.exp %70 : vector<8x8xf32>
    %cst_38 = arith.constant dense<0.000000e+00> : vector<8xf32>
    %72 = vector.multi_reduction <add>, %71, %cst_38 [1] : vector<8x8xf32> to vector<8xf32>
    %73 = vector.shape_cast %72 : vector<8xf32> to vector<8x1xf32>
    %74 = tpu.reciprocal %73 {approx = true} : vector<8x1xf32> -> vector<8x1xf32>
    %75 = vector.broadcast %74 : vector<8x1xf32> to vector<8x8xf32>
    %76 = arith.mulf %71, %75 : vector<8x8xf32>
    %cst_39 = arith.constant dense<0.000000e+00> : vector<8x32xf32>
    %77 = tpu.matmul %76, %63, %cst_39 {dimension_numbers = #tpu.dot_dimension_numbers<[1], [0], [0], [1], [0, 0, 1, 1], [], []>} : vector<8x8xf32>, vector<8x32xf32>, vector<8x32xf32> -> vector<8x32xf32>
    %c0_40 = arith.constant 0 : index
    %c64 = arith.constant 64 : index
    %78 = vector.load %arg20[%c0_40, %c64] : memref<8x128xf32, #tpu.memory_space<vmem>>, vector<8x32xf32>
    tpu.vector_store %arg20[%c0_40, %c64], %77 {strides = array<i32>} : memref<8x128xf32, #tpu.memory_space<vmem>>, vector<8x32xf32>,
    %79 = vector.extract_strided_slice %24 {offsets = [0, 96], sizes = [8, 32], strides = [1, 1]} : vector<8x384xf32> to vector<8x32xf32>
    %80 = vector.extract_strided_slice %24 {offsets = [0, 224], sizes = [8, 32], strides = [1, 1]} : vector<8x384xf32> to vector<8x32xf32>
    %81 = vector.extract_strided_slice %24 {offsets = [0, 352], sizes = [8, 32], strides = [1, 1]} : vector<8x384xf32> to vector<8x32xf32>
    %cst_41 = arith.constant dense<0.000000e+00> : vector<8x8xf32>
    %82 = tpu.matmul %79, %80, %cst_41 {dimension_numbers = #tpu.dot_dimension_numbers<[1], [1], [0], [0], [0, 0, 1, 0], [], []>} : vector<8x32xf32>, vector<8x32xf32>, vector<8x8xf32> -> vector<8x8xf32>
    %cst_42 = arith.constant 0.176776692 : f32
    %83 = vector.broadcast %cst_42 : f32 to vector<8x8xf32>
    %84 = arith.mulf %82, %83 : vector<8x8xf32>
    %cst_43 = arith.constant dense<0xFF800000> : vector<8xf32>
    %85 = vector.multi_reduction <maximumf>, %84, %cst_43 [1] : vector<8x8xf32> to vector<8xf32>
    %86 = vector.shape_cast %85 : vector<8xf32> to vector<8x1xf32>
    %87 = vector.broadcast %86 : vector<8x1xf32> to vector<8x8xf32>
    %88 = arith.subf %84, %87 : vector<8x8xf32>
    %89 = math.exp %88 : vector<8x8xf32>
    %cst_44 = arith.constant dense<0.000000e+00> : vector<8xf32>
    %90 = vector.multi_reduction <add>, %89, %cst_44 [1] : vector<8x8xf32> to vector<8xf32>
    %91 = vector.shape_cast %90 : vector<8xf32> to vector<8x1xf32>
    %92 = tpu.reciprocal %91 {approx = true} : vector<8x1xf32> -> vector<8x1xf32>
    %93 = vector.broadcast %92 : vector<8x1xf32> to vector<8x8xf32>
    %94 = arith.mulf %89, %93 : vector<8x8xf32>
    %cst_45 = arith.constant dense<0.000000e+00> : vector<8x32xf32>
    %95 = tpu.matmul %94, %81, %cst_45 {dimension_numbers = #tpu.dot_dimension_numbers<[1], [0], [0], [1], [0, 0, 1, 1], [], []>} : vector<8x8xf32>, vector<8x32xf32>, vector<8x32xf32> -> vector<8x32xf32>
    %c0_46 = arith.constant 0 : index
    %c96 = arith.constant 96 : index
    %96 = vector.load %arg20[%c0_46, %c96] : memref<8x128xf32, #tpu.memory_space<vmem>>, vector<8x32xf32>
    tpu.vector_store %arg20[%c0_46, %c96], %95 {strides = array<i32>} : memref<8x128xf32, #tpu.memory_space<vmem>>, vector<8x32xf32>,
    %c0_47 = arith.constant 0 : index
    %c0_48 = arith.constant 0 : index
    %97 = vector.load %arg20[%c0_47, %c0_48] : memref<8x128xf32, #tpu.memory_space<vmem>>, vector<8x128xf32>
    %c0_49 = arith.constant 0 : index
    %c0_50 = arith.constant 0 : index
    %c0_51 = arith.constant 0 : index
    %98 = vector.load %arg9[%c0_49, %c0_50, %c0_51] : memref<2x128x128xf32, #tpu.memory_space<vmem>>, vector<1x128x128xf32>
    %99 = vector.shape_cast %98 : vector<1x128x128xf32> to vector<128x128xf32>
    %cst_52 = arith.constant dense<0.000000e+00> : vector<8x128xf32>
    %100 = tpu.matmul %97, %99, %cst_52 {dimension_numbers = #tpu.dot_dimension_numbers<[1], [0], [0], [1], [0, 0, 1, 1], [], []>} : vector<8x128xf32>, vector<128x128xf32>, vector<8x128xf32> -> vector<8x128xf32>
    %c0_53 = arith.constant 0 : index
    %c0_54 = arith.constant 0 : index
    %c0_55 = arith.constant 0 : index
    %101 = vector.load %arg10[%c0_53, %c0_54, %c0_55] : memref<2x1x128xf32, #tpu.memory_space<vmem>>, vector<1x1x128xf32>
    %102 = vector.shape_cast %101 : vector<1x1x128xf32> to vector<1x128xf32>
    %103 = vector.broadcast %102 : vector<1x128xf32> to vector<8x128xf32>
    %104 = arith.addf %100, %103 : vector<8x128xf32>
    %105 = arith.addf %104, %17 : vector<8x128xf32>
    %c0_56 = arith.constant 0 : index
    %c0_57 = arith.constant 0 : index
    %c0_58 = arith.constant 0 : index
    %106 = vector.load %arg11[%c0_56, %c0_57, %c0_58] : memref<2x1x128xf32, #tpu.memory_space<vmem>>, vector<1x1x128xf32>
    %107 = vector.shape_cast %106 : vector<1x1x128xf32> to vector<1x128xf32>
    %c0_59 = arith.constant 0 : index
    %c0_60 = arith.constant 0 : index
    %c0_61 = arith.constant 0 : index
    %108 = vector.load %arg12[%c0_59, %c0_60, %c0_61] : memref<2x1x128xf32, #tpu.memory_space<vmem>>, vector<1x1x128xf32>
    %109 = vector.shape_cast %108 : vector<1x1x128xf32> to vector<1x128xf32>
    %cst_62 = arith.constant dense<0.000000e+00> : vector<8xf32>
    %110 = vector.multi_reduction <add>, %105, %cst_62 [1] : vector<8x128xf32> to vector<8xf32>
    %111 = vector.shape_cast %110 : vector<8xf32> to vector<8x1xf32>
    %cst_63 = arith.constant 1.280000e+02 : f32
    %112 = vector.broadcast %cst_63 : f32 to vector<8x1xf32>
    %113 = arith.divf %111, %112 : vector<8x1xf32>
    %114 = vector.broadcast %113 : vector<8x1xf32> to vector<8x128xf32>
    %115 = arith.subf %105, %114 : vector<8x128xf32>
    %116 = arith.mulf %115, %115 : vector<8x128xf32>
    %cst_64 = arith.constant dense<0.000000e+00> : vector<8xf32>
    %117 = vector.multi_reduction <add>, %116, %cst_64 [1] : vector<8x128xf32> to vector<8xf32>
    %118 = vector.shape_cast %117 : vector<8xf32> to vector<8x1xf32>
    %cst_65 = arith.constant 1.280000e+02 : f32
    %119 = vector.broadcast %cst_65 : f32 to vector<8x1xf32>
    %120 = arith.divf %118, %119 : vector<8x1xf32>
    %cst_66 = arith.constant 9.99999974E-6 : f32
    %121 = vector.broadcast %cst_66 : f32 to vector<8x1xf32>
    %122 = arith.addf %120, %121 : vector<8x1xf32>
    %123 = math.rsqrt %122 : vector<8x1xf32>
    %124 = vector.broadcast %123 : vector<8x1xf32> to vector<8x128xf32>
    %125 = arith.mulf %115, %124 : vector<8x128xf32>
    %126 = vector.broadcast %107 : vector<1x128xf32> to vector<8x128xf32>
    %127 = arith.mulf %125, %126 : vector<8x128xf32>
    %128 = vector.broadcast %109 : vector<1x128xf32> to vector<8x128xf32>
    %129 = arith.addf %127, %128 : vector<8x128xf32>
    %c0_67 = arith.constant 0 : index
    %c0_68 = arith.constant 0 : index
    %c0_69 = arith.constant 0 : index
    %130 = vector.load %arg13[%c0_67, %c0_68, %c0_69] : memref<2x128x256xf32, #tpu.memory_space<vmem>>, vector<1x128x256xf32>
    %131 = vector.shape_cast %130 : vector<1x128x256xf32> to vector<128x256xf32>
    %cst_70 = arith.constant dense<0.000000e+00> : vector<8x256xf32>
    %132 = tpu.matmul %129, %131, %cst_70 {dimension_numbers = #tpu.dot_dimension_numbers<[1], [0], [0], [1], [0, 0, 1, 1], [], []>} : vector<8x128xf32>, vector<128x256xf32>, vector<8x256xf32> -> vector<8x256xf32>
    %c0_71 = arith.constant 0 : index
    %c0_72 = arith.constant 0 : index
    %c0_73 = arith.constant 0 : index
    %133 = vector.load %arg14[%c0_71, %c0_72, %c0_73] : memref<2x1x256xf32, #tpu.memory_space<vmem>>, vector<1x1x256xf32>
    %134 = vector.shape_cast %133 : vector<1x1x256xf32> to vector<1x256xf32>
    %135 = vector.broadcast %134 : vector<1x256xf32> to vector<8x256xf32>
    %136 = arith.addf %132, %135 : vector<8x256xf32>
    %cst_74 = arith.constant 0.000000e+00 : f32
    %137 = vector.broadcast %cst_74 : f32 to vector<8x256xf32>
    %138 = arith.maximumf %136, %137 : vector<8x256xf32>
    %c0_75 = arith.constant 0 : index
    %c0_76 = arith.constant 0 : index
    %c0_77 = arith.constant 0 : index
    %139 = vector.load %arg15[%c0_75, %c0_76, %c0_77] : memref<2x256x128xf32, #tpu.memory_space<vmem>>, vector<1x256x128xf32>
    %140 = vector.shape_cast %139 : vector<1x256x128xf32> to vector<256x128xf32>
    %cst_78 = arith.constant dense<0.000000e+00> : vector<8x128xf32>
    %141 = tpu.matmul %138, %140, %cst_78 {dimension_numbers = #tpu.dot_dimension_numbers<[1], [0], [0], [1], [0, 0, 1, 1], [], []>} : vector<8x256xf32>, vector<256x128xf32>, vector<8x128xf32> -> vector<8x128xf32>
    %c0_79 = arith.constant 0 : index
    %c0_80 = arith.constant 0 : index
    %c0_81 = arith.constant 0 : index
    %142 = vector.load %arg16[%c0_79, %c0_80, %c0_81] : memref<2x1x128xf32, #tpu.memory_space<vmem>>, vector<1x1x128xf32>
    %143 = vector.shape_cast %142 : vector<1x1x128xf32> to vector<1x128xf32>
    %144 = vector.broadcast %143 : vector<1x128xf32> to vector<8x128xf32>
    %145 = arith.addf %141, %144 : vector<8x128xf32>
    %146 = arith.addf %145, %129 : vector<8x128xf32>
    %c0_82 = arith.constant 0 : index
    %c0_83 = arith.constant 0 : index
    %c0_84 = arith.constant 0 : index
    %147 = vector.load %arg17[%c0_82, %c0_83, %c0_84] : memref<2x1x128xf32, #tpu.memory_space<vmem>>, vector<1x1x128xf32>
    %148 = vector.shape_cast %147 : vector<1x1x128xf32> to vector<1x128xf32>
    %c0_85 = arith.constant 0 : index
    %c0_86 = arith.constant 0 : index
    %c0_87 = arith.constant 0 : index
    %149 = vector.load %arg18[%c0_85, %c0_86, %c0_87] : memref<2x1x128xf32, #tpu.memory_space<vmem>>, vector<1x1x128xf32>
    %150 = vector.shape_cast %149 : vector<1x1x128xf32> to vector<1x128xf32>
    %cst_88 = arith.constant dense<0.000000e+00> : vector<8xf32>
    %151 = vector.multi_reduction <add>, %146, %cst_88 [1] : vector<8x128xf32> to vector<8xf32>
    %152 = vector.shape_cast %151 : vector<8xf32> to vector<8x1xf32>
    %cst_89 = arith.constant 1.280000e+02 : f32
    %153 = vector.broadcast %cst_89 : f32 to vector<8x1xf32>
    %154 = arith.divf %152, %153 : vector<8x1xf32>
    %155 = vector.broadcast %154 : vector<8x1xf32> to vector<8x128xf32>
    %156 = arith.subf %146, %155 : vector<8x128xf32>
    %157 = arith.mulf %156, %156 : vector<8x128xf32>
    %cst_90 = arith.constant dense<0.000000e+00> : vector<8xf32>
    %158 = vector.multi_reduction <add>, %157, %cst_90 [1] : vector<8x128xf32> to vector<8xf32>
    %159 = vector.shape_cast %158 : vector<8xf32> to vector<8x1xf32>
    %cst_91 = arith.constant 1.280000e+02 : f32
    %160 = vector.broadcast %cst_91 : f32 to vector<8x1xf32>
    %161 = arith.divf %159, %160 : vector<8x1xf32>
    %cst_92 = arith.constant 9.99999974E-6 : f32
    %162 = vector.broadcast %cst_92 : f32 to vector<8x1xf32>
    %163 = arith.addf %161, %162 : vector<8x1xf32>
    %164 = math.rsqrt %163 : vector<8x1xf32>
    %165 = vector.broadcast %164 : vector<8x1xf32> to vector<8x128xf32>
    %166 = arith.mulf %156, %165 : vector<8x128xf32>
    %167 = vector.broadcast %148 : vector<1x128xf32> to vector<8x128xf32>
    %168 = arith.mulf %166, %167 : vector<8x128xf32>
    %169 = vector.broadcast %150 : vector<1x128xf32> to vector<8x128xf32>
    %170 = arith.addf %168, %169 : vector<8x128xf32>
    %c1 = arith.constant 1 : index
    %c0_93 = arith.constant 0 : index
    %c0_94 = arith.constant 0 : index
    %171 = vector.load %arg7[%c1, %c0_93, %c0_94] : memref<2x128x384xf32, #tpu.memory_space<vmem>>, vector<1x128x384xf32>
    %172 = vector.shape_cast %171 : vector<1x128x384xf32> to vector<128x384xf32>
    %cst_95 = arith.constant dense<0.000000e+00> : vector<8x384xf32>
    %173 = tpu.matmul %170, %172, %cst_95 {dimension_numbers = #tpu.dot_dimension_numbers<[1], [0], [0], [1], [0, 0, 1, 1], [], []>} : vector<8x128xf32>, vector<128x384xf32>, vector<8x384xf32> -> vector<8x384xf32>
    %c1_96 = arith.constant 1 : index
    %c0_97 = arith.constant 0 : index
    %c0_98 = arith.constant 0 : index
    %174 = vector.load %arg8[%c1_96, %c0_97, %c0_98] : memref<2x1x384xf32, #tpu.memory_space<vmem>>, vector<1x1x384xf32>
    %175 = vector.shape_cast %174 : vector<1x1x384xf32> to vector<1x384xf32>
    %176 = vector.broadcast %175 : vector<1x384xf32> to vector<8x384xf32>
    %177 = arith.addf %173, %176 : vector<8x384xf32>
    %178 = vector.extract_strided_slice %177 {offsets = [0, 0], sizes = [8, 32], strides = [1, 1]} : vector<8x384xf32> to vector<8x32xf32>
    %179 = vector.extract_strided_slice %177 {offsets = [0, 128], sizes = [8, 32], strides = [1, 1]} : vector<8x384xf32> to vector<8x32xf32>
    %180 = vector.extract_strided_slice %177 {offsets = [0, 256], sizes = [8, 32], strides = [1, 1]} : vector<8x384xf32> to vector<8x32xf32>
    %cst_99 = arith.constant dense<0.000000e+00> : vector<8x8xf32>
    %181 = tpu.matmul %178, %179, %cst_99 {dimension_numbers = #tpu.dot_dimension_numbers<[1], [1], [0], [0], [0, 0, 1, 0], [], []>} : vector<8x32xf32>, vector<8x32xf32>, vector<8x8xf32> -> vector<8x8xf32>
    %cst_100 = arith.constant 0.176776692 : f32
    %182 = vector.broadcast %cst_100 : f32 to vector<8x8xf32>
    %183 = arith.mulf %181, %182 : vector<8x8xf32>
    %cst_101 = arith.constant dense<0xFF800000> : vector<8xf32>
    %184 = vector.multi_reduction <maximumf>, %183, %cst_101 [1] : vector<8x8xf32> to vector<8xf32>
    %185 = vector.shape_cast %184 : vector<8xf32> to vector<8x1xf32>
    %186 = vector.broadcast %185 : vector<8x1xf32> to vector<8x8xf32>
    %187 = arith.subf %183, %186 : vector<8x8xf32>
    %188 = math.exp %187 : vector<8x8xf32>
    %cst_102 = arith.constant dense<0.000000e+00> : vector<8xf32>
    %189 = vector.multi_reduction <add>, %188, %cst_102 [1] : vector<8x8xf32> to vector<8xf32>
    %190 = vector.shape_cast %189 : vector<8xf32> to vector<8x1xf32>
    %191 = tpu.reciprocal %190 {approx = true} : vector<8x1xf32> -> vector<8x1xf32>
    %192 = vector.broadcast %191 : vector<8x1xf32> to vector<8x8xf32>
    %193 = arith.mulf %188, %192 : vector<8x8xf32>
    %cst_103 = arith.constant dense<0.000000e+00> : vector<8x32xf32>
    %194 = tpu.matmul %193, %180, %cst_103 {dimension_numbers = #tpu.dot_dimension_numbers<[1], [0], [0], [1], [0, 0, 1, 1], [], []>} : vector<8x8xf32>, vector<8x32xf32>, vector<8x32xf32> -> vector<8x32xf32>
    %c0_104 = arith.constant 0 : index
    %c0_105 = arith.constant 0 : index
    %195 = vector.load %arg20[%c0_104, %c0_105] : memref<8x128xf32, #tpu.memory_space<vmem>>, vector<8x32xf32>
    tpu.vector_store %arg20[%c0_104, %c0_105], %194 {strides = array<i32>} : memref<8x128xf32, #tpu.memory_space<vmem>>, vector<8x32xf32>,
    %196 = vector.extract_strided_slice %177 {offsets = [0, 32], sizes = [8, 32], strides = [1, 1]} : vector<8x384xf32> to vector<8x32xf32>
    %197 = vector.extract_strided_slice %177 {offsets = [0, 160], sizes = [8, 32], strides = [1, 1]} : vector<8x384xf32> to vector<8x32xf32>
    %198 = vector.extract_strided_slice %177 {offsets = [0, 288], sizes = [8, 32], strides = [1, 1]} : vector<8x384xf32> to vector<8x32xf32>
    %cst_106 = arith.constant dense<0.000000e+00> : vector<8x8xf32>
    %199 = tpu.matmul %196, %197, %cst_106 {dimension_numbers = #tpu.dot_dimension_numbers<[1], [1], [0], [0], [0, 0, 1, 0], [], []>} : vector<8x32xf32>, vector<8x32xf32>, vector<8x8xf32> -> vector<8x8xf32>
    %cst_107 = arith.constant 0.176776692 : f32
    %200 = vector.broadcast %cst_107 : f32 to vector<8x8xf32>
    %201 = arith.mulf %199, %200 : vector<8x8xf32>
    %cst_108 = arith.constant dense<0xFF800000> : vector<8xf32>
    %202 = vector.multi_reduction <maximumf>, %201, %cst_108 [1] : vector<8x8xf32> to vector<8xf32>
    %203 = vector.shape_cast %202 : vector<8xf32> to vector<8x1xf32>
    %204 = vector.broadcast %203 : vector<8x1xf32> to vector<8x8xf32>
    %205 = arith.subf %201, %204 : vector<8x8xf32>
    %206 = math.exp %205 : vector<8x8xf32>
    %cst_109 = arith.constant dense<0.000000e+00> : vector<8xf32>
    %207 = vector.multi_reduction <add>, %206, %cst_109 [1] : vector<8x8xf32> to vector<8xf32>
    %208 = vector.shape_cast %207 : vector<8xf32> to vector<8x1xf32>
    %209 = tpu.reciprocal %208 {approx = true} : vector<8x1xf32> -> vector<8x1xf32>
    %210 = vector.broadcast %209 : vector<8x1xf32> to vector<8x8xf32>
    %211 = arith.mulf %206, %210 : vector<8x8xf32>
    %cst_110 = arith.constant dense<0.000000e+00> : vector<8x32xf32>
    %212 = tpu.matmul %211, %198, %cst_110 {dimension_numbers = #tpu.dot_dimension_numbers<[1], [0], [0], [1], [0, 0, 1, 1], [], []>} : vector<8x8xf32>, vector<8x32xf32>, vector<8x32xf32> -> vector<8x32xf32>
    %c0_111 = arith.constant 0 : index
    %c32_112 = arith.constant 32 : index
    %213 = vector.load %arg20[%c0_111, %c32_112] : memref<8x128xf32, #tpu.memory_space<vmem>>, vector<8x32xf32>
    tpu.vector_store %arg20[%c0_111, %c32_112], %212 {strides = array<i32>} : memref<8x128xf32, #tpu.memory_space<vmem>>, vector<8x32xf32>,
    %214 = vector.extract_strided_slice %177 {offsets = [0, 64], sizes = [8, 32], strides = [1, 1]} : vector<8x384xf32> to vector<8x32xf32>
    %215 = vector.extract_strided_slice %177 {offsets = [0, 192], sizes = [8, 32], strides = [1, 1]} : vector<8x384xf32> to vector<8x32xf32>
    %216 = vector.extract_strided_slice %177 {offsets = [0, 320], sizes = [8, 32], strides = [1, 1]} : vector<8x384xf32> to vector<8x32xf32>
    %cst_113 = arith.constant dense<0.000000e+00> : vector<8x8xf32>
    %217 = tpu.matmul %214, %215, %cst_113 {dimension_numbers = #tpu.dot_dimension_numbers<[1], [1], [0], [0], [0, 0, 1, 0], [], []>} : vector<8x32xf32>, vector<8x32xf32>, vector<8x8xf32> -> vector<8x8xf32>
    %cst_114 = arith.constant 0.176776692 : f32
    %218 = vector.broadcast %cst_114 : f32 to vector<8x8xf32>
    %219 = arith.mulf %217, %218 : vector<8x8xf32>
    %cst_115 = arith.constant dense<0xFF800000> : vector<8xf32>
    %220 = vector.multi_reduction <maximumf>, %219, %cst_115 [1] : vector<8x8xf32> to vector<8xf32>
    %221 = vector.shape_cast %220 : vector<8xf32> to vector<8x1xf32>
    %222 = vector.broadcast %221 : vector<8x1xf32> to vector<8x8xf32>
    %223 = arith.subf %219, %222 : vector<8x8xf32>
    %224 = math.exp %223 : vector<8x8xf32>
    %cst_116 = arith.constant dense<0.000000e+00> : vector<8xf32>
    %225 = vector.multi_reduction <add>, %224, %cst_116 [1] : vector<8x8xf32> to vector<8xf32>
    %226 = vector.shape_cast %225 : vector<8xf32> to vector<8x1xf32>
    %227 = tpu.reciprocal %226 {approx = true} : vector<8x1xf32> -> vector<8x1xf32>
    %228 = vector.broadcast %227 : vector<8x1xf32> to vector<8x8xf32>
    %229 = arith.mulf %224, %228 : vector<8x8xf32>
    %cst_117 = arith.constant dense<0.000000e+00> : vector<8x32xf32>
    %230 = tpu.matmul %229, %216, %cst_117 {dimension_numbers = #tpu.dot_dimension_numbers<[1], [0], [0], [1], [0, 0, 1, 1], [], []>} : vector<8x8xf32>, vector<8x32xf32>, vector<8x32xf32> -> vector<8x32xf32>
    %c0_118 = arith.constant 0 : index
    %c64_119 = arith.constant 64 : index
    %231 = vector.load %arg20[%c0_118, %c64_119] : memref<8x128xf32, #tpu.memory_space<vmem>>, vector<8x32xf32>
    tpu.vector_store %arg20[%c0_118, %c64_119], %230 {strides = array<i32>} : memref<8x128xf32, #tpu.memory_space<vmem>>, vector<8x32xf32>,
    %232 = vector.extract_strided_slice %177 {offsets = [0, 96], sizes = [8, 32], strides = [1, 1]} : vector<8x384xf32> to vector<8x32xf32>
    %233 = vector.extract_strided_slice %177 {offsets = [0, 224], sizes = [8, 32], strides = [1, 1]} : vector<8x384xf32> to vector<8x32xf32>
    %234 = vector.extract_strided_slice %177 {offsets = [0, 352], sizes = [8, 32], strides = [1, 1]} : vector<8x384xf32> to vector<8x32xf32>
    %cst_120 = arith.constant dense<0.000000e+00> : vector<8x8xf32>
    %235 = tpu.matmul %232, %233, %cst_120 {dimension_numbers = #tpu.dot_dimension_numbers<[1], [1], [0], [0], [0, 0, 1, 0], [], []>} : vector<8x32xf32>, vector<8x32xf32>, vector<8x8xf32> -> vector<8x8xf32>
    %cst_121 = arith.constant 0.176776692 : f32
    %236 = vector.broadcast %cst_121 : f32 to vector<8x8xf32>
    %237 = arith.mulf %235, %236 : vector<8x8xf32>
    %cst_122 = arith.constant dense<0xFF800000> : vector<8xf32>
    %238 = vector.multi_reduction <maximumf>, %237, %cst_122 [1] : vector<8x8xf32> to vector<8xf32>
    %239 = vector.shape_cast %238 : vector<8xf32> to vector<8x1xf32>
    %240 = vector.broadcast %239 : vector<8x1xf32> to vector<8x8xf32>
    %241 = arith.subf %237, %240 : vector<8x8xf32>
    %242 = math.exp %241 : vector<8x8xf32>
    %cst_123 = arith.constant dense<0.000000e+00> : vector<8xf32>
    %243 = vector.multi_reduction <add>, %242, %cst_123 [1] : vector<8x8xf32> to vector<8xf32>
    %244 = vector.shape_cast %243 : vector<8xf32> to vector<8x1xf32>
    %245 = tpu.reciprocal %244 {approx = true} : vector<8x1xf32> -> vector<8x1xf32>
    %246 = vector.broadcast %245 : vector<8x1xf32> to vector<8x8xf32>
    %247 = arith.mulf %242, %246 : vector<8x8xf32>
    %cst_124 = arith.constant dense<0.000000e+00> : vector<8x32xf32>
    %248 = tpu.matmul %247, %234, %cst_124 {dimension_numbers = #tpu.dot_dimension_numbers<[1], [0], [0], [1], [0, 0, 1, 1], [], []>} : vector<8x8xf32>, vector<8x32xf32>, vector<8x32xf32> -> vector<8x32xf32>
    %c0_125 = arith.constant 0 : index
    %c96_126 = arith.constant 96 : index
    %249 = vector.load %arg20[%c0_125, %c96_126] : memref<8x128xf32, #tpu.memory_space<vmem>>, vector<8x32xf32>
    tpu.vector_store %arg20[%c0_125, %c96_126], %248 {strides = array<i32>} : memref<8x128xf32, #tpu.memory_space<vmem>>, vector<8x32xf32>,
    %c0_127 = arith.constant 0 : index
    %c0_128 = arith.constant 0 : index
    %250 = vector.load %arg20[%c0_127, %c0_128] : memref<8x128xf32, #tpu.memory_space<vmem>>, vector<8x128xf32>
    %c1_129 = arith.constant 1 : index
    %c0_130 = arith.constant 0 : index
    %c0_131 = arith.constant 0 : index
    %251 = vector.load %arg9[%c1_129, %c0_130, %c0_131] : memref<2x128x128xf32, #tpu.memory_space<vmem>>, vector<1x128x128xf32>
    %252 = vector.shape_cast %251 : vector<1x128x128xf32> to vector<128x128xf32>
    %cst_132 = arith.constant dense<0.000000e+00> : vector<8x128xf32>
    %253 = tpu.matmul %250, %252, %cst_132 {dimension_numbers = #tpu.dot_dimension_numbers<[1], [0], [0], [1], [0, 0, 1, 1], [], []>} : vector<8x128xf32>, vector<128x128xf32>, vector<8x128xf32> -> vector<8x128xf32>
    %c1_133 = arith.constant 1 : index
    %c0_134 = arith.constant 0 : index
    %c0_135 = arith.constant 0 : index
    %254 = vector.load %arg10[%c1_133, %c0_134, %c0_135] : memref<2x1x128xf32, #tpu.memory_space<vmem>>, vector<1x1x128xf32>
    %255 = vector.shape_cast %254 : vector<1x1x128xf32> to vector<1x128xf32>
    %256 = vector.broadcast %255 : vector<1x128xf32> to vector<8x128xf32>
    %257 = arith.addf %253, %256 : vector<8x128xf32>
    %258 = arith.addf %257, %170 : vector<8x128xf32>
    %c1_136 = arith.constant 1 : index
    %c0_137 = arith.constant 0 : index
    %c0_138 = arith.constant 0 : index
    %259 = vector.load %arg11[%c1_136, %c0_137, %c0_138] : memref<2x1x128xf32, #tpu.memory_space<vmem>>, vector<1x1x128xf32>
    %260 = vector.shape_cast %259 : vector<1x1x128xf32> to vector<1x128xf32>
    %c1_139 = arith.constant 1 : index
    %c0_140 = arith.constant 0 : index
    %c0_141 = arith.constant 0 : index
    %261 = vector.load %arg12[%c1_139, %c0_140, %c0_141] : memref<2x1x128xf32, #tpu.memory_space<vmem>>, vector<1x1x128xf32>
    %262 = vector.shape_cast %261 : vector<1x1x128xf32> to vector<1x128xf32>
    %cst_142 = arith.constant dense<0.000000e+00> : vector<8xf32>
    %263 = vector.multi_reduction <add>, %258, %cst_142 [1] : vector<8x128xf32> to vector<8xf32>
    %264 = vector.shape_cast %263 : vector<8xf32> to vector<8x1xf32>
    %cst_143 = arith.constant 1.280000e+02 : f32
    %265 = vector.broadcast %cst_143 : f32 to vector<8x1xf32>
    %266 = arith.divf %264, %265 : vector<8x1xf32>
    %267 = vector.broadcast %266 : vector<8x1xf32> to vector<8x128xf32>
    %268 = arith.subf %258, %267 : vector<8x128xf32>
    %269 = arith.mulf %268, %268 : vector<8x128xf32>
    %cst_144 = arith.constant dense<0.000000e+00> : vector<8xf32>
    %270 = vector.multi_reduction <add>, %269, %cst_144 [1] : vector<8x128xf32> to vector<8xf32>
    %271 = vector.shape_cast %270 : vector<8xf32> to vector<8x1xf32>
    %cst_145 = arith.constant 1.280000e+02 : f32
    %272 = vector.broadcast %cst_145 : f32 to vector<8x1xf32>
    %273 = arith.divf %271, %272 : vector<8x1xf32>
    %cst_146 = arith.constant 9.99999974E-6 : f32
    %274 = vector.broadcast %cst_146 : f32 to vector<8x1xf32>
    %275 = arith.addf %273, %274 : vector<8x1xf32>
    %276 = math.rsqrt %275 : vector<8x1xf32>
    %277 = vector.broadcast %276 : vector<8x1xf32> to vector<8x128xf32>
    %278 = arith.mulf %268, %277 : vector<8x128xf32>
    %279 = vector.broadcast %260 : vector<1x128xf32> to vector<8x128xf32>
    %280 = arith.mulf %278, %279 : vector<8x128xf32>
    %281 = vector.broadcast %262 : vector<1x128xf32> to vector<8x128xf32>
    %282 = arith.addf %280, %281 : vector<8x128xf32>
    %c1_147 = arith.constant 1 : index
    %c0_148 = arith.constant 0 : index
    %c0_149 = arith.constant 0 : index
    %283 = vector.load %arg13[%c1_147, %c0_148, %c0_149] : memref<2x128x256xf32, #tpu.memory_space<vmem>>, vector<1x128x256xf32>
    %284 = vector.shape_cast %283 : vector<1x128x256xf32> to vector<128x256xf32>
    %cst_150 = arith.constant dense<0.000000e+00> : vector<8x256xf32>
    %285 = tpu.matmul %282, %284, %cst_150 {dimension_numbers = #tpu.dot_dimension_numbers<[1], [0], [0], [1], [0, 0, 1, 1], [], []>} : vector<8x128xf32>, vector<128x256xf32>, vector<8x256xf32> -> vector<8x256xf32>
    %c1_151 = arith.constant 1 : index
    %c0_152 = arith.constant 0 : index
    %c0_153 = arith.constant 0 : index
    %286 = vector.load %arg14[%c1_151, %c0_152, %c0_153] : memref<2x1x256xf32, #tpu.memory_space<vmem>>, vector<1x1x256xf32>
    %287 = vector.shape_cast %286 : vector<1x1x256xf32> to vector<1x256xf32>
    %288 = vector.broadcast %287 : vector<1x256xf32> to vector<8x256xf32>
    %289 = arith.addf %285, %288 : vector<8x256xf32>
    %cst_154 = arith.constant 0.000000e+00 : f32
    %290 = vector.broadcast %cst_154 : f32 to vector<8x256xf32>
    %291 = arith.maximumf %289, %290 : vector<8x256xf32>
    %c1_155 = arith.constant 1 : index
    %c0_156 = arith.constant 0 : index
    %c0_157 = arith.constant 0 : index
    %292 = vector.load %arg15[%c1_155, %c0_156, %c0_157] : memref<2x256x128xf32, #tpu.memory_space<vmem>>, vector<1x256x128xf32>
    %293 = vector.shape_cast %292 : vector<1x256x128xf32> to vector<256x128xf32>
    %cst_158 = arith.constant dense<0.000000e+00> : vector<8x128xf32>
    %294 = tpu.matmul %291, %293, %cst_158 {dimension_numbers = #tpu.dot_dimension_numbers<[1], [0], [0], [1], [0, 0, 1, 1], [], []>} : vector<8x256xf32>, vector<256x128xf32>, vector<8x128xf32> -> vector<8x128xf32>
    %c1_159 = arith.constant 1 : index
    %c0_160 = arith.constant 0 : index
    %c0_161 = arith.constant 0 : index
    %295 = vector.load %arg16[%c1_159, %c0_160, %c0_161] : memref<2x1x128xf32, #tpu.memory_space<vmem>>, vector<1x1x128xf32>
    %296 = vector.shape_cast %295 : vector<1x1x128xf32> to vector<1x128xf32>
    %297 = vector.broadcast %296 : vector<1x128xf32> to vector<8x128xf32>
    %298 = arith.addf %294, %297 : vector<8x128xf32>
    %299 = arith.addf %298, %282 : vector<8x128xf32>
    %c1_162 = arith.constant 1 : index
    %c0_163 = arith.constant 0 : index
    %c0_164 = arith.constant 0 : index
    %300 = vector.load %arg17[%c1_162, %c0_163, %c0_164] : memref<2x1x128xf32, #tpu.memory_space<vmem>>, vector<1x1x128xf32>
    %301 = vector.shape_cast %300 : vector<1x1x128xf32> to vector<1x128xf32>
    %c1_165 = arith.constant 1 : index
    %c0_166 = arith.constant 0 : index
    %c0_167 = arith.constant 0 : index
    %302 = vector.load %arg18[%c1_165, %c0_166, %c0_167] : memref<2x1x128xf32, #tpu.memory_space<vmem>>, vector<1x1x128xf32>
    %303 = vector.shape_cast %302 : vector<1x1x128xf32> to vector<1x128xf32>
    %cst_168 = arith.constant dense<0.000000e+00> : vector<8xf32>
    %304 = vector.multi_reduction <add>, %299, %cst_168 [1] : vector<8x128xf32> to vector<8xf32>
    %305 = vector.shape_cast %304 : vector<8xf32> to vector<8x1xf32>
    %cst_169 = arith.constant 1.280000e+02 : f32
    %306 = vector.broadcast %cst_169 : f32 to vector<8x1xf32>
    %307 = arith.divf %305, %306 : vector<8x1xf32>
    %308 = vector.broadcast %307 : vector<8x1xf32> to vector<8x128xf32>
    %309 = arith.subf %299, %308 : vector<8x128xf32>
    %310 = arith.mulf %309, %309 : vector<8x128xf32>
    %cst_170 = arith.constant dense<0.000000e+00> : vector<8xf32>
    %311 = vector.multi_reduction <add>, %310, %cst_170 [1] : vector<8x128xf32> to vector<8xf32>
    %312 = vector.shape_cast %311 : vector<8xf32> to vector<8x1xf32>
    %cst_171 = arith.constant 1.280000e+02 : f32
    %313 = vector.broadcast %cst_171 : f32 to vector<8x1xf32>
    %314 = arith.divf %312, %313 : vector<8x1xf32>
    %cst_172 = arith.constant 9.99999974E-6 : f32
    %315 = vector.broadcast %cst_172 : f32 to vector<8x1xf32>
    %316 = arith.addf %314, %315 : vector<8x1xf32>
    %317 = math.rsqrt %316 : vector<8x1xf32>
    %318 = vector.broadcast %317 : vector<8x1xf32> to vector<8x128xf32>
    %319 = arith.mulf %309, %318 : vector<8x128xf32>
    %320 = vector.broadcast %301 : vector<1x128xf32> to vector<8x128xf32>
    %321 = arith.mulf %319, %320 : vector<8x128xf32>
    %322 = vector.broadcast %303 : vector<1x128xf32> to vector<8x128xf32>
    %323 = arith.addf %321, %322 : vector<8x128xf32>
    %c0_173 = arith.constant 0 : index
    %c0_174 = arith.constant 0 : index
    %c0_175 = arith.constant 0 : index
    %324 = vector.load %arg19[%c0_173, %c0_174, %c0_175] : memref<1x8x128xf32, #tpu.memory_space<vmem>>, vector<1x8x128xf32>
    %325 = vector.shape_cast %324 : vector<1x8x128xf32> to vector<8x128xf32>
    %326 = vector.shape_cast %323 : vector<8x128xf32> to vector<1x8x128xf32>
    tpu.vector_store %arg19[%c0_173, %c0_174, %c0_175], %326 {strides = array<i32>} : memref<1x8x128xf32, #tpu.memory_space<vmem>>, vector<1x8x128xf32>,
    return
  }
  func.func @transform_0(%arg0: i32) -> (i32, i32, i32) {
    %c0_i32 = arith.constant 0 : i32
    %c0_i32_0 = arith.constant 0 : i32
    %c0_i32_1 = arith.constant 0 : i32
    return %arg0, %c0_i32, %c0_i32_0 : i32, i32, i32
  }
  func.func @transform_1(%arg0: i32) -> (i32, i32) {
    %c0_i32 = arith.constant 0 : i32
    %c0_i32_0 = arith.constant 0 : i32
    %c0_i32_1 = arith.constant 0 : i32
    return %c0_i32, %c0_i32_0 : i32, i32
  }
  func.func @transform_2(%arg0: i32) -> (i32, i32) {
    %c0_i32 = arith.constant 0 : i32
    %c0_i32_0 = arith.constant 0 : i32
    %c0_i32_1 = arith.constant 0 : i32
    return %c0_i32, %c0_i32_0 : i32, i32
  }
  func.func @transform_3(%arg0: i32) -> (i32, i32) {
    %c0_i32 = arith.constant 0 : i32
    %c0_i32_0 = arith.constant 0 : i32
    %c0_i32_1 = arith.constant 0 : i32
    return %c0_i32, %c0_i32_0 : i32, i32
  }
  func.func @transform_4(%arg0: i32) -> (i32, i32) {
    %c0_i32 = arith.constant 0 : i32
    %c0_i32_0 = arith.constant 0 : i32
    %c0_i32_1 = arith.constant 0 : i32
    return %c0_i32, %c0_i32_0 : i32, i32
  }
  func.func @transform_5(%arg0: i32) -> (i32, i32) {
    %c0_i32 = arith.constant 0 : i32
    %c0_i32_0 = arith.constant 0 : i32
    %c0_i32_1 = arith.constant 0 : i32
    return %c0_i32, %c0_i32_0 : i32, i32
  }
  func.func @transform_6(%arg0: i32) -> (i32, i32, i32) {
    %c0_i32 = arith.constant 0 : i32
    %c0_i32_0 = arith.constant 0 : i32
    %c0_i32_1 = arith.constant 0 : i32
    %c0_i32_2 = arith.constant 0 : i32
    return %c0_i32, %c0_i32_0, %c0_i32_1 : i32, i32, i32
  }
  func.func @transform_7(%arg0: i32) -> (i32, i32, i32) {
    %c0_i32 = arith.constant 0 : i32
    %c0_i32_0 = arith.constant 0 : i32
    %c0_i32_1 = arith.constant 0 : i32
    %c0_i32_2 = arith.constant 0 : i32
    return %c0_i32, %c0_i32_0, %c0_i32_1 : i32, i32, i32
  }
  func.func @transform_8(%arg0: i32) -> (i32, i32, i32) {
    %c0_i32 = arith.constant 0 : i32
    %c0_i32_0 = arith.constant 0 : i32
    %c0_i32_1 = arith.constant 0 : i32
    %c0_i32_2 = arith.constant 0 : i32
    return %c0_i32, %c0_i32_0, %c0_i32_1 : i32, i32, i32
  }
  func.func @transform_9(%arg0: i32) -> (i32, i32, i32) {
    %c0_i32 = arith.constant 0 : i32
    %c0_i32_0 = arith.constant 0 : i32
    %c0_i32_1 = arith.constant 0 : i32
    %c0_i32_2 = arith.constant 0 : i32
    return %c0_i32, %c0_i32_0, %c0_i32_1 : i32, i32, i32
  }
  func.func @transform_10(%arg0: i32) -> (i32, i32, i32) {
    %c0_i32 = arith.constant 0 : i32
    %c0_i32_0 = arith.constant 0 : i32
    %c0_i32_1 = arith.constant 0 : i32
    %c0_i32_2 = arith.constant 0 : i32
    return %c0_i32, %c0_i32_0, %c0_i32_1 : i32, i32, i32
  }
  func.func @transform_11(%arg0: i32) -> (i32, i32, i32) {
    %c0_i32 = arith.constant 0 : i32
    %c0_i32_0 = arith.constant 0 : i32
    %c0_i32_1 = arith.constant 0 : i32
    %c0_i32_2 = arith.constant 0 : i32
    return %c0_i32, %c0_i32_0, %c0_i32_1 : i32, i32, i32
  }
  func.func @transform_12(%arg0: i32) -> (i32, i32, i32) {
    %c0_i32 = arith.constant 0 : i32
    %c0_i32_0 = arith.constant 0 : i32
    %c0_i32_1 = arith.constant 0 : i32
    %c0_i32_2 = arith.constant 0 : i32
    return %c0_i32, %c0_i32_0, %c0_i32_1 : i32, i32, i32
  }
  func.func @transform_13(%arg0: i32) -> (i32, i32, i32) {
    %c0_i32 = arith.constant 0 : i32
    %c0_i32_0 = arith.constant 0 : i32
    %c0_i32_1 = arith.constant 0 : i32
    %c0_i32_2 = arith.constant 0 : i32
    return %c0_i32, %c0_i32_0, %c0_i32_1 : i32, i32, i32
  }
  func.func @transform_14(%arg0: i32) -> (i32, i32, i32) {
    %c0_i32 = arith.constant 0 : i32
    %c0_i32_0 = arith.constant 0 : i32
    %c0_i32_1 = arith.constant 0 : i32
    %c0_i32_2 = arith.constant 0 : i32
    return %c0_i32, %c0_i32_0, %c0_i32_1 : i32, i32, i32
  }
  func.func @transform_15(%arg0: i32) -> (i32, i32, i32) {
    %c0_i32 = arith.constant 0 : i32
    %c0_i32_0 = arith.constant 0 : i32
    %c0_i32_1 = arith.constant 0 : i32
    %c0_i32_2 = arith.constant 0 : i32
    return %c0_i32, %c0_i32_0, %c0_i32_1 : i32, i32, i32
  }
  func.func @transform_16(%arg0: i32) -> (i32, i32, i32) {
    %c0_i32 = arith.constant 0 : i32
    %c0_i32_0 = arith.constant 0 : i32
    %c0_i32_1 = arith.constant 0 : i32
    %c0_i32_2 = arith.constant 0 : i32
    return %c0_i32, %c0_i32_0, %c0_i32_1 : i32, i32, i32
  }
  func.func @transform_17(%arg0: i32) -> (i32, i32, i32) {
    %c0_i32 = arith.constant 0 : i32
    %c0_i32_0 = arith.constant 0 : i32
    %c0_i32_1 = arith.constant 0 : i32
    %c0_i32_2 = arith.constant 0 : i32
    return %c0_i32, %c0_i32_0, %c0_i32_1 : i32, i32, i32
  }
  func.func @transform_18(%arg0: i32) -> (i32, i32, i32) {
    %c0_i32 = arith.constant 0 : i32
    %c0_i32_0 = arith.constant 0 : i32
    %c0_i32_1 = arith.constant 0 : i32
    return %arg0, %c0_i32, %c0_i32_0 : i32, i32, i32
  }
}

</mosaic_0001>

<llo_original>
// kernel: _lambda_.1
$region0: #{_lambda_.1}
  #allocation0 [shape = 'u32[]', space=smem, size = 0x4, offset = 0x4, fixed_abs, tag = 'smem constant byte address 0x4 - core index']
  #allocation1 [shape = 'u32[144,128]{1,0:T(1,128)}', space=vmem, size = 0x12000, scoped, tag = 'internal scratch']
  #allocation2 [shape = 'f32[8,128]{1,0:T(8,128)}', space=vmem, size = 0x1000, scoped, tag = 'scratch operand']
  %s0 = inlined_call_operand.vmem [shape: f32[2,8,256], index: 0, kind: input, shape index: {}]
  %s1 = inlined_call_operand.hbm [shape: f32[256,128], index: 1, kind: input, shape index: {}]
  %s2 = inlined_call_operand.vmem [shape: f32[1,128], index: 2, kind: input, shape index: {}]
  %s3 = inlined_call_operand.hbm [shape: f32[128,128], index: 3, kind: input, shape index: {}]
  %s4 = inlined_call_operand.vmem [shape: f32[1,128], index: 4, kind: input, shape index: {}]
  %s5 = inlined_call_operand.vmem [shape: f32[8,128], index: 5, kind: input, shape index: {}]
  %s6 = inlined_call_operand.hbm [shape: f32[2,128,384], index: 6, kind: input, shape index: {}]
  %s7 = inlined_call_operand.vmem [shape: f32[2,1,384], index: 7, kind: input, shape index: {}]
  %s8 = inlined_call_operand.hbm [shape: f32[2,128,128], index: 8, kind: input, shape index: {}]
  %s9 = inlined_call_operand.vmem [shape: f32[2,1,128], index: 9, kind: input, shape index: {}]
  %s10 = inlined_call_operand.vmem [shape: f32[2,1,128], index: 10, kind: input, shape index: {}]
  %s11 = inlined_call_operand.vmem [shape: f32[2,1,128], index: 11, kind: input, shape index: {}]
  %s12 = inlined_call_operand.hbm [shape: f32[2,128,256], index: 12, kind: input, shape index: {}]
  %s13 = inlined_call_operand.vmem [shape: f32[2,1,256], index: 13, kind: input, shape index: {}]
  %s14 = inlined_call_operand.hbm [shape: f32[2,256,128], index: 14, kind: input, shape index: {}]
  %s15 = inlined_call_operand.vmem [shape: f32[2,1,128], index: 15, kind: input, shape index: {}]
  %s16 = inlined_call_operand.vmem [shape: f32[2,1,128], index: 16, kind: input, shape index: {}]
  %s17 = inlined_call_operand.vmem [shape: f32[2,1,128], index: 17, kind: input, shape index: {}]
  %s18 = inlined_call_operand.vmem [shape: f32[2,8,128], index: 18, kind: output, shape index: {}]
  %s19 = sld [smem:[#allocation0]]
  $region129: #{_lambda_.1} parent=0
    _
  %s21 = ssub.s32 1, %s19
  %s22 = scalar_select 0, %s21, %s19
  $region1: #{_lambda_.1} parent=0
    #allocation3 [shape = 'u8[131072]{0}', space=vmem, size = 0x20000, scoped, tag = 'input window, operand 1, single buffered']
    #allocation4 [shape = 's32[2]{0}', space=sflag, size = 0x8, scoped, tag = 'scoped memory for _lambda_.1']
    #allocation5 [shape = 'u8[65536]{0}', space=vmem, size = 0x10000, scoped, tag = 'input window, operand 3, single buffered']
    #allocation6 [shape = 's32[1]{0}', space=sflag, size = 0x4, scoped, tag = 'scoped memory for _lambda_.1']
    #allocation7 [shape = 'u8[393216]{0}', space=vmem, size = 0x60000, scoped, tag = 'input window, operand 6, single buffered']
    #allocation8 [shape = 'u8[131072]{0}', space=vmem, size = 0x20000, scoped, tag = 'input window, operand 8, single buffered']
    #allocation9 [shape = 's32[1]{0}', space=sflag, size = 0x4, scoped, tag = 'scoped memory for _lambda_.1']
    #allocation10 [shape = 'u8[262144]{0}', space=vmem, size = 0x40000, scoped, tag = 'input window, operand 12, single buffered']
    #allocation11 [shape = 'u8[262144]{0}', space=vmem, size = 0x40000, scoped, tag = 'input window, operand 14, single buffered']
    #allocation12 [shape = 's32[1]{0}', space=sflag, size = 0x4, scoped, tag = 'scoped memory for _lambda_.1']
    %23 = vsyncpa [#allocation4], 0
    %24 = vsyncpa [#allocation6], 0
    %25 = vsyncpa [#allocation9], 0
    %26 = vsyncpa [#allocation12], 0
    loop: start=0, step=1, limit=4
    $region2: #{_lambda_.1} parent=1 // loop_pre_header
      _
    $region3: #{_lambda_.1} parent=1 // loop_header
      %s28 = sphi 0, %s32
      %p29 = scmp.ge.s32.totalorder %s28, 4
      %s38 = sphi 0, %s40
      %s41 = sphi 0, %s38
      %s42 = sphi 0, %s41
      %s58 = sphi 0, %s42
      %s62 = sphi 0, %s62
      %s64 = sphi 0, %s62
      %s65 = sphi 0, %s64
      %s79 = sphi 0, %s65
      %s83 = sphi 0, %s83
      %s85 = sphi 0, %s83
      %s86 = sphi 0, %s85
      %s100 = sphi 0, %s86
      %s104 = sphi 0, %s104
      %s106 = sphi 0, %s104
      %s107 = sphi 0, %s106
      %s121 = sphi 0, %s107
      %s125 = sphi 0, %s125
      %s127 = sphi 0, %s125
      %s128 = sphi 0, %s127
      %s142 = sphi 0, %s128
      %s146 = sphi 0, %s146
      %s148 = sphi 0, %s146
      %s149 = sphi 0, %s148
      %s163 = sphi 0, %s149
      %s167 = sphi 0, %s167
      %s169 = sphi 0, %s167
      %s170 = sphi 0, %s169
      %s184 = sphi 0, %s170
      %s188 = sphi 0, %s188
      %s190 = sphi 0, %s188
      %s191 = sphi 0, %s190
      %s205 = sphi 0, %s191
      %s209 = sphi 0, %s209
      %s211 = sphi 0, %s209
      %s212 = sphi 0, %s211
      %s226 = sphi 0, %s212
      %s230 = sphi 0, %s230
      %s232 = sphi 0, %s230
      %s233 = sphi 0, %s232
      %s247 = sphi 0, %s233
      %s251 = sphi 0, %s251
      %s253 = sphi 0, %s251
      %s254 = sphi 0, %s253
      %s268 = sphi 0, %s254
      %s272 = sphi 0, %s272
      %s274 = sphi 0, %s272
      %s275 = sphi 0, %s274
      %s289 = sphi 0, %s275
      %s293 = sphi 0, %s293
      %s295 = sphi 0, %s293
      %s296 = sphi 0, %s295
      %s310 = sphi 0, %s296
      %s314 = sphi 0, %s314
      %s316 = sphi 0, %s314
      %s317 = sphi 0, %s316
      %s331 = sphi 0, %s317
      %s335 = sphi 0, %s335
      %s337 = sphi 0, %s335
      %s338 = sphi 0, %s337
      %s352 = sphi 0, %s338
      %s356 = sphi 0, %s356
      %s358 = sphi 0, %s356
      %s359 = sphi 0, %s358
      %s373 = sphi 0, %s359
      %s377 = sphi 0, %s377
      %s379 = sphi 0, %s377
      %s380 = sphi 0, %s379
      %s394 = sphi 0, %s380
      %s398 = sphi 0, %s398
      %s400 = sphi 0, %s398
      %s401 = sphi 0, %s400
      %s415 = sphi 0, %s401
      %s421 = sphi 0, %s423
      %s424 = sphi 0, %s421
      %s425 = sphi 0, %s424
      %s441 = sphi 0, %s425
    $region4: #{_lambda_.1} parent=1 // loop_header_branch
      %31 = sbr.rel (%p29) target = $region8
    $region5: #{_lambda_.1} parent=1 // loop_body
      %s33 = ssub.s32 %s28, 1
      %s34 = ssub.s32 %s28, 2
      %s35 = sadd.s32 %s28, 1
      %s36 = ssub.s32 %s28, %s35
      %p37 = scmp.eq.s32.totalorder %s36, 0
      %s39 = sadd.s32 %s38, 1
      %s40 = scalar_select %p37, %s38, %s39
      %p43 = pneg %p37
      %p44 = scmp.eq.s32.totalorder %s28, 1
      %p45 = por %p43, %p44
      %p46 = scmp.ne.s32.totalorder %s38, %s41
      %p47 = scmp.eq.s32.totalorder %s28, 0
      %p48 = por %p46, %p47
      %p49 = scmp.ne.s32.totalorder %s38, %s41
      %p50 = scmp.eq.s32.totalorder %s33, 1
      %p51 = por %p49, %p50
      %p52 = scmp.ne.s32.totalorder %s41, %s42
      %p53 = scmp.eq.s32.totalorder %s33, 0
      %p54 = por %p52, %p53
      %p55 = scmp.ne.s32.totalorder %s41, %s42
      %p56 = scmp.eq.s32.totalorder %s34, 1
      %p57 = por %p55, %p56
      %p59 = scmp.ne.s32.totalorder %s42, %s58
      %p60 = scmp.eq.s32.totalorder %s34, 0
      %p61 = por %p59, %p60
      %s63 = sadd.s32 %s62, 1
      %p66 = scmp.eq.s32.totalorder %s28, 1
      %p67 = scmp.ne.s32.totalorder %s62, %s64
      %p68 = scmp.eq.s32.totalorder %s28, 0
      %p69 = por %p67, %p68
      %p70 = scmp.ne.s32.totalorder %s62, %s64
      %p71 = scmp.eq.s32.totalorder %s33, 1
      %p72 = por %p70, %p71
      %p73 = scmp.ne.s32.totalorder %s64, %s65
      %p74 = scmp.eq.s32.totalorder %s33, 0
      %p75 = por %p73, %p74
      %p76 = scmp.ne.s32.totalorder %s64, %s65
      %p77 = scmp.eq.s32.totalorder %s34, 1
      %p78 = por %p76, %p77
      %p80 = scmp.ne.s32.totalorder %s65, %s79
      %p81 = scmp.eq.s32.totalorder %s34, 0
      %p82 = por %p80, %p81
      %s84 = sadd.s32 %s83, 1
      %p87 = scmp.eq.s32.totalorder %s28, 1
      %p88 = scmp.ne.s32.totalorder %s83, %s85
      %p89 = scmp.eq.s32.totalorder %s28, 0
      %p90 = por %p88, %p89
      %p91 = scmp.ne.s32.totalorder %s83, %s85
      %p92 = scmp.eq.s32.totalorder %s33, 1
      %p93 = por %p91, %p92
      %p94 = scmp.ne.s32.totalorder %s85, %s86
      %p95 = scmp.eq.s32.totalorder %s33, 0
      %p96 = por %p94, %p95
      %p97 = scmp.ne.s32.totalorder %s85, %s86
      %p98 = scmp.eq.s32.totalorder %s34, 1
      %p99 = por %p97, %p98
      %p101 = scmp.ne.s32.totalorder %s86, %s100
      %p102 = scmp.eq.s32.totalorder %s34, 0
      %p103 = por %p101, %p102
      %s105 = sadd.s32 %s104, 1
      %p108 = scmp.eq.s32.totalorder %s28, 1
      %p109 = scmp.ne.s32.totalorder %s104, %s106
      %p110 = scmp.eq.s32.totalorder %s28, 0
      %p111 = por %p109, %p110
      %p112 = scmp.ne.s32.totalorder %s104, %s106
      %p113 = scmp.eq.s32.totalorder %s33, 1
      %p114 = por %p112, %p113
      %p115 = scmp.ne.s32.totalorder %s106, %s107
      %p116 = scmp.eq.s32.totalorder %s33, 0
      %p117 = por %p115, %p116
      %p118 = scmp.ne.s32.totalorder %s106, %s107
      %p119 = scmp.eq.s32.totalorder %s34, 1
      %p120 = por %p118, %p119
      %p122 = scmp.ne.s32.totalorder %s107, %s121
      %p123 = scmp.eq.s32.totalorder %s34, 0
      %p124 = por %p122, %p123
      %s126 = sadd.s32 %s125, 1
      %p129 = scmp.eq.s32.totalorder %s28, 1
      %p130 = scmp.ne.s32.totalorder %s125, %s127
      %p131 = scmp.eq.s32.totalorder %s28, 0
      %p132 = por %p130, %p131
      %p133 = scmp.ne.s32.totalorder %s125, %s127
      %p134 = scmp.eq.s32.totalorder %s33, 1
      %p135 = por %p133, %p134
      %p136 = scmp.ne.s32.totalorder %s127, %s128
      %p137 = scmp.eq.s32.totalorder %s33, 0
      %p138 = por %p136, %p137
      %p139 = scmp.ne.s32.totalorder %s127, %s128
      %p140 = scmp.eq.s32.totalorder %s34, 1
      %p141 = por %p139, %p140
      %p143 = scmp.ne.s32.totalorder %s128, %s142
      %p144 = scmp.eq.s32.totalorder %s34, 0
      %p145 = por %p143, %p144
      %s147 = sadd.s32 %s146, 1
      %p150 = scmp.eq.s32.totalorder %s28, 1
      %p151 = scmp.ne.s32.totalorder %s146, %s148
      %p152 = scmp.eq.s32.totalorder %s28, 0
      %p153 = por %p151, %p152
      %p154 = scmp.ne.s32.totalorder %s146, %s148
      %p155 = scmp.eq.s32.totalorder %s33, 1
      %p156 = por %p154, %p155
      %p157 = scmp.ne.s32.totalorder %s148, %s149
      %p158 = scmp.eq.s32.totalorder %s33, 0
      %p159 = por %p157, %p158
      %p160 = scmp.ne.s32.totalorder %s148, %s149
      %p161 = scmp.eq.s32.totalorder %s34, 1
      %p162 = por %p160, %p161
      %p164 = scmp.ne.s32.totalorder %s149, %s163
      %p165 = scmp.eq.s32.totalorder %s34, 0
      %p166 = por %p164, %p165
      %s168 = sadd.s32 %s167, 1
      %p171 = scmp.eq.s32.totalorder %s28, 1
      %p172 = scmp.ne.s32.totalorder %s167, %s169
      %p173 = scmp.eq.s32.totalorder %s28, 0
      %p174 = por %p172, %p173
      %p175 = scmp.ne.s32.totalorder %s167, %s169
      %p176 = scmp.eq.s32.totalorder %s33, 1
      %p177 = por %p175, %p176
      %p178 = scmp.ne.s32.totalorder %s169, %s170
      %p179 = scmp.eq.s32.totalorder %s33, 0
      %p180 = por %p178, %p179
      %p181 = scmp.ne.s32.totalorder %s169, %s170
      %p182 = scmp.eq.s32.totalorder %s34, 1
      %p183 = por %p181, %p182
      %p185 = scmp.ne.s32.totalorder %s170, %s184
      %p186 = scmp.eq.s32.totalorder %s34, 0
      %p187 = por %p185, %p186
      %s189 = sadd.s32 %s188, 1
      %p192 = scmp.eq.s32.totalorder %s28, 1
      %p193 = scmp.ne.s32.totalorder %s188, %s190
      %p194 = scmp.eq.s32.totalorder %s28, 0
      %p195 = por %p193, %p194
      %p196 = scmp.ne.s32.totalorder %s188, %s190
      %p197 = scmp.eq.s32.totalorder %s33, 1
      %p198 = por %p196, %p197
      %p199 = scmp.ne.s32.totalorder %s190, %s191
      %p200 = scmp.eq.s32.totalorder %s33, 0
      %p201 = por %p199, %p200
      %p202 = scmp.ne.s32.totalorder %s190, %s191
      %p203 = scmp.eq.s32.totalorder %s34, 1
      %p204 = por %p202, %p203
      %p206 = scmp.ne.s32.totalorder %s191, %s205
      %p207 = scmp.eq.s32.totalorder %s34, 0
      %p208 = por %p206, %p207
      %s210 = sadd.s32 %s209, 1
      %p213 = scmp.eq.s32.totalorder %s28, 1
      %p214 = scmp.ne.s32.totalorder %s209, %s211
      %p215 = scmp.eq.s32.totalorder %s28, 0
      %p216 = por %p214, %p215
      %p217 = scmp.ne.s32.totalorder %s209, %s211
      %p218 = scmp.eq.s32.totalorder %s33, 1
      %p219 = por %p217, %p218
      %p220 = scmp.ne.s32.totalorder %s211, %s212
      %p221 = scmp.eq.s32.totalorder %s33, 0
      %p222 = por %p220, %p221
      %p223 = scmp.ne.s32.totalorder %s211, %s212
      %p224 = scmp.eq.s32.totalorder %s34, 1
      %p225 = por %p223, %p224
      %p227 = scmp.ne.s32.totalorder %s212, %s226
      %p228 = scmp.eq.s32.totalorder %s34, 0
      %p229 = por %p227, %p228
      %s231 = sadd.s32 %s230, 1
      %p234 = scmp.eq.s32.totalorder %s28, 1
      %p235 = scmp.ne.s32.totalorder %s230, %s232
      %p236 = scmp.eq.s32.totalorder %s28, 0
      %p237 = por %p235, %p236
      %p238 = scmp.ne.s32.totalorder %s230, %s232
      %p239 = scmp.eq.s32.totalorder %s33, 1
      %p240 = por %p238, %p239
      %p241 = scmp.ne.s32.totalorder %s232, %s233
      %p242 = scmp.eq.s32.totalorder %s33, 0
      %p243 = por %p241, %p242
      %p244 = scmp.ne.s32.totalorder %s232, %s233
      %p245 = scmp.eq.s32.totalorder %s34, 1
      %p246 = por %p244, %p245
      %p248 = scmp.ne.s32.totalorder %s233, %s247
      %p249 = scmp.eq.s32.totalorder %s34, 0
      %p250 = por %p248, %p249
      %s252 = sadd.s32 %s251, 1
      %p255 = scmp.eq.s32.totalorder %s28, 1
      %p256 = scmp.ne.s32.totalorder %s251, %s253
      %p257 = scmp.eq.s32.totalorder %s28, 0
      %p258 = por %p256, %p257
      %p259 = scmp.ne.s32.totalorder %s251, %s253
      %p260 = scmp.eq.s32.totalorder %s33, 1
      %p261 = por %p259, %p260
      %p262 = scmp.ne.s32.totalorder %s253, %s254
      %p263 = scmp.eq.s32.totalorder %s33, 0
      %p264 = por %p262, %p263
      %p265 = scmp.ne.s32.totalorder %s253, %s254
      %p266 = scmp.eq.s32.totalorder %s34, 1
      %p267 = por %p265, %p266
      %p269 = scmp.ne.s32.totalorder %s254, %s268
      %p270 = scmp.eq.s32.totalorder %s34, 0
      %p271 = por %p269, %p270
      %s273 = sadd.s32 %s272, 1
      %p276 = scmp.eq.s32.totalorder %s28, 1
      %p277 = scmp.ne.s32.totalorder %s272, %s274
      %p278 = scmp.eq.s32.totalorder %s28, 0
      %p279 = por %p277, %p278
      %p280 = scmp.ne.s32.totalorder %s272, %s274
      %p281 = scmp.eq.s32.totalorder %s33, 1
      %p282 = por %p280, %p281
      %p283 = scmp.ne.s32.totalorder %s274, %s275
      %p284 = scmp.eq.s32.totalorder %s33, 0
      %p285 = por %p283, %p284
      %p286 = scmp.ne.s32.totalorder %s274, %s275
      %p287 = scmp.eq.s32.totalorder %s34, 1
      %p288 = por %p286, %p287
      %p290 = scmp.ne.s32.totalorder %s275, %s289
      %p291 = scmp.eq.s32.totalorder %s34, 0
      %p292 = por %p290, %p291
      %s294 = sadd.s32 %s293, 1
      %p297 = scmp.eq.s32.totalorder %s28, 1
      %p298 = scmp.ne.s32.totalorder %s293, %s295
      %p299 = scmp.eq.s32.totalorder %s28, 0
      %p300 = por %p298, %p299
      %p301 = scmp.ne.s32.totalorder %s293, %s295
      %p302 = scmp.eq.s32.totalorder %s33, 1
      %p303 = por %p301, %p302
      %p304 = scmp.ne.s32.totalorder %s295, %s296
      %p305 = scmp.eq.s32.totalorder %s33, 0
      %p306 = por %p304, %p305
      %p307 = scmp.ne.s32.totalorder %s295, %s296
      %p308 = scmp.eq.s32.totalorder %s34, 1
      %p309 = por %p307, %p308
      %p311 = scmp.ne.s32.totalorder %s296, %s310
      %p312 = scmp.eq.s32.totalorder %s34, 0
      %p313 = por %p311, %p312
      %s315 = sadd.s32 %s314, 1
      %p318 = scmp.eq.s32.totalorder %s28, 1
      %p319 = scmp.ne.s32.totalorder %s314, %s316
      %p320 = scmp.eq.s32.totalorder %s28, 0
      %p321 = por %p319, %p320
      %p322 = scmp.ne.s32.totalorder %s314, %s316
      %p323 = scmp.eq.s32.totalorder %s33, 1
      %p324 = por %p322, %p323
      %p325 = scmp.ne.s32.totalorder %s316, %s317
      %p326 = scmp.eq.s32.totalorder %s33, 0
      %p327 = por %p325, %p326
      %p328 = scmp.ne.s32.totalorder %s316, %s317
      %p329 = scmp.eq.s32.totalorder %s34, 1
      %p330 = por %p328, %p329
      %p332 = scmp.ne.s32.totalorder %s317, %s331
      %p333 = scmp.eq.s32.totalorder %s34, 0
      %p334 = por %p332, %p333
      %s336 = sadd.s32 %s335, 1
      %p339 = scmp.eq.s32.totalorder %s28, 1
      %p340 = scmp.ne.s32.totalorder %s335, %s337
      %p341 = scmp.eq.s32.totalorder %s28, 0
      %p342 = por %p340, %p341
      %p343 = scmp.ne.s32.totalorder %s335, %s337
      %p344 = scmp.eq.s32.totalorder %s33, 1
      %p345 = por %p343, %p344
      %p346 = scmp.ne.s32.totalorder %s337, %s338
      %p347 = scmp.eq.s32.totalorder %s33, 0
      %p348 = por %p346, %p347
      %p349 = scmp.ne.s32.totalorder %s337, %s338
      %p350 = scmp.eq.s32.totalorder %s34, 1
      %p351 = por %p349, %p350
      %p353 = scmp.ne.s32.totalorder %s338, %s352
      %p354 = scmp.eq.s32.totalorder %s34, 0
      %p355 = por %p353, %p354
      %s357 = sadd.s32 %s356, 1
      %p360 = scmp.eq.s32.totalorder %s28, 1
      %p361 = scmp.ne.s32.totalorder %s356, %s358
      %p362 = scmp.eq.s32.totalorder %s28, 0
      %p363 = por %p361, %p362
      %p364 = scmp.ne.s32.totalorder %s356, %s358
      %p365 = scmp.eq.s32.totalorder %s33, 1
      %p366 = por %p364, %p365
      %p367 = scmp.ne.s32.totalorder %s358, %s359
      %p368 = scmp.eq.s32.totalorder %s33, 0
      %p369 = por %p367, %p368
      %p370 = scmp.ne.s32.totalorder %s358, %s359
      %p371 = scmp.eq.s32.totalorder %s34, 1
      %p372 = por %p370, %p371
      %p374 = scmp.ne.s32.totalorder %s359, %s373
      %p375 = scmp.eq.s32.totalorder %s34, 0
      %p376 = por %p374, %p375
      %s378 = sadd.s32 %s377, 1
      %p381 = scmp.eq.s32.totalorder %s28, 1
      %p382 = scmp.ne.s32.totalorder %s377, %s379
      %p383 = scmp.eq.s32.totalorder %s28, 0
      %p384 = por %p382, %p383
      %p385 = scmp.ne.s32.totalorder %s377, %s379
      %p386 = scmp.eq.s32.totalorder %s33, 1
      %p387 = por %p385, %p386
      %p388 = scmp.ne.s32.totalorder %s379, %s380
      %p389 = scmp.eq.s32.totalorder %s33, 0
      %p390 = por %p388, %p389
      %p391 = scmp.ne.s32.totalorder %s379, %s380
      %p392 = scmp.eq.s32.totalorder %s34, 1
      %p393 = por %p391, %p392
      %p395 = scmp.ne.s32.totalorder %s380, %s394
      %p396 = scmp.eq.s32.totalorder %s34, 0
      %p397 = por %p395, %p396
      %s399 = sadd.s32 %s398, 1
      %p402 = scmp.eq.s32.totalorder %s28, 1
      %p403 = scmp.ne.s32.totalorder %s398, %s400
      %p404 = scmp.eq.s32.totalorder %s28, 0
      %p405 = por %p403, %p404
      %p406 = scmp.ne.s32.totalorder %s398, %s400
      %p407 = scmp.eq.s32.totalorder %s33, 1
      %p408 = por %p406, %p407
      %p409 = scmp.ne.s32.totalorder %s400, %s401
      %p410 = scmp.eq.s32.totalorder %s33, 0
      %p411 = por %p409, %p410
      %p412 = scmp.ne.s32.totalorder %s400, %s401
      %p413 = scmp.eq.s32.totalorder %s34, 1
      %p414 = por %p412, %p413
      %p416 = scmp.ne.s32.totalorder %s401, %s415
      %p417 = scmp.eq.s32.totalorder %s34, 0
      %p418 = por %p416, %p417
      %s419 = ssub.s32 %s28, %s35
      %p420 = scmp.eq.s32.totalorder %s419, 0
      %s422 = sadd.s32 %s421, 1
      %s423 = scalar_select %p420, %s421, %s422
      %p426 = pneg %p420
      %p427 = scmp.eq.s32.totalorder %s28, 1
      %p428 = por %p426, %p427
      %p429 = scmp.ne.s32.totalorder %s421, %s424
      %p430 = scmp.eq.s32.totalorder %s28, 0
      %p431 = por %p429, %p430
      %p432 = scmp.ne.s32.totalorder %s421, %s424
      %p433 = scmp.eq.s32.totalorder %s33, 1
      %p434 = por %p432, %p433
      %p435 = scmp.ne.s32.totalorder %s424, %s425
      %p436 = scmp.eq.s32.totalorder %s33, 0
      %p437 = por %p435, %p436
      %p438 = scmp.ne.s32.totalorder %s424, %s425
      %p439 = scmp.eq.s32.totalorder %s34, 1
      %p440 = por %p438, %p439
      %p442 = scmp.ne.s32.totalorder %s425, %s441
      %p443 = scmp.eq.s32.totalorder %s34, 0
      %p444 = por %p442, %p443
      %p445 = scmp.le.s32.totalorder 1, %s28
      %p446 = scmp.lt.s32.totalorder %s28, 3
      %p447 = pnand %p445, %p446
      %p448 = pneg %p447
      // Predicated region
      $region9: #{_lambda_.1} parent=5 // pred_check
        _
      $region10: #{_lambda_.1} parent=5 // pred_check_branch
        %450 = sbr.rel (%p447) target = $region12
      $region11: #{_lambda_.1} parent=5 // pred_region
        %s451 = ssub.s32 %s28, 1
        // Predicated region
        $region13: #{_lambda_.1} parent=11 // pred_check
          %p452 = pneg %p75
        $region14: #{_lambda_.1} parent=11 // pred_check_branch
          %454 = sbr.rel (%p452) target = $region16
        $region15: #{_lambda_.1} parent=11 // pred_region
          %s456 = ssub.s32 4096, 4096
          %457 = vsyncadd [#allocation4], %s456
          %s458 = sshll.u32 [#allocation3], 4
          %s459 = int_to_ptr.vmem [resolvable:$true] %s458
          %464 = dma.hbm_to_vmem [thread:$0]  %s1, 4096, %s459, [#allocation4], 128, 128, 8
        $region16: #{_lambda_.1} parent=11 // pred_fallthru
          _
        // Predicated region
        $region17: #{_lambda_.1} parent=11 // pred_check
          %p465 = pneg %p96
        $region18: #{_lambda_.1} parent=11 // pred_check_branch
          %467 = sbr.rel (%p465) target = $region20
        $region19: #{_lambda_.1} parent=11 // pred_region
          _
        $region20: #{_lambda_.1} parent=11 // pred_fallthru
          _
        // Predicated region
        $region21: #{_lambda_.1} parent=11 // pred_check
          %p468 = pneg %p117
        $region22: #{_lambda_.1} parent=11 // pred_check_branch
          %470 = sbr.rel (%p468) target = $region24
        $region23: #{_lambda_.1} parent=11 // pred_region
          %s472 = ssub.s32 2048, 2048
          %473 = vsyncadd [#allocation6], %s472
          %s474 = sshll.u32 [#allocation5], 4
          %s475 = int_to_ptr.vmem [resolvable:$true] %s474
          %480 = dma.hbm_to_vmem [thread:$0]  %s3, 2048, %s475, [#allocation6], 128, 128, 8
        $region24: #{_lambda_.1} parent=11 // pred_fallthru
          _
        // Predicated region
        $region25: #{_lambda_.1} parent=11 // pred_check
          %p481 = pneg %p138
        $region26: #{_lambda_.1} parent=11 // pred_check_branch
          %483 = sbr.rel (%p481) target = $region28
        $region27: #{_lambda_.1} parent=11 // pred_region
          _
        $region28: #{_lambda_.1} parent=11 // pred_fallthru
          _
        // Predicated region
        $region29: #{_lambda_.1} parent=11 // pred_check
          %p484 = pneg %p159
        $region30: #{_lambda_.1} parent=11 // pred_check_branch
          %486 = sbr.rel (%p484) target = $region32
        $region31: #{_lambda_.1} parent=11 // pred_region
          _
        $region32: #{_lambda_.1} parent=11 // pred_fallthru
          _
        // Predicated region
        $region33: #{_lambda_.1} parent=11 // pred_check
          %p487 = pneg %p180
        $region34: #{_lambda_.1} parent=11 // pred_check_branch
          %489 = sbr.rel (%p487) target = $region36
        $region35: #{_lambda_.1} parent=11 // pred_region
          %s491 = ssub.s32 12288, 12288
          %492 = vsyncadd [#allocation6], %s491
          %s493 = sshll.u32 [#allocation7], 4
          %s494 = int_to_ptr.vmem [resolvable:$true] %s493
          %499 = dma.hbm_to_vmem [thread:$0]  %s6, 12288, %s494, [#allocation6], 384, 384, 24
        $region36: #{_lambda_.1} parent=11 // pred_fallthru
          _
        // Predicated region
        $region37: #{_lambda_.1} parent=11 // pred_check
          %p500 = pneg %p201
        $region38: #{_lambda_.1} parent=11 // pred_check_branch
          %502 = sbr.rel (%p500) target = $region40
        $region39: #{_lambda_.1} parent=11 // pred_region
          _
        $region40: #{_lambda_.1} parent=11 // pred_fallthru
          _
        // Predicated region
        $region41: #{_lambda_.1} parent=11 // pred_check
          %p503 = pneg %p222
        $region42: #{_lambda_.1} parent=11 // pred_check_branch
          %505 = sbr.rel (%p503) target = $region44
        $region43: #{_lambda_.1} parent=11 // pred_region
          %s507 = ssub.s32 4096, 4096
          %508 = vsyncadd [#allocation9], %s507
          %s509 = sshll.u32 [#allocation8], 4
          %s510 = int_to_ptr.vmem [resolvable:$true] %s509
          %515 = dma.hbm_to_vmem [thread:$0]  %s8, 4096, %s510, [#allocation9], 128, 128, 8
        $region44: #{_lambda_.1} parent=11 // pred_fallthru
          _
        // Predicated region
        $region45: #{_lambda_.1} parent=11 // pred_check
          %p516 = pneg %p243
        $region46: #{_lambda_.1} parent=11 // pred_check_branch
          %518 = sbr.rel (%p516) target = $region48
        $region47: #{_lambda_.1} parent=11 // pred_region
          _
        $region48: #{_lambda_.1} parent=11 // pred_fallthru
          _
        // Predicated region
        $region49: #{_lambda_.1} parent=11 // pred_check
          %p519 = pneg %p264
        $region50: #{_lambda_.1} parent=11 // pred_check_branch
          %521 = sbr.rel (%p519) target = $region52
        $region51: #{_lambda_.1} parent=11 // pred_region
          _
        $region52: #{_lambda_.1} parent=11 // pred_fallthru
          _
        // Predicated region
        $region53: #{_lambda_.1} parent=11 // pred_check
          %p522 = pneg %p285
        $region54: #{_lambda_.1} parent=11 // pred_check_branch
          %524 = sbr.rel (%p522) target = $region56
        $region55: #{_lambda_.1} parent=11 // pred_region
          _
        $region56: #{_lambda_.1} parent=11 // pred_fallthru
          _
        // Predicated region
        $region57: #{_lambda_.1} parent=11 // pred_check
          %p525 = pneg %p306
        $region58: #{_lambda_.1} parent=11 // pred_check_branch
          %527 = sbr.rel (%p525) target = $region60
        $region59: #{_lambda_.1} parent=11 // pred_region
          %s529 = ssub.s32 8192, 8192
          %530 = vsyncadd [#allocation9], %s529
          %s531 = sshll.u32 [#allocation10], 4
          %s532 = int_to_ptr.vmem [resolvable:$true] %s531
          %537 = dma.hbm_to_vmem [thread:$0]  %s12, 8192, %s532, [#allocation9], 256, 256, 16
        $region60: #{_lambda_.1} parent=11 // pred_fallthru
          _
        // Predicated region
        $region61: #{_lambda_.1} parent=11 // pred_check
          %p538 = pneg %p327
        $region62: #{_lambda_.1} parent=11 // pred_check_branch
          %540 = sbr.rel (%p538) target = $region64
        $region63: #{_lambda_.1} parent=11 // pred_region
          _
        $region64: #{_lambda_.1} parent=11 // pred_fallthru
          _
        // Predicated region
        $region65: #{_lambda_.1} parent=11 // pred_check
          %p541 = pneg %p348
        $region66: #{_lambda_.1} parent=11 // pred_check_branch
          %543 = sbr.rel (%p541) target = $region68
        $region67: #{_lambda_.1} parent=11 // pred_region
          %s545 = ssub.s32 8192, 8192
          %546 = vsyncadd [#allocation12], %s545
          %s547 = sshll.u32 [#allocation11], 4
          %s548 = int_to_ptr.vmem [resolvable:$true] %s547
          %553 = dma.hbm_to_vmem [thread:$0]  %s14, 8192, %s548, [#allocation12], 128, 128, 8
        $region68: #{_lambda_.1} parent=11 // pred_fallthru
          _
        // Predicated region
        $region69: #{_lambda_.1} parent=11 // pred_check
          %p554 = pneg %p369
        $region70: #{_lambda_.1} parent=11 // pred_check_branch
          %556 = sbr.rel (%p554) target = $region72
        $region71: #{_lambda_.1} parent=11 // pred_region
          _
        $region72: #{_lambda_.1} parent=11 // pred_fallthru
          _
        // Predicated region
        $region73: #{_lambda_.1} parent=11 // pred_check
          %p557 = pneg %p390
        $region74: #{_lambda_.1} parent=11 // pred_check_branch
          %559 = sbr.rel (%p557) target = $region76
        $region75: #{_lambda_.1} parent=11 // pred_region
          _
        $region76: #{_lambda_.1} parent=11 // pred_fallthru
          _
        // Predicated region
        $region77: #{_lambda_.1} parent=11 // pred_check
          %p560 = pneg %p411
        $region78: #{_lambda_.1} parent=11 // pred_check_branch
          %562 = sbr.rel (%p560) target = $region80
        $region79: #{_lambda_.1} parent=11 // pred_region
          _
        $region80: #{_lambda_.1} parent=11 // pred_fallthru
          _
      $region12: #{_lambda_.1} parent=5 // pred_fallthru
        _
      %p563 = scmp.lt.s32.totalorder %s28, 2
      // Predicated region
      $region81: #{_lambda_.1} parent=5 // pred_check
        %p564 = pneg %p563
      $region82: #{_lambda_.1} parent=5 // pred_check_branch
        %566 = sbr.rel (%p564) target = $region84
      $region83: #{_lambda_.1} parent=5 // pred_region
        // Predicated region
        $region85: #{_lambda_.1} parent=83 // pred_check
          %p567 = pneg %p48
        $region86: #{_lambda_.1} parent=83 // pred_check_branch
          %569 = sbr.rel (%p567) target = $region88
        $region87: #{_lambda_.1} parent=83 // pred_region
          %p570 = scmp.lt.s32.totalorder %s28, 1
          %s571 = scalar_select %p570, %s28, 1
          %s572 = smul.addr %s571, 2
          %s573 = smul.addr %s572, 8
          %s574 = scalar_lea.vmem %s0, %s573
        $region88: #{_lambda_.1} parent=83 // pred_fallthru
          _
      $region84: #{_lambda_.1} parent=5 // pred_fallthru
        _
      %p575 = scmp.le.s32.totalorder 1, %s28
      %p576 = scmp.lt.s32.totalorder %s28, 3
      %p577 = pnand %p575, %p576
      %p578 = pneg %p577
      // Predicated region
      $region89: #{_lambda_.1} parent=5 // pred_check
        _
      $region90: #{_lambda_.1} parent=5 // pred_check_branch
        %580 = sbr.rel (%p577) target = $region92
      $region91: #{_lambda_.1} parent=5 // pred_region
        %s581 = ssub.s32 %s28, 1
        // Predicated region
        $region93: #{_lambda_.1} parent=91 // pred_check
          %p582 = pneg %p75
        $region94: #{_lambda_.1} parent=91 // pred_check_branch
          %584 = sbr.rel (%p582) target = $region96
        $region95: #{_lambda_.1} parent=91 // pred_region
          %585 = dma.done [#allocation4], 4096
        $region96: #{_lambda_.1} parent=91 // pred_fallthru
          _
        // Predicated region
        $region97: #{_lambda_.1} parent=91 // pred_check
          %p586 = pneg %p117
        $region98: #{_lambda_.1} parent=91 // pred_check_branch
          %588 = sbr.rel (%p586) target = $region100
        $region99: #{_lambda_.1} parent=91 // pred_region
          %589 = dma.done [#allocation6], 2048
        $region100: #{_lambda_.1} parent=91 // pred_fallthru
          _
        // Predicated region
        $region101: #{_lambda_.1} parent=91 // pred_check
          %p590 = pneg %p180
        $region102: #{_lambda_.1} parent=91 // pred_check_branch
          %592 = sbr.rel (%p590) target = $region104
        $region103: #{_lambda_.1} parent=91 // pred_region
          %593 = dma.done [#allocation6], 12288
        $region104: #{_lambda_.1} parent=91 // pred_fallthru
          _
        // Predicated region
        $region105: #{_lambda_.1} parent=91 // pred_check
          %p594 = pneg %p222
        $region106: #{_lambda_.1} parent=91 // pred_check_branch
          %596 = sbr.rel (%p594) target = $region108
        $region107: #{_lambda_.1} parent=91 // pred_region
          %597 = dma.done [#allocation9], 4096
        $region108: #{_lambda_.1} parent=91 // pred_fallthru
          _
        // Predicated region
        $region109: #{_lambda_.1} parent=91 // pred_check
          %p598 = pneg %p306
        $region110: #{_lambda_.1} parent=91 // pred_check_branch
          %600 = sbr.rel (%p598) target = $region112
        $region111: #{_lambda_.1} parent=91 // pred_region
          %601 = dma.done [#allocation9], 8192
        $region112: #{_lambda_.1} parent=91 // pred_fallthru
          _
        // Predicated region
        $region113: #{_lambda_.1} parent=91 // pred_check
          %p602 = pneg %p348
        $region114: #{_lambda_.1} parent=91 // pred_check_branch
          %604 = sbr.rel (%p602) target = $region116
        $region115: #{_lambda_.1} parent=91 // pred_region
          %605 = dma.done [#allocation12], 8192
        $region116: #{_lambda_.1} parent=91 // pred_fallthru
          _
        %p606 = scmp.lt.s32.totalorder %s33, 1
        %s607 = scalar_select %p606, %s33, 1
        %s608 = smul.addr %s607, 2
        %s609 = smul.addr %s608, 8
        %s610 = scalar_lea.vmem %s0, %s609
        %p611 = pneg %p54
        %p612 = pneg %p51
        %p613 = pneg %p75
        %p614 = pneg %p72
        %p615 = pneg %p96
        %p616 = pneg %p93
        %p617 = pneg %p117
        %p618 = pneg %p114
        %p619 = pneg %p138
        %p620 = pneg %p135
        %p621 = pneg %p159
        %p622 = pneg %p156
        %p623 = pneg %p180
        %p624 = pneg %p177
        %p625 = pneg %p201
        %p626 = pneg %p198
        %p627 = pneg %p222
        %p628 = pneg %p219
        %p629 = pneg %p243
        %p630 = pneg %p240
        %p631 = pneg %p264
        %p632 = pneg %p261
        %p633 = pneg %p285
        %p634 = pneg %p282
        %p635 = pneg %p306
        %p636 = pneg %p303
        %p637 = pneg %p327
        %p638 = pneg %p324
        %p639 = pneg %p348
        %p640 = pneg %p345
        %p641 = pneg %p369
        %p642 = pneg %p366
        %p643 = pneg %p390
        %p644 = pneg %p387
        %p645 = pneg %p411
        %p646 = pneg %p408
        %p647 = pneg %p437
        %p648 = pneg %p434
        %p649 = scmp.lt.s32.totalorder %s33, 1
        %s650 = scalar_select %p649, %s33, 1
        %s651 = smul.addr %s650, 8
        %s652 = scalar_lea.vmem %s18, %s651
        %p653 = scmp.lt.s32.totalorder %s33, 1
        %s654 = scalar_select %p653, %s33, 1
        %s655 = smul.addr %s654, 2
        %s656 = smul.addr %s655, 8
        %s657 = scalar_lea.vmem %s0, %s656
        %p658 = scmp.lt.s32.totalorder %s33, 1
        %s659 = scalar_select %p658, %s33, 1
        %s660 = smul.addr %s659, 8
        %s661 = scalar_lea.vmem %s18, %s660
        %v662 = vld [vmem:[%s657] sm:$0xff]
        %v663 = vld [vmem:[%s657 + $0x8] sm:$0xff]
        %v664 = vmax.f32 %v662, 0.0
        %v665 = vmax.f32 %v663, 0.0
        %v666 = vld [vmem:[#allocation3] sm:$0xff]
        %v667 = vld [vmem:[#allocation3 + $0x8] sm:$0xff]
        %v668 = vld [vmem:[#allocation3 + $0x10] sm:$0xff]
        %v669 = vld [vmem:[#allocation3 + $0x18] sm:$0xff]
        %v670 = vld [vmem:[#allocation3 + $0x20] sm:$0xff]
        %v671 = vld [vmem:[#allocation3 + $0x28] sm:$0xff]
        %v672 = vld [vmem:[#allocation3 + $0x30] sm:$0xff]
        %v673 = vld [vmem:[#allocation3 + $0x38] sm:$0xff]
        %v674 = vld [vmem:[#allocation3 + $0x40] sm:$0xff]
        %v675 = vld [vmem:[#allocation3 + $0x48] sm:$0xff]
        %v676 = vld [vmem:[#allocation3 + $0x50] sm:$0xff]
        %v677 = vld [vmem:[#allocation3 + $0x58] sm:$0xff]
        %v678 = vld [vmem:[#allocation3 + $0x60] sm:$0xff]
        %v679 = vld [vmem:[#allocation3 + $0x68] sm:$0xff]
        %v680 = vld [vmem:[#allocation3 + $0x70] sm:$0xff]
        %v681 = vld [vmem:[#allocation3 + $0x78] sm:$0xff]
        %v682 = vld [vmem:[#allocation3 + $0x80] sm:$0xff]
        %v683 = vld [vmem:[#allocation3 + $0x88] sm:$0xff]
        %v684 = vld [vmem:[#allocation3 + $0x90] sm:$0xff]
        %v685 = vld [vmem:[#allocation3 + $0x98] sm:$0xff]
        %v686 = vld [vmem:[#allocation3 + $0xa0] sm:$0xff]
        %v687 = vld [vmem:[#allocation3 + $0xa8] sm:$0xff]
        %v688 = vld [vmem:[#allocation3 + $0xb0] sm:$0xff]
        %v689 = vld [vmem:[#allocation3 + $0xb8] sm:$0xff]
        %v690 = vld [vmem:[#allocation3 + $0xc0] sm:$0xff]
        %v691 = vld [vmem:[#allocation3 + $0xc8] sm:$0xff]
        %v692 = vld [vmem:[#allocation3 + $0xd0] sm:$0xff]
        %v693 = vld [vmem:[#allocation3 + $0xd8] sm:$0xff]
        %v694 = vld [vmem:[#allocation3 + $0xe0] sm:$0xff]
        %v695 = vld [vmem:[#allocation3 + $0xe8] sm:$0xff]
        %v696 = vld [vmem:[#allocation3 + $0xf0] sm:$0xff]
        %v697 = vld [vmem:[#allocation3 + $0xf8] sm:$0xff]
        %v698 = vld [vmem:[%s2] sm:$0x1]
        %v700 = vlaneseq
        %v701 = vshrl.u32 %v700, 7
        %v702 = vsub.s32 0, %v701
        %v703 = vrot.slane %v698, %v702
        %705 = vmatprep.subr.mxu0 0.0
        %706 = vmatpush1.msra.mxu0 %v681
        %707 = vmatprep.subr.mxu0 0.0
        %708 = vmatpush1.msra.mxu0 %v680
        %709 = vmatprep.subr.mxu0 0.0
        %710 = vmatpush1.msra.mxu0 %v679
        %711 = vmatprep.subr.mxu0 0.0
        %712 = vmatpush1.msra.mxu0 %v678
        %713 = vmatprep.subr.mxu0 0.0
        %714 = vmatpush1.msra.mxu0 %v677
        %715 = vmatprep.subr.mxu0 0.0
        %716 = vmatpush1.msra.mxu0 %v676
        %717 = vmatprep.subr.mxu0 0.0
        %718 = vmatpush1.msra.mxu0 %v675
        %719 = vmatprep.subr.mxu0 0.0
        %720 = vmatpush1.msra.mxu0 %v674
        %721 = vmatprep.subr.mxu0 0.0
        %722 = vmatpush1.msra.mxu0 %v673
        %723 = vmatprep.subr.mxu0 0.0
        %724 = vmatpush1.msra.mxu0 %v672
        %725 = vmatprep.subr.mxu0 0.0
        %726 = vmatpush1.msra.mxu0 %v671
        %727 = vmatprep.subr.mxu0 0.0
        %728 = vmatpush1.msra.mxu0 %v670
        %729 = vmatprep.subr.mxu0 0.0
        %730 = vmatpush1.msra.mxu0 %v669
        %731 = vmatprep.subr.mxu0 0.0
        %732 = vmatpush1.msra.mxu0 %v668
        %733 = vmatprep.subr.mxu0 0.0
        %734 = vmatpush1.msra.mxu0 %v667
        %735 = vmatprep.subr.mxu0 0.0
        %736 = vmatpush1.msra.mxu0 %v666
        %737 = vmatprep.subr.mxu0 0.0
        %738 = vmatpush2.msra.mxu0 %v697
        %739 = vmatprep.subr.mxu0 0.0
        %740 = vmatpush2.msra.mxu0 %v696
        %741 = vmatprep.subr.mxu0 0.0
        %742 = vmatpush2.msra.mxu0 %v695
        %743 = vmatprep.subr.mxu0 0.0
        %744 = vmatpush2.msra.mxu0 %v694
        %745 = vmatprep.subr.mxu0 0.0
        %746 = vmatpush2.msra.mxu0 %v693
        %747 = vmatprep.subr.mxu0 0.0
        %748 = vmatpush2.msra.mxu0 %v692
        %749 = vmatprep.subr.mxu0 0.0
        %750 = vmatpush2.msra.mxu0 %v691
        %751 = vmatprep.subr.mxu0 0.0
        %752 = vmatpush2.msra.mxu0 %v690
        %753 = vmatprep.subr.mxu0 0.0
        %754 = vmatpush2.msra.mxu0 %v689
        %755 = vmatprep.subr.mxu0 0.0
        %756 = vmatpush2.msra.mxu0 %v688
        %757 = vmatprep.subr.mxu0 0.0
        %758 = vmatpush2.msra.mxu0 %v687
        %759 = vmatprep.subr.mxu0 0.0
        %760 = vmatpush2.msra.mxu0 %v686
        %761 = vmatprep.subr.mxu0 0.0
        %762 = vmatpush2.msra.mxu0 %v685
        %763 = vmatprep.subr.mxu0 0.0
        %764 = vmatpush2.msra.mxu0 %v684
        %765 = vmatprep.subr.mxu0 0.0
        %766 = vmatpush2.msra.mxu0 %v683
        %767 = vmatprep.subr.mxu0 0.0
        %768 = vmatpush2.msra.mxu0 %v682
        %769 = vmatprep.mubr.f32.mxu0 %v665
        %770 = vmatmul.mubr.f32.gmra.mxu0 %v664
        %v771 = vpop.f32.mrf.mxu0
        %v772 = vadd.f32 %v703, %v771
        %v773 = vpop.f32.mrf.mxu0
        %774 = vdwg.mxu0
        %v775 = vmax.f32 %v772, 0.0
        %v776 = vld [vmem:[#allocation5] sm:$0xff]
        %v777 = vld [vmem:[#allocation5 + $0x8] sm:$0xff]
        %v778 = vld [vmem:[#allocation5 + $0x10] sm:$0xff]
        %v779 = vld [vmem:[#allocation5 + $0x18] sm:$0xff]
        %v780 = vld [vmem:[#allocation5 + $0x20] sm:$0xff]
        %v781 = vld [vmem:[#allocation5 + $0x28] sm:$0xff]
        %v782 = vld [vmem:[#allocation5 + $0x30] sm:$0xff]
        %v783 = vld [vmem:[#allocation5 + $0x38] sm:$0xff]
        %v784 = vld [vmem:[#allocation5 + $0x40] sm:$0xff]
        %v785 = vld [vmem:[#allocation5 + $0x48] sm:$0xff]
        %v786 = vld [vmem:[#allocation5 + $0x50] sm:$0xff]
        %v787 = vld [vmem:[#allocation5 + $0x58] sm:$0xff]
        %v788 = vld [vmem:[#allocation5 + $0x60] sm:$0xff]
        %v789 = vld [vmem:[#allocation5 + $0x68] sm:$0xff]
        %v790 = vld [vmem:[#allocation5 + $0x70] sm:$0xff]
        %v791 = vld [vmem:[#allocation5 + $0x78] sm:$0xff]
        %v792 = vld [vmem:[%s4] sm:$0x1]
        %v794 = vlaneseq
        %v795 = vshrl.u32 %v794, 7
        %v796 = vsub.s32 0, %v795
        %v797 = vrot.slane %v792, %v796
        %799 = vmatprep.subr.mxu0 0.0
        %800 = vmatpush1.msra.mxu0 %v791
        %801 = vmatprep.subr.mxu0 0.0
        %802 = vmatpush1.msra.mxu0 %v790
        %803 = vmatprep.subr.mxu0 0.0
        %804 = vmatpush1.msra.mxu0 %v789
        %805 = vmatprep.subr.mxu0 0.0
        %806 = vmatpush1.msra.mxu0 %v788
        %807 = vmatprep.subr.mxu0 0.0
        %808 = vmatpush1.msra.mxu0 %v787
        %809 = vmatprep.subr.mxu0 0.0
        %810 = vmatpush1.msra.mxu0 %v786
        %811 = vmatprep.subr.mxu0 0.0
        %812 = vmatpush1.msra.mxu0 %v785
        %813 = vmatprep.subr.mxu0 0.0
        %814 = vmatpush1.msra.mxu0 %v784
        %815 = vmatprep.subr.mxu0 0.0
        %816 = vmatpush1.msra.mxu0 %v783
        %817 = vmatprep.subr.mxu0 0.0
        %818 = vmatpush1.msra.mxu0 %v782
        %819 = vmatprep.subr.mxu0 0.0
        %820 = vmatpush1.msra.mxu0 %v781
        %821 = vmatprep.subr.mxu0 0.0
        %822 = vmatpush1.msra.mxu0 %v780
        %823 = vmatprep.subr.mxu0 0.0
        %824 = vmatpush1.msra.mxu0 %v779
        %825 = vmatprep.subr.mxu0 0.0
        %826 = vmatpush1.msra.mxu0 %v778
        %827 = vmatprep.subr.mxu0 0.0
        %828 = vmatpush1.msra.mxu0 %v777
        %829 = vmatprep.subr.mxu0 0.0
        %830 = vmatpush1.msra.mxu0 %v776
        %831 = vmatprep.subr.mxu0 0.0
        %832 = vmatpush2.msra.mxu0 0.0
        %833 = vmatprep.subr.mxu0 0.0
        %834 = vmatpush2.msra.mxu0 0.0
        %835 = vmatprep.subr.mxu0 0.0
        %836 = vmatpush2.msra.mxu0 0.0
        %837 = vmatprep.subr.mxu0 0.0
        %838 = vmatpush2.msra.mxu0 0.0
        %839 = vmatprep.subr.mxu0 0.0
        %840 = vmatpush2.msra.mxu0 0.0
        %841 = vmatprep.subr.mxu0 0.0
        %842 = vmatpush2.msra.mxu0 0.0
        %843 = vmatprep.subr.mxu0 0.0
        %844 = vmatpush2.msra.mxu0 0.0
        %845 = vmatprep.subr.mxu0 0.0
        %846 = vmatpush2.msra.mxu0 0.0
        %847 = vmatprep.subr.mxu0 0.0
        %848 = vmatpush2.msra.mxu0 0.0
        %849 = vmatprep.subr.mxu0 0.0
        %850 = vmatpush2.msra.mxu0 0.0
        %851 = vmatprep.subr.mxu0 0.0
        %852 = vmatpush2.msra.mxu0 0.0
        %853 = vmatprep.subr.mxu0 0.0
        %854 = vmatpush2.msra.mxu0 0.0
        %855 = vmatprep.subr.mxu0 0.0
        %856 = vmatpush2.msra.mxu0 0.0
        %857 = vmatprep.subr.mxu0 0.0
        %858 = vmatpush2.msra.mxu0 0.0
        %859 = vmatprep.subr.mxu0 0.0
        %860 = vmatpush2.msra.mxu0 0.0
        %861 = vmatprep.subr.mxu0 0.0
        %862 = vmatpush2.msra.mxu0 0.0
        %863 = vmatprep.mubr.f32.mxu0 0.0
        %864 = vmatmul.mubr.f32.gmra.mxu0 %v775
        %v865 = vpop.f32.mrf.mxu0
        %v866 = vadd.f32 %v797, %v865
        %v867 = vpop.f32.mrf.mxu0
        %868 = vdwg.mxu0
        %v869 = vld [vmem:[%s5] sm:$0xff]
        %v870 = vadd.f32 %v866, %v869
        %v871 = vld [vmem:[#allocation7] sm:$0xff]
        %v872 = vld [vmem:[#allocation7 + $0x8] sm:$0xff]
        %v873 = vld [vmem:[#allocation7 + $0x10] sm:$0xff]
        %v874 = vld [vmem:[#allocation7 + $0x18] sm:$0xff]
        %v875 = vld [vmem:[#allocation7 + $0x20] sm:$0xff]
        %v876 = vld [vmem:[#allocation7 + $0x28] sm:$0xff]
        %v877 = vld [vmem:[#allocation7 + $0x30] sm:$0xff]
        %v878 = vld [vmem:[#allocation7 + $0x38] sm:$0xff]
        %v879 = vld [vmem:[#allocation7 + $0x40] sm:$0xff]
        %v880 = vld [vmem:[#allocation7 + $0x48] sm:$0xff]
        %v881 = vld [vmem:[#allocation7 + $0x50] sm:$0xff]
        %v882 = vld [vmem:[#allocation7 + $0x58] sm:$0xff]
        %v883 = vld [vmem:[#allocation7 + $0x60] sm:$0xff]
        %v884 = vld [vmem:[#allocation7 + $0x68] sm:$0xff]
        %v885 = vld [vmem:[#allocation7 + $0x70] sm:$0xff]
        %v886 = vld [vmem:[#allocation7 + $0x78] sm:$0xff]
        %v887 = vld [vmem:[#allocation7 + $0x80] sm:$0xff]
        %v888 = vld [vmem:[#allocation7 + $0x88] sm:$0xff]
        %v889 = vld [vmem:[#allocation7 + $0x90] sm:$0xff]
        %v890 = vld [vmem:[#allocation7 + $0x98] sm:$0xff]
        %v891 = vld [vmem:[#allocation7 + $0xa0] sm:$0xff]
        %v892 = vld [vmem:[#allocation7 + $0xa8] sm:$0xff]
        %v893 = vld [vmem:[#allocation7 + $0xb0] sm:$0xff]
        %v894 = vld [vmem:[#allocation7 + $0xb8] sm:$0xff]
        %v895 = vld [vmem:[#allocation7 + $0xc0] sm:$0xff]
        %v896 = vld [vmem:[#allocation7 + $0xc8] sm:$0xff]
        %v897 = vld [vmem:[#allocation7 + $0xd0] sm:$0xff]
        %v898 = vld [vmem:[#allocation7 + $0xd8] sm:$0xff]
        %v899 = vld [vmem:[#allocation7 + $0xe0] sm:$0xff]
        %v900 = vld [vmem:[#allocation7 + $0xe8] sm:$0xff]
        %v901 = vld [vmem:[#allocation7 + $0xf0] sm:$0xff]
        %v902 = vld [vmem:[#allocation7 + $0xf8] sm:$0xff]
        %v903 = vld [vmem:[#allocation7 + $0x100] sm:$0xff]
        %v904 = vld [vmem:[#allocation7 + $0x108] sm:$0xff]
        %v905 = vld [vmem:[#allocation7 + $0x110] sm:$0xff]
        %v906 = vld [vmem:[#allocation7 + $0x118] sm:$0xff]
        %v907 = vld [vmem:[#allocation7 + $0x120] sm:$0xff]
        %v908 = vld [vmem:[#allocation7 + $0x128] sm:$0xff]
        %v909 = vld [vmem:[#allocation7 + $0x130] sm:$0xff]
        %v910 = vld [vmem:[#allocation7 + $0x138] sm:$0xff]
        %v911 = vld [vmem:[#allocation7 + $0x140] sm:$0xff]
        %v912 = vld [vmem:[#allocation7 + $0x148] sm:$0xff]
        %v913 = vld [vmem:[#allocation7 + $0x150] sm:$0xff]
        %v914 = vld [vmem:[#allocation7 + $0x158] sm:$0xff]
        %v915 = vld [vmem:[#allocation7 + $0x160] sm:$0xff]
        %v916 = vld [vmem:[#allocation7 + $0x168] sm:$0xff]
        %v917 = vld [vmem:[#allocation7 + $0x170] sm:$0xff]
        %v918 = vld [vmem:[#allocation7 + $0x178] sm:$0xff]
        %v919 = vld [vmem:[%s7] sm:$0x7]
        %v921 = vlaneseq
        %v922 = vshrl.u32 %v921, 7
        %v923 = vsub.s32 0, %v922
        %v924 = vrot.slane %v919, %v923
        %v925 = vlaneseq
        %v926 = vshrl.u32 %v925, 7
        %v927 = vsub.s32 1, %v926
        %v928 = vrot.slane %v919, %v927
        %v929 = vlaneseq
        %v930 = vshrl.u32 %v929, 7
        %v931 = vsub.s32 2, %v930
        %v932 = vrot.slane %v919, %v931
        %936 = vmatprep.subr.mxu0 %v917
        %937 = vmatpush1.msra.mxu0 %v916
        %938 = vmatprep.subr.mxu0 %v914
        %939 = vmatpush1.msra.mxu0 %v913
        %940 = vmatprep.subr.mxu0 %v911
        %941 = vmatpush1.msra.mxu0 %v910
        %942 = vmatprep.subr.mxu0 %v908
        %943 = vmatpush1.msra.mxu0 %v907
        %944 = vmatprep.subr.mxu0 %v905
        %945 = vmatpush1.msra.mxu0 %v904
        %946 = vmatprep.subr.mxu0 %v902
        %947 = vmatpush1.msra.mxu0 %v901
        %948 = vmatprep.subr.mxu0 %v899
        %949 = vmatpush1.msra.mxu0 %v898
        %950 = vmatprep.subr.mxu0 %v896
        %951 = vmatpush1.msra.mxu0 %v895
        %952 = vmatprep.subr.mxu0 %v893
        %953 = vmatpush1.msra.mxu0 %v892
        %954 = vmatprep.subr.mxu0 %v890
        %955 = vmatpush1.msra.mxu0 %v889
        %956 = vmatprep.subr.mxu0 %v887
        %957 = vmatpush1.msra.mxu0 %v886
        %958 = vmatprep.subr.mxu0 %v884
        %959 = vmatpush1.msra.mxu0 %v883
        %960 = vmatprep.subr.mxu0 %v881
        %961 = vmatpush1.msra.mxu0 %v880
        %962 = vmatprep.subr.mxu0 %v878
        %963 = vmatpush1.msra.mxu0 %v877
        %964 = vmatprep.subr.mxu0 %v875
        %965 = vmatpush1.msra.mxu0 %v874
        %966 = vmatprep.subr.mxu0 %v872
        %967 = vmatpush1.msra.mxu0 %v871
        %968 = vmatprep.subr.mxu0 0.0
        %969 = vmatpush2.msra.mxu0 0.0
        %970 = vmatprep.subr.mxu0 0.0
        %971 = vmatpush2.msra.mxu0 0.0
        %972 = vmatprep.subr.mxu0 0.0
        %973 = vmatpush2.msra.mxu0 0.0
        %974 = vmatprep.subr.mxu0 0.0
        %975 = vmatpush2.msra.mxu0 0.0
        %976 = vmatprep.subr.mxu0 0.0
        %977 = vmatpush2.msra.mxu0 0.0
        %978 = vmatprep.subr.mxu0 0.0
        %979 = vmatpush2.msra.mxu0 0.0
        %980 = vmatprep.subr.mxu0 0.0
        %981 = vmatpush2.msra.mxu0 0.0
        %982 = vmatprep.subr.mxu0 0.0
        %983 = vmatpush2.msra.mxu0 0.0
        %984 = vmatprep.subr.mxu0 0.0
        %985 = vmatpush2.msra.mxu0 0.0
        %986 = vmatprep.subr.mxu0 0.0
        %987 = vmatpush2.msra.mxu0 0.0
        %988 = vmatprep.subr.mxu0 0.0
        %989 = vmatpush2.msra.mxu0 0.0
        %990 = vmatprep.subr.mxu0 0.0
        %991 = vmatpush2.msra.mxu0 0.0
        %992 = vmatprep.subr.mxu0 0.0
        %993 = vmatpush2.msra.mxu0 0.0
        %994 = vmatprep.subr.mxu0 0.0
        %995 = vmatpush2.msra.mxu0 0.0
        %996 = vmatprep.subr.mxu0 0.0
        %997 = vmatpush2.msra.mxu0 0.0
        %998 = vmatprep.subr.mxu0 0.0
        %999 = vmatpush2.msra.mxu0 0.0
        %1000 = vmatprep.mubr.f32.mxu0 0.0
        %1001 = vmatmul.mubr.f32.gmra.mxu0 %v870
        %v1002 = vpop.f32.mrf.mxu0
        %v1003 = vadd.f32 %v924, %v1002
        %v1004 = vpop.f32.mrf.mxu0
        %v1005 = vadd.f32 %v928, %v1004
        %1006 = vdwg.mxu0
        %1007 = vmatprep.subr.mxu0 0.0
        %1008 = vmatpush1.msra.mxu0 %v918
        %1009 = vmatprep.subr.mxu0 0.0
        %1010 = vmatpush1.msra.mxu0 %v915
        %1011 = vmatprep.subr.mxu0 0.0
        %1012 = vmatpush1.msra.mxu0 %v912
        %1013 = vmatprep.subr.mxu0 0.0
        %1014 = vmatpush1.msra.mxu0 %v909
        %1015 = vmatprep.subr.mxu0 0.0
        %1016 = vmatpush1.msra.mxu0 %v906
        %1017 = vmatprep.subr.mxu0 0.0
        %1018 = vmatpush1.msra.mxu0 %v903
        %1019 = vmatprep.subr.mxu0 0.0
        %1020 = vmatpush1.msra.mxu0 %v900
        %1021 = vmatprep.subr.mxu0 0.0
        %1022 = vmatpush1.msra.mxu0 %v897
        %1023 = vmatprep.subr.mxu0 0.0
        %1024 = vmatpush1.msra.mxu0 %v894
        %1025 = vmatprep.subr.mxu0 0.0
        %1026 = vmatpush1.msra.mxu0 %v891
        %1027 = vmatprep.subr.mxu0 0.0
        %1028 = vmatpush1.msra.mxu0 %v888
        %1029 = vmatprep.subr.mxu0 0.0
        %1030 = vmatpush1.msra.mxu0 %v885
        %1031 = vmatprep.subr.mxu0 0.0
        %1032 = vmatpush1.msra.mxu0 %v882
        %1033 = vmatprep.subr.mxu0 0.0
        %1034 = vmatpush1.msra.mxu0 %v879
        %1035 = vmatprep.subr.mxu0 0.0
        %1036 = vmatpush1.msra.mxu0 %v876
        %1037 = vmatprep.subr.mxu0 0.0
        %1038 = vmatpush1.msra.mxu0 %v873
        %1039 = vmatprep.subr.mxu0 0.0
        %1040 = vmatpush2.msra.mxu0 0.0
        %1041 = vmatprep.subr.mxu0 0.0
        %1042 = vmatpush2.msra.mxu0 0.0
        %1043 = vmatprep.subr.mxu0 0.0
        %1044 = vmatpush2.msra.mxu0 0.0
        %1045 = vmatprep.subr.mxu0 0.0
        %1046 = vmatpush2.msra.mxu0 0.0
        %1047 = vmatprep.subr.mxu0 0.0
        %1048 = vmatpush2.msra.mxu0 0.0
        %1049 = vmatprep.subr.mxu0 0.0
        %1050 = vmatpush2.msra.mxu0 0.0
        %1051 = vmatprep.subr.mxu0 0.0
        %1052 = vmatpush2.msra.mxu0 0.0
        %1053 = vmatprep.subr.mxu0 0.0
        %1054 = vmatpush2.msra.mxu0 0.0
        %1055 = vmatprep.subr.mxu0 0.0
        %1056 = vmatpush2.msra.mxu0 0.0
        %1057 = vmatprep.subr.mxu0 0.0
        %1058 = vmatpush2.msra.mxu0 0.0
        %1059 = vmatprep.subr.mxu0 0.0
        %1060 = vmatpush2.msra.mxu0 0.0
        %1061 = vmatprep.subr.mxu0 0.0
        %1062 = vmatpush2.msra.mxu0 0.0
        %1063 = vmatprep.subr.mxu0 0.0
        %1064 = vmatpush2.msra.mxu0 0.0
        %1065 = vmatprep.subr.mxu0 0.0
        %1066 = vmatpush2.msra.mxu0 0.0
        %1067 = vmatprep.subr.mxu0 0.0
        %1068 = vmatpush2.msra.mxu0 0.0
        %1069 = vmatprep.subr.mxu0 0.0
        %1070 = vmatpush2.msra.mxu0 0.0
        %1071 = vmatprep.mubr.f32.mxu0 0.0
        %1072 = vmatmul.mubr.f32.gmra.mxu0 %v870
        %v1073 = vpop.f32.mrf.mxu0
        %v1074 = vadd.f32 %v932, %v1073
        %v1075 = vpop.f32.mrf.mxu0
        %1076 = vdwg.mxu0
        %vm1077 = vcmask 261120
        %v1079 = vsel %vm1077, %v1003, 0
        %v1082 = vsel %vm1077, %v1005, 0
        %1084 = vmatprep.subr.mxu0 0.0
        %1085 = vmatpush1.xpose.msra.mxu0 0.0
        %1086 = vmatprep.subr.mxu0 0.0
        %1087 = vmatpush1.xpose.msra.mxu0 0.0
        %1088 = vmatprep.subr.mxu0 0.0
        %1089 = vmatpush1.xpose.msra.mxu0 0.0
        %1090 = vmatprep.subr.mxu0 0.0
        %1091 = vmatpush1.xpose.msra.mxu0 0.0
        %1092 = vmatprep.subr.mxu0 0.0
        %1093 = vmatpush1.xpose.msra.mxu0 0.0
        %1094 = vmatprep.subr.mxu0 0.0
        %1095 = vmatpush1.xpose.msra.mxu0 0.0
        %1096 = vmatprep.subr.mxu0 0.0
        %1097 = vmatpush1.xpose.msra.mxu0 0.0
        %1098 = vmatprep.subr.mxu0 0.0
        %1099 = vmatpush1.xpose.msra.mxu0 0.0
        %1100 = vmatprep.subr.mxu0 0.0
        %1101 = vmatpush1.xpose.msra.mxu0 0.0
        %1102 = vmatprep.subr.mxu0 0.0
        %1103 = vmatpush1.xpose.msra.mxu0 0.0
        %1104 = vmatprep.subr.mxu0 0.0
        %1105 = vmatpush1.xpose.msra.mxu0 0.0
        %1106 = vmatprep.subr.mxu0 0.0
        %1107 = vmatpush1.xpose.msra.mxu0 0.0
        %1108 = vmatprep.subr.mxu0 0.0
        %1109 = vmatpush1.xpose.msra.mxu0 0.0
        %1110 = vmatprep.subr.mxu0 0.0
        %1111 = vmatpush1.xpose.msra.mxu0 0.0
        %1112 = vmatprep.subr.mxu0 0.0
        %1113 = vmatpush1.xpose.msra.mxu0 0.0
        %1114 = vmatprep.subr.mxu0 0.0
        %1115 = vmatpush1.xpose.msra.mxu0 %v1082
        %1116 = vmatprep.subr.mxu0 0.0
        %1117 = vmatpush2.xpose.msra.mxu0 0.0
        %1118 = vmatprep.subr.mxu0 0.0
        %1119 = vmatpush2.xpose.msra.mxu0 0.0
        %1120 = vmatprep.subr.mxu0 0.0
        %1121 = vmatpush2.xpose.msra.mxu0 0.0
        %1122 = vmatprep.subr.mxu0 0.0
        %1123 = vmatpush2.xpose.msra.mxu0 0.0
        %1124 = vmatprep.subr.mxu0 0.0
        %1125 = vmatpush2.xpose.msra.mxu0 0.0
        %1126 = vmatprep.subr.mxu0 0.0
        %1127 = vmatpush2.xpose.msra.mxu0 0.0
        %1128 = vmatprep.subr.mxu0 0.0
        %1129 = vmatpush2.xpose.msra.mxu0 0.0
        %1130 = vmatprep.subr.mxu0 0.0
        %1131 = vmatpush2.xpose.msra.mxu0 0.0
        %1132 = vmatprep.subr.mxu0 0.0
        %1133 = vmatpush2.xpose.msra.mxu0 0.0
        %1134 = vmatprep.subr.mxu0 0.0
        %1135 = vmatpush2.xpose.msra.mxu0 0.0
        %1136 = vmatprep.subr.mxu0 0.0
        %1137 = vmatpush2.xpose.msra.mxu0 0.0
        %1138 = vmatprep.subr.mxu0 0.0
        %1139 = vmatpush2.xpose.msra.mxu0 0.0
        %1140 = vmatprep.subr.mxu0 0.0
        %1141 = vmatpush2.xpose.msra.mxu0 0.0
        %1142 = vmatprep.subr.mxu0 0.0
        %1143 = vmatpush2.xpose.msra.mxu0 0.0
        %1144 = vmatprep.subr.mxu0 0.0
        %1145 = vmatpush2.xpose.msra.mxu0 0.0
        %1146 = vmatprep.subr.mxu0 0.0
        %1147 = vmatpush2.xpose.msra.mxu0 0.0
        %1148 = vmatprep.mubr.f32.mxu0 0.0
        %1149 = vmatmul.mubr.f32.gmra.mxu0 %v1079
        %v1150 = vpop.f32.mrf.mxu0
        %v1151 = vadd.f32 0.0, %v1150
        %v1152 = vpop.f32.mrf.mxu0
        %1153 = vdwg.mxu0
        %v1154 = vmul.f32 %v1151, 0.17677669
        %vm1155 = vcmask 64512
        %v1156 = vsel %vm1155, %v1154, -inf
        %1157 = vmax.xlane.f32.xlu0 %v1156
        %v1158 = vpop.xlane.xlu0 %1157
        %v1159 = vsub.f32 %v1154, %v1158
        %v1160 = vmul.f32 %v1159, 1.442695
        %v1161 = vpow.pop %v1160
        %v1162 = vsel %vm1155, %v1161, 0.0
        %1163 = vadd.xlane.f32.xlu0 %v1162
        %v1164 = vpop.xlane.xlu0 %1163
        %v1165 = vrcp.pop %v1164
        %v1166 = vmul.f32 %v1161, %v1165
        %v1168 = vsel %vm1155, %v1166, 0
        %1170 = vmatprep.subr.mxu0 0.0
        %1171 = vmatpush1.msra.mxu0 0.0
        %1172 = vmatprep.subr.mxu0 0.0
        %1173 = vmatpush1.msra.mxu0 0.0
        %1174 = vmatprep.subr.mxu0 0.0
        %1175 = vmatpush1.msra.mxu0 0.0
        %1176 = vmatprep.subr.mxu0 0.0
        %1177 = vmatpush1.msra.mxu0 0.0
        %1178 = vmatprep.subr.mxu0 0.0
        %1179 = vmatpush1.msra.mxu0 0.0
        %1180 = vmatprep.subr.mxu0 0.0
        %1181 = vmatpush1.msra.mxu0 0.0
        %1182 = vmatprep.subr.mxu0 0.0
        %1183 = vmatpush1.msra.mxu0 0.0
        %1184 = vmatprep.subr.mxu0 0.0
        %1185 = vmatpush1.msra.mxu0 0.0
        %1186 = vmatprep.subr.mxu0 0.0
        %1187 = vmatpush1.msra.mxu0 0.0
        %1188 = vmatprep.subr.mxu0 0.0
        %1189 = vmatpush1.msra.mxu0 0.0
        %1190 = vmatprep.subr.mxu0 0.0
        %1191 = vmatpush1.msra.mxu0 0.0
        %1192 = vmatprep.subr.mxu0 0.0
        %1193 = vmatpush1.msra.mxu0 0.0
        %1194 = vmatprep.subr.mxu0 0.0
        %1195 = vmatpush1.msra.mxu0 0.0
        %1196 = vmatprep.subr.mxu0 0.0
        %1197 = vmatpush1.msra.mxu0 0.0
        %1198 = vmatprep.subr.mxu0 0.0
        %1199 = vmatpush1.msra.mxu0 0.0
        %1200 = vmatprep.subr.mxu0 0.0
        %1201 = vmatpush1.msra.mxu0 %v1074
        %1202 = vmatprep.subr.mxu0 0.0
        %1203 = vmatpush2.msra.mxu0 0.0
        %1204 = vmatprep.subr.mxu0 0.0
        %1205 = vmatpush2.msra.mxu0 0.0
        %1206 = vmatprep.subr.mxu0 0.0
        %1207 = vmatpush2.msra.mxu0 0.0
        %1208 = vmatprep.subr.mxu0 0.0
        %1209 = vmatpush2.msra.mxu0 0.0
        %1210 = vmatprep.subr.mxu0 0.0
        %1211 = vmatpush2.msra.mxu0 0.0
        %1212 = vmatprep.subr.mxu0 0.0
        %1213 = vmatpush2.msra.mxu0 0.0
        %1214 = vmatprep.subr.mxu0 0.0
        %1215 = vmatpush2.msra.mxu0 0.0
        %1216 = vmatprep.subr.mxu0 0.0
        %1217 = vmatpush2.msra.mxu0 0.0
        %1218 = vmatprep.subr.mxu0 0.0
        %1219 = vmatpush2.msra.mxu0 0.0
        %1220 = vmatprep.subr.mxu0 0.0
        %1221 = vmatpush2.msra.mxu0 0.0
        %1222 = vmatprep.subr.mxu0 0.0
        %1223 = vmatpush2.msra.mxu0 0.0
        %1224 = vmatprep.subr.mxu0 0.0
        %1225 = vmatpush2.msra.mxu0 0.0
        %1226 = vmatprep.subr.mxu0 0.0
        %1227 = vmatpush2.msra.mxu0 0.0
        %1228 = vmatprep.subr.mxu0 0.0
        %1229 = vmatpush2.msra.mxu0 0.0
        %1230 = vmatprep.subr.mxu0 0.0
        %1231 = vmatpush2.msra.mxu0 0.0
        %1232 = vmatprep.subr.mxu0 0.0
        %1233 = vmatpush2.msra.mxu0 0.0
        %1234 = vmatprep.mubr.f32.mxu0 0.0
        %1235 = vmatmul.mubr.f32.gmra.mxu0 %v1168
        %v1236 = vpop.f32.mrf.mxu0
        %v1237 = vadd.f32 0.0, %v1236
        %v1238 = vpop.f32.mrf.mxu0
        %1239 = vdwg.mxu0
        %1240 = vst.msk [vmem:[#allocation2] sm:$0xff] %vm1077, %v1237
        %1241 = vrot.lane.b32.xlu0 %v1003, 96
        %v1242 = vpop.permute.xlu0 %1241
        %1243 = vrot.lane.b32.xlu0 %v1005, 96
        %v1244 = vpop.permute.xlu0 %1243
        %v1245 = vsel %vm1077, %v1242, 0
        %v1247 = vsel %vm1077, %v1244, 0
        %1249 = vmatprep.subr.mxu0 0.0
        %1250 = vmatpush1.xpose.msra.mxu0 0.0
        %1251 = vmatprep.subr.mxu0 0.0
        %1252 = vmatpush1.xpose.msra.mxu0 0.0
        %1253 = vmatprep.subr.mxu0 0.0
        %1254 = vmatpush1.xpose.msra.mxu0 0.0
        %1255 = vmatprep.subr.mxu0 0.0
        %1256 = vmatpush1.xpose.msra.mxu0 0.0
        %1257 = vmatprep.subr.mxu0 0.0
        %1258 = vmatpush1.xpose.msra.mxu0 0.0
        %1259 = vmatprep.subr.mxu0 0.0
        %1260 = vmatpush1.xpose.msra.mxu0 0.0
        %1261 = vmatprep.subr.mxu0 0.0
        %1262 = vmatpush1.xpose.msra.mxu0 0.0
        %1263 = vmatprep.subr.mxu0 0.0
        %1264 = vmatpush1.xpose.msra.mxu0 0.0
        %1265 = vmatprep.subr.mxu0 0.0
        %1266 = vmatpush1.xpose.msra.mxu0 0.0
        %1267 = vmatprep.subr.mxu0 0.0
        %1268 = vmatpush1.xpose.msra.mxu0 0.0
        %1269 = vmatprep.subr.mxu0 0.0
        %1270 = vmatpush1.xpose.msra.mxu0 0.0
        %1271 = vmatprep.subr.mxu0 0.0
        %1272 = vmatpush1.xpose.msra.mxu0 0.0
        %1273 = vmatprep.subr.mxu0 0.0
        %1274 = vmatpush1.xpose.msra.mxu0 0.0
        %1275 = vmatprep.subr.mxu0 0.0
        %1276 = vmatpush1.xpose.msra.mxu0 0.0
        %1277 = vmatprep.subr.mxu0 0.0
        %1278 = vmatpush1.xpose.msra.mxu0 0.0
        %1279 = vmatprep.subr.mxu0 0.0
        %1280 = vmatpush1.xpose.msra.mxu0 %v1247
        %1281 = vmatprep.subr.mxu0 0.0
        %1282 = vmatpush2.xpose.msra.mxu0 0.0
        %1283 = vmatprep.subr.mxu0 0.0
        %1284 = vmatpush2.xpose.msra.mxu0 0.0
        %1285 = vmatprep.subr.mxu0 0.0
        %1286 = vmatpush2.xpose.msra.mxu0 0.0
        %1287 = vmatprep.subr.mxu0 0.0
        %1288 = vmatpush2.xpose.msra.mxu0 0.0
        %1289 = vmatprep.subr.mxu0 0.0
        %1290 = vmatpush2.xpose.msra.mxu0 0.0
        %1291 = vmatprep.subr.mxu0 0.0
        %1292 = vmatpush2.xpose.msra.mxu0 0.0
        %1293 = vmatprep.subr.mxu0 0.0
        %1294 = vmatpush2.xpose.msra.mxu0 0.0
        %1295 = vmatprep.subr.mxu0 0.0
        %1296 = vmatpush2.xpose.msra.mxu0 0.0
        %1297 = vmatprep.subr.mxu0 0.0
        %1298 = vmatpush2.xpose.msra.mxu0 0.0
        %1299 = vmatprep.subr.mxu0 0.0
        %1300 = vmatpush2.xpose.msra.mxu0 0.0
        %1301 = vmatprep.subr.mxu0 0.0
        %1302 = vmatpush2.xpose.msra.mxu0 0.0
        %1303 = vmatprep.subr.mxu0 0.0
        %1304 = vmatpush2.xpose.msra.mxu0 0.0
        %1305 = vmatprep.subr.mxu0 0.0
        %1306 = vmatpush2.xpose.msra.mxu0 0.0
        %1307 = vmatprep.subr.mxu0 0.0
        %1308 = vmatpush2.xpose.msra.mxu0 0.0
        %1309 = vmatprep.subr.mxu0 0.0
        %1310 = vmatpush2.xpose.msra.mxu0 0.0
        %1311 = vmatprep.subr.mxu0 0.0
        %1312 = vmatpush2.xpose.msra.mxu0 0.0
        %1313 = vmatprep.mubr.f32.mxu0 0.0
        %1314 = vmatmul.mubr.f32.gmra.mxu0 %v1245
        %v1315 = vpop.f32.mrf.mxu0
        %v1316 = vadd.f32 0.0, %v1315
        %v1317 = vpop.f32.mrf.mxu0
        %1318 = vdwg.mxu0
        %v1319 = vmul.f32 %v1316, 0.17677669
        %v1320 = vsel %vm1155, %v1319, -inf
        %1321 = vmax.xlane.f32.xlu0 %v1320
        %v1322 = vpop.xlane.xlu0 %1321
        %v1323 = vsub.f32 %v1319, %v1322
        %v1324 = vmul.f32 %v1323, 1.442695
        %v1325 = vpow.pop %v1324
        %v1326 = vsel %vm1155, %v1325, 0.0
        %1327 = vadd.xlane.f32.xlu0 %v1326
        %v1328 = vpop.xlane.xlu0 %1327
        %v1329 = vrcp.pop %v1328
        %v1330 = vmul.f32 %v1325, %v1329
        %1332 = vrot.lane.b32.xlu0 %v1074, 96
        %v1333 = vpop.permute.xlu0 %1332
        %v1336 = vsel %vm1155, %v1330, 0
        %1338 = vmatprep.subr.mxu0 0.0
        %1339 = vmatpush1.msra.mxu0 0.0
        %1340 = vmatprep.subr.mxu0 0.0
        %1341 = vmatpush1.msra.mxu0 0.0
        %1342 = vmatprep.subr.mxu0 0.0
        %1343 = vmatpush1.msra.mxu0 0.0
        %1344 = vmatprep.subr.mxu0 0.0
        %1345 = vmatpush1.msra.mxu0 0.0
        %1346 = vmatprep.subr.mxu0 0.0
        %1347 = vmatpush1.msra.mxu0 0.0
        %1348 = vmatprep.subr.mxu0 0.0
        %1349 = vmatpush1.msra.mxu0 0.0
        %1350 = vmatprep.subr.mxu0 0.0
        %1351 = vmatpush1.msra.mxu0 0.0
        %1352 = vmatprep.subr.mxu0 0.0
        %1353 = vmatpush1.msra.mxu0 0.0
        %1354 = vmatprep.subr.mxu0 0.0
        %1355 = vmatpush1.msra.mxu0 0.0
        %1356 = vmatprep.subr.mxu0 0.0
        %1357 = vmatpush1.msra.mxu0 0.0
        %1358 = vmatprep.subr.mxu0 0.0
        %1359 = vmatpush1.msra.mxu0 0.0
        %1360 = vmatprep.subr.mxu0 0.0
        %1361 = vmatpush1.msra.mxu0 0.0
        %1362 = vmatprep.subr.mxu0 0.0
        %1363 = vmatpush1.msra.mxu0 0.0
        %1364 = vmatprep.subr.mxu0 0.0
        %1365 = vmatpush1.msra.mxu0 0.0
        %1366 = vmatprep.subr.mxu0 0.0
        %1367 = vmatpush1.msra.mxu0 0.0
        %1368 = vmatprep.subr.mxu0 0.0
        %1369 = vmatpush1.msra.mxu0 %v1333
        %1370 = vmatprep.subr.mxu0 0.0
        %1371 = vmatpush2.msra.mxu0 0.0
        %1372 = vmatprep.subr.mxu0 0.0
        %1373 = vmatpush2.msra.mxu0 0.0
        %1374 = vmatprep.subr.mxu0 0.0
        %1375 = vmatpush2.msra.mxu0 0.0
        %1376 = vmatprep.subr.mxu0 0.0
        %1377 = vmatpush2.msra.mxu0 0.0
        %1378 = vmatprep.subr.mxu0 0.0
        %1379 = vmatpush2.msra.mxu0 0.0
        %1380 = vmatprep.subr.mxu0 0.0
        %1381 = vmatpush2.msra.mxu0 0.0
        %1382 = vmatprep.subr.mxu0 0.0
        %1383 = vmatpush2.msra.mxu0 0.0
        %1384 = vmatprep.subr.mxu0 0.0
        %1385 = vmatpush2.msra.mxu0 0.0
        %1386 = vmatprep.subr.mxu0 0.0
        %1387 = vmatpush2.msra.mxu0 0.0
        %1388 = vmatprep.subr.mxu0 0.0
        %1389 = vmatpush2.msra.mxu0 0.0
        %1390 = vmatprep.subr.mxu0 0.0
        %1391 = vmatpush2.msra.mxu0 0.0
        %1392 = vmatprep.subr.mxu0 0.0
        %1393 = vmatpush2.msra.mxu0 0.0
        %1394 = vmatprep.subr.mxu0 0.0
        %1395 = vmatpush2.msra.mxu0 0.0
        %1396 = vmatprep.subr.mxu0 0.0
        %1397 = vmatpush2.msra.mxu0 0.0
        %1398 = vmatprep.subr.mxu0 0.0
        %1399 = vmatpush2.msra.mxu0 0.0
        %1400 = vmatprep.subr.mxu0 0.0
        %1401 = vmatpush2.msra.mxu0 0.0
        %1402 = vmatprep.mubr.f32.mxu0 0.0
        %1403 = vmatmul.mubr.f32.gmra.mxu0 %v1336
        %v1404 = vpop.f32.mrf.mxu0
        %v1405 = vadd.f32 0.0, %v1404
        %v1406 = vpop.f32.mrf.mxu0
        %1407 = vdwg.mxu0
        %1409 = vrot.lane.b32.xlu0 %v1405, 32
        %v1410 = vpop.permute.xlu0 %1409
        %vm1412 = vcmask 523520
        %1413 = vst.msk [vmem:[#allocation2] sm:$0xff] %vm1412, %v1410
        %1414 = vrot.lane.b32.xlu0 %v1003, 64
        %v1415 = vpop.permute.xlu0 %1414
        %1416 = vrot.lane.b32.xlu0 %v1005, 64
        %v1417 = vpop.permute.xlu0 %1416
        %v1418 = vsel %vm1077, %v1415, 0
        %v1420 = vsel %vm1077, %v1417, 0
        %1422 = vmatprep.subr.mxu0 0.0
        %1423 = vmatpush1.xpose.msra.mxu0 0.0
        %1424 = vmatprep.subr.mxu0 0.0
        %1425 = vmatpush1.xpose.msra.mxu0 0.0
        %1426 = vmatprep.subr.mxu0 0.0
        %1427 = vmatpush1.xpose.msra.mxu0 0.0
        %1428 = vmatprep.subr.mxu0 0.0
        %1429 = vmatpush1.xpose.msra.mxu0 0.0
        %1430 = vmatprep.subr.mxu0 0.0
        %1431 = vmatpush1.xpose.msra.mxu0 0.0
        %1432 = vmatprep.subr.mxu0 0.0
        %1433 = vmatpush1.xpose.msra.mxu0 0.0
        %1434 = vmatprep.subr.mxu0 0.0
        %1435 = vmatpush1.xpose.msra.mxu0 0.0
        %1436 = vmatprep.subr.mxu0 0.0
        %1437 = vmatpush1.xpose.msra.mxu0 0.0
        %1438 = vmatprep.subr.mxu0 0.0
        %1439 = vmatpush1.xpose.msra.mxu0 0.0
        %1440 = vmatprep.subr.mxu0 0.0
        %1441 = vmatpush1.xpose.msra.mxu0 0.0
        %1442 = vmatprep.subr.mxu0 0.0
        %1443 = vmatpush1.xpose.msra.mxu0 0.0
        %1444 = vmatprep.subr.mxu0 0.0
        %1445 = vmatpush1.xpose.msra.mxu0 0.0
        %1446 = vmatprep.subr.mxu0 0.0
        %1447 = vmatpush1.xpose.msra.mxu0 0.0
        %1448 = vmatprep.subr.mxu0 0.0
        %1449 = vmatpush1.xpose.msra.mxu0 0.0
        %1450 = vmatprep.subr.mxu0 0.0
        %1451 = vmatpush1.xpose.msra.mxu0 0.0
        %1452 = vmatprep.subr.mxu0 0.0
        %1453 = vmatpush1.xpose.msra.mxu0 %v1420
        %1454 = vmatprep.subr.mxu0 0.0
        %1455 = vmatpush2.xpose.msra.mxu0 0.0
        %1456 = vmatprep.subr.mxu0 0.0
        %1457 = vmatpush2.xpose.msra.mxu0 0.0
        %1458 = vmatprep.subr.mxu0 0.0
        %1459 = vmatpush2.xpose.msra.mxu0 0.0
        %1460 = vmatprep.subr.mxu0 0.0
        %1461 = vmatpush2.xpose.msra.mxu0 0.0
        %1462 = vmatprep.subr.mxu0 0.0
        %1463 = vmatpush2.xpose.msra.mxu0 0.0
        %1464 = vmatprep.subr.mxu0 0.0
        %1465 = vmatpush2.xpose.msra.mxu0 0.0
        %1466 = vmatprep.subr.mxu0 0.0
        %1467 = vmatpush2.xpose.msra.mxu0 0.0
        %1468 = vmatprep.subr.mxu0 0.0
        %1469 = vmatpush2.xpose.msra.mxu0 0.0
        %1470 = vmatprep.subr.mxu0 0.0
        %1471 = vmatpush2.xpose.msra.mxu0 0.0
        %1472 = vmatprep.subr.mxu0 0.0
        %1473 = vmatpush2.xpose.msra.mxu0 0.0
        %1474 = vmatprep.subr.mxu0 0.0
        %1475 = vmatpush2.xpose.msra.mxu0 0.0
        %1476 = vmatprep.subr.mxu0 0.0
        %1477 = vmatpush2.xpose.msra.mxu0 0.0
        %1478 = vmatprep.subr.mxu0 0.0
        %1479 = vmatpush2.xpose.msra.mxu0 0.0
        %1480 = vmatprep.subr.mxu0 0.0
        %1481 = vmatpush2.xpose.msra.mxu0 0.0
        %1482 = vmatprep.subr.mxu0 0.0
        %1483 = vmatpush2.xpose.msra.mxu0 0.0
        %1484 = vmatprep.subr.mxu0 0.0
        %1485 = vmatpush2.xpose.msra.mxu0 0.0
        %1486 = vmatprep.mubr.f32.mxu0 0.0
        %1487 = vmatmul.mubr.f32.gmra.mxu0 %v1418
        %v1488 = vpop.f32.mrf.mxu0
        %v1489 = vadd.f32 0.0, %v1488
        %v1490 = vpop.f32.mrf.mxu0
        %1491 = vdwg.mxu0
        %v1492 = vmul.f32 %v1489, 0.17677669
        %v1493 = vsel %vm1155, %v1492, -inf
        %1494 = vmax.xlane.f32.xlu0 %v1493
        %v1495 = vpop.xlane.xlu0 %1494
        %v1496 = vsub.f32 %v1492, %v1495
        %v1497 = vmul.f32 %v1496, 1.442695
        %v1498 = vpow.pop %v1497
        %v1499 = vsel %vm1155, %v1498, 0.0
        %1500 = vadd.xlane.f32.xlu0 %v1499
        %v1501 = vpop.xlane.xlu0 %1500
        %v1502 = vrcp.pop %v1501
        %v1503 = vmul.f32 %v1498, %v1502
        %1504 = vrot.lane.b32.xlu0 %v1074, 64
        %v1505 = vpop.permute.xlu0 %1504
        %v1508 = vsel %vm1155, %v1503, 0
        %1510 = vmatprep.subr.mxu0 0.0
        %1511 = vmatpush1.msra.mxu0 0.0
        %1512 = vmatprep.subr.mxu0 0.0
        %1513 = vmatpush1.msra.mxu0 0.0
        %1514 = vmatprep.subr.mxu0 0.0
        %1515 = vmatpush1.msra.mxu0 0.0
        %1516 = vmatprep.subr.mxu0 0.0
        %1517 = vmatpush1.msra.mxu0 0.0
        %1518 = vmatprep.subr.mxu0 0.0
        %1519 = vmatpush1.msra.mxu0 0.0
        %1520 = vmatprep.subr.mxu0 0.0
        %1521 = vmatpush1.msra.mxu0 0.0
        %1522 = vmatprep.subr.mxu0 0.0
        %1523 = vmatpush1.msra.mxu0 0.0
        %1524 = vmatprep.subr.mxu0 0.0
        %1525 = vmatpush1.msra.mxu0 0.0
        %1526 = vmatprep.subr.mxu0 0.0
        %1527 = vmatpush1.msra.mxu0 0.0
        %1528 = vmatprep.subr.mxu0 0.0
        %1529 = vmatpush1.msra.mxu0 0.0
        %1530 = vmatprep.subr.mxu0 0.0
        %1531 = vmatpush1.msra.mxu0 0.0
        %1532 = vmatprep.subr.mxu0 0.0
        %1533 = vmatpush1.msra.mxu0 0.0
        %1534 = vmatprep.subr.mxu0 0.0
        %1535 = vmatpush1.msra.mxu0 0.0
        %1536 = vmatprep.subr.mxu0 0.0
        %1537 = vmatpush1.msra.mxu0 0.0
        %1538 = vmatprep.subr.mxu0 0.0
        %1539 = vmatpush1.msra.mxu0 0.0
        %1540 = vmatprep.subr.mxu0 0.0
        %1541 = vmatpush1.msra.mxu0 %v1505
        %1542 = vmatprep.subr.mxu0 0.0
        %1543 = vmatpush2.msra.mxu0 0.0
        %1544 = vmatprep.subr.mxu0 0.0
        %1545 = vmatpush2.msra.mxu0 0.0
        %1546 = vmatprep.subr.mxu0 0.0
        %1547 = vmatpush2.msra.mxu0 0.0
        %1548 = vmatprep.subr.mxu0 0.0
        %1549 = vmatpush2.msra.mxu0 0.0
        %1550 = vmatprep.subr.mxu0 0.0
        %1551 = vmatpush2.msra.mxu0 0.0
        %1552 = vmatprep.subr.mxu0 0.0
        %1553 = vmatpush2.msra.mxu0 0.0
        %1554 = vmatprep.subr.mxu0 0.0
        %1555 = vmatpush2.msra.mxu0 0.0
        %1556 = vmatprep.subr.mxu0 0.0
        %1557 = vmatpush2.msra.mxu0 0.0
        %1558 = vmatprep.subr.mxu0 0.0
        %1559 = vmatpush2.msra.mxu0 0.0
        %1560 = vmatprep.subr.mxu0 0.0
        %1561 = vmatpush2.msra.mxu0 0.0
        %1562 = vmatprep.subr.mxu0 0.0
        %1563 = vmatpush2.msra.mxu0 0.0
        %1564 = vmatprep.subr.mxu0 0.0
        %1565 = vmatpush2.msra.mxu0 0.0
        %1566 = vmatprep.subr.mxu0 0.0
        %1567 = vmatpush2.msra.mxu0 0.0
        %1568 = vmatprep.subr.mxu0 0.0
        %1569 = vmatpush2.msra.mxu0 0.0
        %1570 = vmatprep.subr.mxu0 0.0
        %1571 = vmatpush2.msra.mxu0 0.0
        %1572 = vmatprep.subr.mxu0 0.0
        %1573 = vmatpush2.msra.mxu0 0.0
        %1574 = vmatprep.mubr.f32.mxu0 0.0
        %1575 = vmatmul.mubr.f32.gmra.mxu0 %v1508
        %v1576 = vpop.f32.mrf.mxu0
        %v1577 = vadd.f32 0.0, %v1576
        %v1578 = vpop.f32.mrf.mxu0
        %1579 = vdwg.mxu0
        %1581 = vrot.lane.b32.xlu0 %v1577, 64
        %v1582 = vpop.permute.xlu0 %1581
        %vm1584 = vcmask 785920
        %1585 = vst.msk [vmem:[#allocation2] sm:$0xff] %vm1584, %v1582
        %1586 = vrot.lane.b32.xlu0 %v1003, 32
        %v1587 = vpop.permute.xlu0 %1586
        %1588 = vrot.lane.b32.xlu0 %v1005, 32
        %v1589 = vpop.permute.xlu0 %1588
        %v1590 = vsel %vm1077, %v1587, 0
        %v1592 = vsel %vm1077, %v1589, 0
        %1594 = vmatprep.subr.mxu0 0.0
        %1595 = vmatpush1.xpose.msra.mxu0 0.0
        %1596 = vmatprep.subr.mxu0 0.0
        %1597 = vmatpush1.xpose.msra.mxu0 0.0
        %1598 = vmatprep.subr.mxu0 0.0
        %1599 = vmatpush1.xpose.msra.mxu0 0.0
        %1600 = vmatprep.subr.mxu0 0.0
        %1601 = vmatpush1.xpose.msra.mxu0 0.0
        %1602 = vmatprep.subr.mxu0 0.0
        %1603 = vmatpush1.xpose.msra.mxu0 0.0
        %1604 = vmatprep.subr.mxu0 0.0
        %1605 = vmatpush1.xpose.msra.mxu0 0.0
        %1606 = vmatprep.subr.mxu0 0.0
        %1607 = vmatpush1.xpose.msra.mxu0 0.0
        %1608 = vmatprep.subr.mxu0 0.0
        %1609 = vmatpush1.xpose.msra.mxu0 0.0
        %1610 = vmatprep.subr.mxu0 0.0
        %1611 = vmatpush1.xpose.msra.mxu0 0.0
        %1612 = vmatprep.subr.mxu0 0.0
        %1613 = vmatpush1.xpose.msra.mxu0 0.0
        %1614 = vmatprep.subr.mxu0 0.0
        %1615 = vmatpush1.xpose.msra.mxu0 0.0
        %1616 = vmatprep.subr.mxu0 0.0
        %1617 = vmatpush1.xpose.msra.mxu0 0.0
        %1618 = vmatprep.subr.mxu0 0.0
        %1619 = vmatpush1.xpose.msra.mxu0 0.0
        %1620 = vmatprep.subr.mxu0 0.0
        %1621 = vmatpush1.xpose.msra.mxu0 0.0
        %1622 = vmatprep.subr.mxu0 0.0
        %1623 = vmatpush1.xpose.msra.mxu0 0.0
        %1624 = vmatprep.subr.mxu0 0.0
        %1625 = vmatpush1.xpose.msra.mxu0 %v1592
        %1626 = vmatprep.subr.mxu0 0.0
        %1627 = vmatpush2.xpose.msra.mxu0 0.0
        %1628 = vmatprep.subr.mxu0 0.0
        %1629 = vmatpush2.xpose.msra.mxu0 0.0
        %1630 = vmatprep.subr.mxu0 0.0
        %1631 = vmatpush2.xpose.msra.mxu0 0.0
        %1632 = vmatprep.subr.mxu0 0.0
        %1633 = vmatpush2.xpose.msra.mxu0 0.0
        %1634 = vmatprep.subr.mxu0 0.0
        %1635 = vmatpush2.xpose.msra.mxu0 0.0
        %1636 = vmatprep.subr.mxu0 0.0
        %1637 = vmatpush2.xpose.msra.mxu0 0.0
        %1638 = vmatprep.subr.mxu0 0.0
        %1639 = vmatpush2.xpose.msra.mxu0 0.0
        %1640 = vmatprep.subr.mxu0 0.0
        %1641 = vmatpush2.xpose.msra.mxu0 0.0
        %1642 = vmatprep.subr.mxu0 0.0
        %1643 = vmatpush2.xpose.msra.mxu0 0.0
        %1644 = vmatprep.subr.mxu0 0.0
        %1645 = vmatpush2.xpose.msra.mxu0 0.0
        %1646 = vmatprep.subr.mxu0 0.0
        %1647 = vmatpush2.xpose.msra.mxu0 0.0
        %1648 = vmatprep.subr.mxu0 0.0
        %1649 = vmatpush2.xpose.msra.mxu0 0.0
        %1650 = vmatprep.subr.mxu0 0.0
        %1651 = vmatpush2.xpose.msra.mxu0 0.0
        %1652 = vmatprep.subr.mxu0 0.0
        %1653 = vmatpush2.xpose.msra.mxu0 0.0
        %1654 = vmatprep.subr.mxu0 0.0
        %1655 = vmatpush2.xpose.msra.mxu0 0.0
        %1656 = vmatprep.subr.mxu0 0.0
        %1657 = vmatpush2.xpose.msra.mxu0 0.0
        %1658 = vmatprep.mubr.f32.mxu0 0.0
        %1659 = vmatmul.mubr.f32.gmra.mxu0 %v1590
        %v1660 = vpop.f32.mrf.mxu0
        %v1661 = vadd.f32 0.0, %v1660
        %v1662 = vpop.f32.mrf.mxu0
        %1663 = vdwg.mxu0
        %v1664 = vmul.f32 %v1661, 0.17677669
        %v1665 = vsel %vm1155, %v1664, -inf
        %1666 = vmax.xlane.f32.xlu0 %v1665
        %v1667 = vpop.xlane.xlu0 %1666
        %v1668 = vsub.f32 %v1664, %v1667
        %v1669 = vmul.f32 %v1668, 1.442695
        %v1670 = vpow.pop %v1669
        %v1671 = vsel %vm1155, %v1670, 0.0
        %1672 = vadd.xlane.f32.xlu0 %v1671
        %v1673 = vpop.xlane.xlu0 %1672
        %v1674 = vrcp.pop %v1673
        %v1675 = vmul.f32 %v1670, %v1674
        %1676 = vrot.lane.b32.xlu0 %v1074, 32
        %v1677 = vpop.permute.xlu0 %1676
        %v1680 = vsel %vm1155, %v1675, 0
        %1682 = vmatprep.subr.mxu0 0.0
        %1683 = vmatpush1.msra.mxu0 0.0
        %1684 = vmatprep.subr.mxu0 0.0
        %1685 = vmatpush1.msra.mxu0 0.0
        %1686 = vmatprep.subr.mxu0 0.0
        %1687 = vmatpush1.msra.mxu0 0.0
        %1688 = vmatprep.subr.mxu0 0.0
        %1689 = vmatpush1.msra.mxu0 0.0
        %1690 = vmatprep.subr.mxu0 0.0
        %1691 = vmatpush1.msra.mxu0 0.0
        %1692 = vmatprep.subr.mxu0 0.0
        %1693 = vmatpush1.msra.mxu0 0.0
        %1694 = vmatprep.subr.mxu0 0.0
        %1695 = vmatpush1.msra.mxu0 0.0
        %1696 = vmatprep.subr.mxu0 0.0
        %1697 = vmatpush1.msra.mxu0 0.0
        %1698 = vmatprep.subr.mxu0 0.0
        %1699 = vmatpush1.msra.mxu0 0.0
        %1700 = vmatprep.subr.mxu0 0.0
        %1701 = vmatpush1.msra.mxu0 0.0
        %1702 = vmatprep.subr.mxu0 0.0
        %1703 = vmatpush1.msra.mxu0 0.0
        %1704 = vmatprep.subr.mxu0 0.0
        %1705 = vmatpush1.msra.mxu0 0.0
        %1706 = vmatprep.subr.mxu0 0.0
        %1707 = vmatpush1.msra.mxu0 0.0
        %1708 = vmatprep.subr.mxu0 0.0
        %1709 = vmatpush1.msra.mxu0 0.0
        %1710 = vmatprep.subr.mxu0 0.0
        %1711 = vmatpush1.msra.mxu0 0.0
        %1712 = vmatprep.subr.mxu0 0.0
        %1713 = vmatpush1.msra.mxu0 %v1677
        %1714 = vmatprep.subr.mxu0 0.0
        %1715 = vmatpush2.msra.mxu0 0.0
        %1716 = vmatprep.subr.mxu0 0.0
        %1717 = vmatpush2.msra.mxu0 0.0
        %1718 = vmatprep.subr.mxu0 0.0
        %1719 = vmatpush2.msra.mxu0 0.0
        %1720 = vmatprep.subr.mxu0 0.0
        %1721 = vmatpush2.msra.mxu0 0.0
        %1722 = vmatprep.subr.mxu0 0.0
        %1723 = vmatpush2.msra.mxu0 0.0
        %1724 = vmatprep.subr.mxu0 0.0
        %1725 = vmatpush2.msra.mxu0 0.0
        %1726 = vmatprep.subr.mxu0 0.0
        %1727 = vmatpush2.msra.mxu0 0.0
        %1728 = vmatprep.subr.mxu0 0.0
        %1729 = vmatpush2.msra.mxu0 0.0
        %1730 = vmatprep.subr.mxu0 0.0
        %1731 = vmatpush2.msra.mxu0 0.0
        %1732 = vmatprep.subr.mxu0 0.0
        %1733 = vmatpush2.msra.mxu0 0.0
        %1734 = vmatprep.subr.mxu0 0.0
        %1735 = vmatpush2.msra.mxu0 0.0
        %1736 = vmatprep.subr.mxu0 0.0
        %1737 = vmatpush2.msra.mxu0 0.0
        %1738 = vmatprep.subr.mxu0 0.0
        %1739 = vmatpush2.msra.mxu0 0.0
        %1740 = vmatprep.subr.mxu0 0.0
        %1741 = vmatpush2.msra.mxu0 0.0
        %1742 = vmatprep.subr.mxu0 0.0
        %1743 = vmatpush2.msra.mxu0 0.0
        %1744 = vmatprep.subr.mxu0 0.0
        %1745 = vmatpush2.msra.mxu0 0.0
        %1746 = vmatprep.mubr.f32.mxu0 0.0
        %1747 = vmatmul.mubr.f32.gmra.mxu0 %v1680
        %v1748 = vpop.f32.mrf.mxu0
        %v1749 = vadd.f32 0.0, %v1748
        %v1750 = vpop.f32.mrf.mxu0
        %1751 = vdwg.mxu0
        %1753 = vrot.lane.b32.xlu0 %v1749, 96
        %v1754 = vpop.permute.xlu0 %1753
        %vm1756 = vcmask 1048320
        %1757 = vst.msk [vmem:[#allocation2] sm:$0xff] %vm1756, %v1754
        %v1758 = vld [vmem:[#allocation2] sm:$0xff]
        %v1759 = vld [vmem:[#allocation8] sm:$0xff]
        %v1760 = vld [vmem:[#allocation8 + $0x8] sm:$0xff]
        %v1761 = vld [vmem:[#allocation8 + $0x10] sm:$0xff]
        %v1762 = vld [vmem:[#allocation8 + $0x18] sm:$0xff]
        %v1763 = vld [vmem:[#allocation8 + $0x20] sm:$0xff]
        %v1764 = vld [vmem:[#allocation8 + $0x28] sm:$0xff]
        %v1765 = vld [vmem:[#allocation8 + $0x30] sm:$0xff]
        %v1766 = vld [vmem:[#allocation8 + $0x38] sm:$0xff]
        %v1767 = vld [vmem:[#allocation8 + $0x40] sm:$0xff]
        %v1768 = vld [vmem:[#allocation8 + $0x48] sm:$0xff]
        %v1769 = vld [vmem:[#allocation8 + $0x50] sm:$0xff]
        %v1770 = vld [vmem:[#allocation8 + $0x58] sm:$0xff]
        %v1771 = vld [vmem:[#allocation8 + $0x60] sm:$0xff]
        %v1772 = vld [vmem:[#allocation8 + $0x68] sm:$0xff]
        %v1773 = vld [vmem:[#allocation8 + $0x70] sm:$0xff]
        %v1774 = vld [vmem:[#allocation8 + $0x78] sm:$0xff]
        %v1775 = vld [vmem:[%s9] sm:$0x1]
        %v1777 = vlaneseq
        %v1778 = vshrl.u32 %v1777, 7
        %v1779 = vsub.s32 0, %v1778
        %v1780 = vrot.slane %v1775, %v1779
        %1782 = vmatprep.subr.mxu0 0.0
        %1783 = vmatpush1.msra.mxu0 %v1774
        %1784 = vmatprep.subr.mxu0 0.0
        %1785 = vmatpush1.msra.mxu0 %v1773
        %1786 = vmatprep.subr.mxu0 0.0
        %1787 = vmatpush1.msra.mxu0 %v1772
        %1788 = vmatprep.subr.mxu0 0.0
        %1789 = vmatpush1.msra.mxu0 %v1771
        %1790 = vmatprep.subr.mxu0 0.0
        %1791 = vmatpush1.msra.mxu0 %v1770
        %1792 = vmatprep.subr.mxu0 0.0
        %1793 = vmatpush1.msra.mxu0 %v1769
        %1794 = vmatprep.subr.mxu0 0.0
        %1795 = vmatpush1.msra.mxu0 %v1768
        %1796 = vmatprep.subr.mxu0 0.0
        %1797 = vmatpush1.msra.mxu0 %v1767
        %1798 = vmatprep.subr.mxu0 0.0
        %1799 = vmatpush1.msra.mxu0 %v1766
        %1800 = vmatprep.subr.mxu0 0.0
        %1801 = vmatpush1.msra.mxu0 %v1765
        %1802 = vmatprep.subr.mxu0 0.0
        %1803 = vmatpush1.msra.mxu0 %v1764
        %1804 = vmatprep.subr.mxu0 0.0
        %1805 = vmatpush1.msra.mxu0 %v1763
        %1806 = vmatprep.subr.mxu0 0.0
        %1807 = vmatpush1.msra.mxu0 %v1762
        %1808 = vmatprep.subr.mxu0 0.0
        %1809 = vmatpush1.msra.mxu0 %v1761
        %1810 = vmatprep.subr.mxu0 0.0
        %1811 = vmatpush1.msra.mxu0 %v1760
        %1812 = vmatprep.subr.mxu0 0.0
        %1813 = vmatpush1.msra.mxu0 %v1759
        %1814 = vmatprep.subr.mxu0 0.0
        %1815 = vmatpush2.msra.mxu0 0.0
        %1816 = vmatprep.subr.mxu0 0.0
        %1817 = vmatpush2.msra.mxu0 0.0
        %1818 = vmatprep.subr.mxu0 0.0
        %1819 = vmatpush2.msra.mxu0 0.0
        %1820 = vmatprep.subr.mxu0 0.0
        %1821 = vmatpush2.msra.mxu0 0.0
        %1822 = vmatprep.subr.mxu0 0.0
        %1823 = vmatpush2.msra.mxu0 0.0
        %1824 = vmatprep.subr.mxu0 0.0
        %1825 = vmatpush2.msra.mxu0 0.0
        %1826 = vmatprep.subr.mxu0 0.0
        %1827 = vmatpush2.msra.mxu0 0.0
        %1828 = vmatprep.subr.mxu0 0.0
        %1829 = vmatpush2.msra.mxu0 0.0
        %1830 = vmatprep.subr.mxu0 0.0
        %1831 = vmatpush2.msra.mxu0 0.0
        %1832 = vmatprep.subr.mxu0 0.0
        %1833 = vmatpush2.msra.mxu0 0.0
        %1834 = vmatprep.subr.mxu0 0.0
        %1835 = vmatpush2.msra.mxu0 0.0
        %1836 = vmatprep.subr.mxu0 0.0
        %1837 = vmatpush2.msra.mxu0 0.0
        %1838 = vmatprep.subr.mxu0 0.0
        %1839 = vmatpush2.msra.mxu0 0.0
        %1840 = vmatprep.subr.mxu0 0.0
        %1841 = vmatpush2.msra.mxu0 0.0
        %1842 = vmatprep.subr.mxu0 0.0
        %1843 = vmatpush2.msra.mxu0 0.0
        %1844 = vmatprep.subr.mxu0 0.0
        %1845 = vmatpush2.msra.mxu0 0.0
        %1846 = vmatprep.mubr.f32.mxu0 0.0
        %1847 = vmatmul.mubr.f32.gmra.mxu0 %v1758
        %v1848 = vpop.f32.mrf.mxu0
        %v1849 = vadd.f32 %v1780, %v1848
        %v1850 = vpop.f32.mrf.mxu0
        %1851 = vdwg.mxu0
        %v1852 = vadd.f32 %v1849, %v870
        %v1853 = vld [vmem:[%s10] sm:$0x1]
        %v1854 = vld [vmem:[%s11] sm:$0x1]
        %1855 = vadd.xlane.f32.xlu0 %v1852
        %v1856 = vpop.xlane.xlu0 %1855
        %v1857 = vrcp.pop 128.0
        %v1858 = vmul.f32 %v1856, %v1857
        %v1859 = vsub.f32 %v1852, %v1858
        %v1860 = vmul.f32 %v1859, %v1859
        %1861 = vadd.xlane.f32.xlu0 %v1860
        %v1862 = vpop.xlane.xlu0 %1861
        %v1863 = vmul.f32 %v1862, %v1857
        %v1864 = vadd.f32 %v1863, 1e-05
        %v1865 = vrsqrt.pop %v1864
        %v1866 = vmul.f32 %v1859, %v1865
        %v1868 = vlaneseq
        %v1869 = vshrl.u32 %v1868, 7
        %v1870 = vsub.s32 0, %v1869
        %v1871 = vrot.slane %v1853, %v1870
        %v1873 = vmul.f32 %v1866, %v1871
        %v1875 = vlaneseq
        %v1876 = vshrl.u32 %v1875, 7
        %v1877 = vsub.s32 0, %v1876
        %v1878 = vrot.slane %v1854, %v1877
        %v1880 = vadd.f32 %v1873, %v1878
        %v1881 = vld [vmem:[#allocation10] sm:$0xff]
        %v1882 = vld [vmem:[#allocation10 + $0x8] sm:$0xff]
        %v1883 = vld [vmem:[#allocation10 + $0x10] sm:$0xff]
        %v1884 = vld [vmem:[#allocation10 + $0x18] sm:$0xff]
        %v1885 = vld [vmem:[#allocation10 + $0x20] sm:$0xff]
        %v1886 = vld [vmem:[#allocation10 + $0x28] sm:$0xff]
        %v1887 = vld [vmem:[#allocation10 + $0x30] sm:$0xff]
        %v1888 = vld [vmem:[#allocation10 + $0x38] sm:$0xff]
        %v1889 = vld [vmem:[#allocation10 + $0x40] sm:$0xff]
        %v1890 = vld [vmem:[#allocation10 + $0x48] sm:$0xff]
        %v1891 = vld [vmem:[#allocation10 + $0x50] sm:$0xff]
        %v1892 = vld [vmem:[#allocation10 + $0x58] sm:$0xff]
        %v1893 = vld [vmem:[#allocation10 + $0x60] sm:$0xff]
        %v1894 = vld [vmem:[#allocation10 + $0x68] sm:$0xff]
        %v1895 = vld [vmem:[#allocation10 + $0x70] sm:$0xff]
        %v1896 = vld [vmem:[#allocation10 + $0x78] sm:$0xff]
        %v1897 = vld [vmem:[#allocation10 + $0x80] sm:$0xff]
        %v1898 = vld [vmem:[#allocation10 + $0x88] sm:$0xff]
        %v1899 = vld [vmem:[#allocation10 + $0x90] sm:$0xff]
        %v1900 = vld [vmem:[#allocation10 + $0x98] sm:$0xff]
        %v1901 = vld [vmem:[#allocation10 + $0xa0] sm:$0xff]
        %v1902 = vld [vmem:[#allocation10 + $0xa8] sm:$0xff]
        %v1903 = vld [vmem:[#allocation10 + $0xb0] sm:$0xff]
        %v1904 = vld [vmem:[#allocation10 + $0xb8] sm:$0xff]
        %v1905 = vld [vmem:[#allocation10 + $0xc0] sm:$0xff]
        %v1906 = vld [vmem:[#allocation10 + $0xc8] sm:$0xff]
        %v1907 = vld [vmem:[#allocation10 + $0xd0] sm:$0xff]
        %v1908 = vld [vmem:[#allocation10 + $0xd8] sm:$0xff]
        %v1909 = vld [vmem:[#allocation10 + $0xe0] sm:$0xff]
        %v1910 = vld [vmem:[#allocation10 + $0xe8] sm:$0xff]
        %v1911 = vld [vmem:[#allocation10 + $0xf0] sm:$0xff]
        %v1912 = vld [vmem:[#allocation10 + $0xf8] sm:$0xff]
        %v1913 = vld [vmem:[%s13] sm:$0x3]
        %v1915 = vlaneseq
        %v1916 = vshrl.u32 %v1915, 7
        %v1917 = vsub.s32 0, %v1916
        %v1918 = vrot.slane %v1913, %v1917
        %v1919 = vlaneseq
        %v1920 = vshrl.u32 %v1919, 7
        %v1921 = vsub.s32 1, %v1920
        %v1922 = vrot.slane %v1913, %v1921
        %1925 = vmatprep.subr.mxu0 %v1912
        %1926 = vmatpush1.msra.mxu0 %v1911
        %1927 = vmatprep.subr.mxu0 %v1910
        %1928 = vmatpush1.msra.mxu0 %v1909
        %1929 = vmatprep.subr.mxu0 %v1908
        %1930 = vmatpush1.msra.mxu0 %v1907
        %1931 = vmatprep.subr.mxu0 %v1906
        %1932 = vmatpush1.msra.mxu0 %v1905
        %1933 = vmatprep.subr.mxu0 %v1904
        %1934 = vmatpush1.msra.mxu0 %v1903
        %1935 = vmatprep.subr.mxu0 %v1902
        %1936 = vmatpush1.msra.mxu0 %v1901
        %1937 = vmatprep.subr.mxu0 %v1900
        %1938 = vmatpush1.msra.mxu0 %v1899
        %1939 = vmatprep.subr.mxu0 %v1898
        %1940 = vmatpush1.msra.mxu0 %v1897
        %1941 = vmatprep.subr.mxu0 %v1896
        %1942 = vmatpush1.msra.mxu0 %v1895
        %1943 = vmatprep.subr.mxu0 %v1894
        %1944 = vmatpush1.msra.mxu0 %v1893
        %1945 = vmatprep.subr.mxu0 %v1892
        %1946 = vmatpush1.msra.mxu0 %v1891
        %1947 = vmatprep.subr.mxu0 %v1890
        %1948 = vmatpush1.msra.mxu0 %v1889
        %1949 = vmatprep.subr.mxu0 %v1888
        %1950 = vmatpush1.msra.mxu0 %v1887
        %1951 = vmatprep.subr.mxu0 %v1886
        %1952 = vmatpush1.msra.mxu0 %v1885
        %1953 = vmatprep.subr.mxu0 %v1884
        %1954 = vmatpush1.msra.mxu0 %v1883
        %1955 = vmatprep.subr.mxu0 %v1882
        %1956 = vmatpush1.msra.mxu0 %v1881
        %1957 = vmatprep.subr.mxu0 0.0
        %1958 = vmatpush2.msra.mxu0 0.0
        %1959 = vmatprep.subr.mxu0 0.0
        %1960 = vmatpush2.msra.mxu0 0.0
        %1961 = vmatprep.subr.mxu0 0.0
        %1962 = vmatpush2.msra.mxu0 0.0
        %1963 = vmatprep.subr.mxu0 0.0
        %1964 = vmatpush2.msra.mxu0 0.0
        %1965 = vmatprep.subr.mxu0 0.0
        %1966 = vmatpush2.msra.mxu0 0.0
        %1967 = vmatprep.subr.mxu0 0.0
        %1968 = vmatpush2.msra.mxu0 0.0
        %1969 = vmatprep.subr.mxu0 0.0
        %1970 = vmatpush2.msra.mxu0 0.0
        %1971 = vmatprep.subr.mxu0 0.0
        %1972 = vmatpush2.msra.mxu0 0.0
        %1973 = vmatprep.subr.mxu0 0.0
        %1974 = vmatpush2.msra.mxu0 0.0
        %1975 = vmatprep.subr.mxu0 0.0
        %1976 = vmatpush2.msra.mxu0 0.0
        %1977 = vmatprep.subr.mxu0 0.0
        %1978 = vmatpush2.msra.mxu0 0.0
        %1979 = vmatprep.subr.mxu0 0.0
        %1980 = vmatpush2.msra.mxu0 0.0
        %1981 = vmatprep.subr.mxu0 0.0
        %1982 = vmatpush2.msra.mxu0 0.0
        %1983 = vmatprep.subr.mxu0 0.0
        %1984 = vmatpush2.msra.mxu0 0.0
        %1985 = vmatprep.subr.mxu0 0.0
        %1986 = vmatpush2.msra.mxu0 0.0
        %1987 = vmatprep.subr.mxu0 0.0
        %1988 = vmatpush2.msra.mxu0 0.0
        %1989 = vmatprep.mubr.f32.mxu0 0.0
        %1990 = vmatmul.mubr.f32.gmra.mxu0 %v1880
        %v1991 = vpop.f32.mrf.mxu0
        %v1992 = vadd.f32 %v1918, %v1991
        %v1993 = vpop.f32.mrf.mxu0
        %v1994 = vadd.f32 %v1922, %v1993
        %1995 = vdwg.mxu0
        %v1996 = vmax.f32 %v1992, 0.0
        %v1997 = vmax.f32 %v1994, 0.0
        %v1998 = vld [vmem:[#allocation11] sm:$0xff]
        %v1999 = vld [vmem:[#allocation11 + $0x8] sm:$0xff]
        %v2000 = vld [vmem:[#allocation11 + $0x10] sm:$0xff]
        %v2001 = vld [vmem:[#allocation11 + $0x18] sm:$0xff]
        %v2002 = vld [vmem:[#allocation11 + $0x20] sm:$0xff]
        %v2003 = vld [vmem:[#allocation11 + $0x28] sm:$0xff]
        %v2004 = vld [vmem:[#allocation11 + $0x30] sm:$0xff]
        %v2005 = vld [vmem:[#allocation11 + $0x38] sm:$0xff]
        %v2006 = vld [vmem:[#allocation11 + $0x40] sm:$0xff]
        %v2007 = vld [vmem:[#allocation11 + $0x48] sm:$0xff]
        %v2008 = vld [vmem:[#allocation11 + $0x50] sm:$0xff]
        %v2009 = vld [vmem:[#allocation11 + $0x58] sm:$0xff]
        %v2010 = vld [vmem:[#allocation11 + $0x60] sm:$0xff]
        %v2011 = vld [vmem:[#allocation11 + $0x68] sm:$0xff]
        %v2012 = vld [vmem:[#allocation11 + $0x70] sm:$0xff]
        %v2013 = vld [vmem:[#allocation11 + $0x78] sm:$0xff]
        %v2014 = vld [vmem:[#allocation11 + $0x80] sm:$0xff]
        %v2015 = vld [vmem:[#allocation11 + $0x88] sm:$0xff]
        %v2016 = vld [vmem:[#allocation11 + $0x90] sm:$0xff]
        %v2017 = vld [vmem:[#allocation11 + $0x98] sm:$0xff]
        %v2018 = vld [vmem:[#allocation11 + $0xa0] sm:$0xff]
        %v2019 = vld [vmem:[#allocation11 + $0xa8] sm:$0xff]
        %v2020 = vld [vmem:[#allocation11 + $0xb0] sm:$0xff]
        %v2021 = vld [vmem:[#allocation11 + $0xb8] sm:$0xff]
        %v2022 = vld [vmem:[#allocation11 + $0xc0] sm:$0xff]
        %v2023 = vld [vmem:[#allocation11 + $0xc8] sm:$0xff]
        %v2024 = vld [vmem:[#allocation11 + $0xd0] sm:$0xff]
        %v2025 = vld [vmem:[#allocation11 + $0xd8] sm:$0xff]
        %v2026 = vld [vmem:[#allocation11 + $0xe0] sm:$0xff]
        %v2027 = vld [vmem:[#allocation11 + $0xe8] sm:$0xff]
        %v2028 = vld [vmem:[#allocation11 + $0xf0] sm:$0xff]
        %v2029 = vld [vmem:[#allocation11 + $0xf8] sm:$0xff]
        %v2030 = vld [vmem:[%s15] sm:$0x1]
        %v2032 = vlaneseq
        %v2033 = vshrl.u32 %v2032, 7
        %v2034 = vsub.s32 0, %v2033
        %v2035 = vrot.slane %v2030, %v2034
        %2037 = vmatprep.subr.mxu0 0.0
        %2038 = vmatpush1.msra.mxu0 %v2013
        %2039 = vmatprep.subr.mxu0 0.0
        %2040 = vmatpush1.msra.mxu0 %v2012
        %2041 = vmatprep.subr.mxu0 0.0
        %2042 = vmatpush1.msra.mxu0 %v2011
        %2043 = vmatprep.subr.mxu0 0.0
        %2044 = vmatpush1.msra.mxu0 %v2010
        %2045 = vmatprep.subr.mxu0 0.0
        %2046 = vmatpush1.msra.mxu0 %v2009
        %2047 = vmatprep.subr.mxu0 0.0
        %2048 = vmatpush1.msra.mxu0 %v2008
        %2049 = vmatprep.subr.mxu0 0.0
        %2050 = vmatpush1.msra.mxu0 %v2007
        %2051 = vmatprep.subr.mxu0 0.0
        %2052 = vmatpush1.msra.mxu0 %v2006
        %2053 = vmatprep.subr.mxu0 0.0
        %2054 = vmatpush1.msra.mxu0 %v2005
        %2055 = vmatprep.subr.mxu0 0.0
        %2056 = vmatpush1.msra.mxu0 %v2004
        %2057 = vmatprep.subr.mxu0 0.0
        %2058 = vmatpush1.msra.mxu0 %v2003
        %2059 = vmatprep.subr.mxu0 0.0
        %2060 = vmatpush1.msra.mxu0 %v2002
        %2061 = vmatprep.subr.mxu0 0.0
        %2062 = vmatpush1.msra.mxu0 %v2001
        %2063 = vmatprep.subr.mxu0 0.0
        %2064 = vmatpush1.msra.mxu0 %v2000
        %2065 = vmatprep.subr.mxu0 0.0
        %2066 = vmatpush1.msra.mxu0 %v1999
        %2067 = vmatprep.subr.mxu0 0.0
        %2068 = vmatpush1.msra.mxu0 %v1998
        %2069 = vmatprep.subr.mxu0 0.0
        %2070 = vmatpush2.msra.mxu0 %v2029
        %2071 = vmatprep.subr.mxu0 0.0
        %2072 = vmatpush2.msra.mxu0 %v2028
        %2073 = vmatprep.subr.mxu0 0.0
        %2074 = vmatpush2.msra.mxu0 %v2027
        %2075 = vmatprep.subr.mxu0 0.0
        %2076 = vmatpush2.msra.mxu0 %v2026
        %2077 = vmatprep.subr.mxu0 0.0
        %2078 = vmatpush2.msra.mxu0 %v2025
        %2079 = vmatprep.subr.mxu0 0.0
        %2080 = vmatpush2.msra.mxu0 %v2024
        %2081 = vmatprep.subr.mxu0 0.0
        %2082 = vmatpush2.msra.mxu0 %v2023
        %2083 = vmatprep.subr.mxu0 0.0
        %2084 = vmatpush2.msra.mxu0 %v2022
        %2085 = vmatprep.subr.mxu0 0.0
        %2086 = vmatpush2.msra.mxu0 %v2021
        %2087 = vmatprep.subr.mxu0 0.0
        %2088 = vmatpush2.msra.mxu0 %v2020
        %2089 = vmatprep.subr.mxu0 0.0
        %2090 = vmatpush2.msra.mxu0 %v2019
        %2091 = vmatprep.subr.mxu0 0.0
        %2092 = vmatpush2.msra.mxu0 %v2018
        %2093 = vmatprep.subr.mxu0 0.0
        %2094 = vmatpush2.msra.mxu0 %v2017
        %2095 = vmatprep.subr.mxu0 0.0
        %2096 = vmatpush2.msra.mxu0 %v2016
        %2097 = vmatprep.subr.mxu0 0.0
        %2098 = vmatpush2.msra.mxu0 %v2015
        %2099 = vmatprep.subr.mxu0 0.0
        %2100 = vmatpush2.msra.mxu0 %v2014
        %2101 = vmatprep.mubr.f32.mxu0 %v1997
        %2102 = vmatmul.mubr.f32.gmra.mxu0 %v1996
        %v2103 = vpop.f32.mrf.mxu0
        %v2104 = vadd.f32 %v2035, %v2103
        %v2105 = vpop.f32.mrf.mxu0
        %2106 = vdwg.mxu0
        %v2107 = vadd.f32 %v2104, %v1880
        %v2108 = vld [vmem:[%s16] sm:$0x1]
        %v2109 = vld [vmem:[%s17] sm:$0x1]
        %2110 = vadd.xlane.f32.xlu0 %v2107
        %v2111 = vpop.xlane.xlu0 %2110
        %v2112 = vmul.f32 %v2111, %v1857
        %v2113 = vsub.f32 %v2107, %v2112
        %v2114 = vmul.f32 %v2113, %v2113
        %2115 = vadd.xlane.f32.xlu0 %v2114
        %v2116 = vpop.xlane.xlu0 %2115
        %v2117 = vmul.f32 %v2116, %v1857
        %v2118 = vadd.f32 %v2117, 1e-05
        %v2119 = vrsqrt.pop %v2118
        %v2120 = vmul.f32 %v2113, %v2119
        %v2122 = vlaneseq
        %v2123 = vshrl.u32 %v2122, 7
        %v2124 = vsub.s32 0, %v2123
        %v2125 = vrot.slane %v2108, %v2124
        %v2127 = vmul.f32 %v2120, %v2125
        %v2129 = vlaneseq
        %v2130 = vshrl.u32 %v2129, 7
        %v2131 = vsub.s32 0, %v2130
        %v2132 = vrot.slane %v2109, %v2131
        %v2134 = vadd.f32 %v2127, %v2132
        %s2135 = scalar_lea.vmem [#allocation7], 384
        %v2136 = vld [vmem:[%s2135] sm:$0xff]
        %v2137 = vld [vmem:[%s2135 + $0x8] sm:$0xff]
        %v2138 = vld [vmem:[%s2135 + $0x10] sm:$0xff]
        %v2139 = vld [vmem:[%s2135 + $0x18] sm:$0xff]
        %v2140 = vld [vmem:[%s2135 + $0x20] sm:$0xff]
        %v2141 = vld [vmem:[%s2135 + $0x28] sm:$0xff]
        %v2142 = vld [vmem:[%s2135 + $0x30] sm:$0xff]
        %v2143 = vld [vmem:[%s2135 + $0x38] sm:$0xff]
        %v2144 = vld [vmem:[%s2135 + $0x40] sm:$0xff]
        %v2145 = vld [vmem:[%s2135 + $0x48] sm:$0xff]
        %v2146 = vld [vmem:[%s2135 + $0x50] sm:$0xff]
        %v2147 = vld [vmem:[%s2135 + $0x58] sm:$0xff]
        %v2148 = vld [vmem:[%s2135 + $0x60] sm:$0xff]
        %v2149 = vld [vmem:[%s2135 + $0x68] sm:$0xff]
        %v2150 = vld [vmem:[%s2135 + $0x70] sm:$0xff]
        %v2151 = vld [vmem:[%s2135 + $0x78] sm:$0xff]
        %v2152 = vld [vmem:[%s2135 + $0x80] sm:$0xff]
        %v2153 = vld [vmem:[%s2135 + $0x88] sm:$0xff]
        %v2154 = vld [vmem:[%s2135 + $0x90] sm:$0xff]
        %v2155 = vld [vmem:[%s2135 + $0x98] sm:$0xff]
        %v2156 = vld [vmem:[%s2135 + $0xa0] sm:$0xff]
        %v2157 = vld [vmem:[%s2135 + $0xa8] sm:$0xff]
        %v2158 = vld [vmem:[%s2135 + $0xb0] sm:$0xff]
        %v2159 = vld [vmem:[%s2135 + $0xb8] sm:$0xff]
        %v2160 = vld [vmem:[%s2135 + $0xc0] sm:$0xff]
        %v2161 = vld [vmem:[%s2135 + $0xc8] sm:$0xff]
        %v2162 = vld [vmem:[%s2135 + $0xd0] sm:$0xff]
        %v2163 = vld [vmem:[%s2135 + $0xd8] sm:$0xff]
        %v2164 = vld [vmem:[%s2135 + $0xe0] sm:$0xff]
        %v2165 = vld [vmem:[%s2135 + $0xe8] sm:$0xff]
        %v2166 = vld [vmem:[%s2135 + $0xf0] sm:$0xff]
        %v2167 = vld [vmem:[%s2135 + $0xf8] sm:$0xff]
        %v2168 = vld [vmem:[%s2135 + $0x100] sm:$0xff]
        %v2169 = vld [vmem:[%s2135 + $0x108] sm:$0xff]
        %v2170 = vld [vmem:[%s2135 + $0x110] sm:$0xff]
        %v2171 = vld [vmem:[%s2135 + $0x118] sm:$0xff]
        %v2172 = vld [vmem:[%s2135 + $0x120] sm:$0xff]
        %v2173 = vld [vmem:[%s2135 + $0x128] sm:$0xff]
        %v2174 = vld [vmem:[%s2135 + $0x130] sm:$0xff]
        %v2175 = vld [vmem:[%s2135 + $0x138] sm:$0xff]
        %v2176 = vld [vmem:[%s2135 + $0x140] sm:$0xff]
        %v2177 = vld [vmem:[%s2135 + $0x148] sm:$0xff]
        %v2178 = vld [vmem:[%s2135 + $0x150] sm:$0xff]
        %v2179 = vld [vmem:[%s2135 + $0x158] sm:$0xff]
        %v2180 = vld [vmem:[%s2135 + $0x160] sm:$0xff]
        %v2181 = vld [vmem:[%s2135 + $0x168] sm:$0xff]
        %v2182 = vld [vmem:[%s2135 + $0x170] sm:$0xff]
        %v2183 = vld [vmem:[%s2135 + $0x178] sm:$0xff]
        %s2184 = scalar_lea.vmem %s7, 3
        %v2185 = vld [vmem:[%s2184] sm:$0x7]
        %v2187 = vlaneseq
        %v2188 = vshrl.u32 %v2187, 7
        %v2189 = vsub.s32 0, %v2188
        %v2190 = vrot.slane %v2185, %v2189
        %v2191 = vlaneseq
        %v2192 = vshrl.u32 %v2191, 7
        %v2193 = vsub.s32 1, %v2192
        %v2194 = vrot.slane %v2185, %v2193
        %v2195 = vlaneseq
        %v2196 = vshrl.u32 %v2195, 7
        %v2197 = vsub.s32 2, %v2196
        %v2198 = vrot.slane %v2185, %v2197
        %2202 = vmatprep.subr.mxu0 %v2182
        %2203 = vmatpush1.msra.mxu0 %v2181
        %2204 = vmatprep.subr.mxu0 %v2179
        %2205 = vmatpush1.msra.mxu0 %v2178
        %2206 = vmatprep.subr.mxu0 %v2176
        %2207 = vmatpush1.msra.mxu0 %v2175
        %2208 = vmatprep.subr.mxu0 %v2173
        %2209 = vmatpush1.msra.mxu0 %v2172
        %2210 = vmatprep.subr.mxu0 %v2170
        %2211 = vmatpush1.msra.mxu0 %v2169
        %2212 = vmatprep.subr.mxu0 %v2167
        %2213 = vmatpush1.msra.mxu0 %v2166
        %2214 = vmatprep.subr.mxu0 %v2164
        %2215 = vmatpush1.msra.mxu0 %v2163
        %2216 = vmatprep.subr.mxu0 %v2161
        %2217 = vmatpush1.msra.mxu0 %v2160
        %2218 = vmatprep.subr.mxu0 %v2158
        %2219 = vmatpush1.msra.mxu0 %v2157
        %2220 = vmatprep.subr.mxu0 %v2155
        %2221 = vmatpush1.msra.mxu0 %v2154
        %2222 = vmatprep.subr.mxu0 %v2152
        %2223 = vmatpush1.msra.mxu0 %v2151
        %2224 = vmatprep.subr.mxu0 %v2149
        %2225 = vmatpush1.msra.mxu0 %v2148
        %2226 = vmatprep.subr.mxu0 %v2146
        %2227 = vmatpush1.msra.mxu0 %v2145
        %2228 = vmatprep.subr.mxu0 %v2143
        %2229 = vmatpush1.msra.mxu0 %v2142
        %2230 = vmatprep.subr.mxu0 %v2140
        %2231 = vmatpush1.msra.mxu0 %v2139
        %2232 = vmatprep.subr.mxu0 %v2137
        %2233 = vmatpush1.msra.mxu0 %v2136
        %2234 = vmatprep.subr.mxu0 0.0
        %2235 = vmatpush2.msra.mxu0 0.0
        %2236 = vmatprep.subr.mxu0 0.0
        %2237 = vmatpush2.msra.mxu0 0.0
        %2238 = vmatprep.subr.mxu0 0.0
        %2239 = vmatpush2.msra.mxu0 0.0
        %2240 = vmatprep.subr.mxu0 0.0
        %2241 = vmatpush2.msra.mxu0 0.0
        %2242 = vmatprep.subr.mxu0 0.0
        %2243 = vmatpush2.msra.mxu0 0.0
        %2244 = vmatprep.subr.mxu0 0.0
        %2245 = vmatpush2.msra.mxu0 0.0
        %2246 = vmatprep.subr.mxu0 0.0
        %2247 = vmatpush2.msra.mxu0 0.0
        %2248 = vmatprep.subr.mxu0 0.0
        %2249 = vmatpush2.msra.mxu0 0.0
        %2250 = vmatprep.subr.mxu0 0.0
        %2251 = vmatpush2.msra.mxu0 0.0
        %2252 = vmatprep.subr.mxu0 0.0
        %2253 = vmatpush2.msra.mxu0 0.0
        %2254 = vmatprep.subr.mxu0 0.0
        %2255 = vmatpush2.msra.mxu0 0.0
        %2256 = vmatprep.subr.mxu0 0.0
        %2257 = vmatpush2.msra.mxu0 0.0
        %2258 = vmatprep.subr.mxu0 0.0
        %2259 = vmatpush2.msra.mxu0 0.0
        %2260 = vmatprep.subr.mxu0 0.0
        %2261 = vmatpush2.msra.mxu0 0.0
        %2262 = vmatprep.subr.mxu0 0.0
        %2263 = vmatpush2.msra.mxu0 0.0
        %2264 = vmatprep.subr.mxu0 0.0
        %2265 = vmatpush2.msra.mxu0 0.0
        %2266 = vmatprep.mubr.f32.mxu0 0.0
        %2267 = vmatmul.mubr.f32.gmra.mxu0 %v2134
        %v2268 = vpop.f32.mrf.mxu0
        %v2269 = vadd.f32 %v2190, %v2268
        %v2270 = vpop.f32.mrf.mxu0
        %v2271 = vadd.f32 %v2194, %v2270
        %2272 = vdwg.mxu0
        %2273 = vmatprep.subr.mxu0 0.0
        %2274 = vmatpush1.msra.mxu0 %v2183
        %2275 = vmatprep.subr.mxu0 0.0
        %2276 = vmatpush1.msra.mxu0 %v2180
        %2277 = vmatprep.subr.mxu0 0.0
        %2278 = vmatpush1.msra.mxu0 %v2177
        %2279 = vmatprep.subr.mxu0 0.0
        %2280 = vmatpush1.msra.mxu0 %v2174
        %2281 = vmatprep.subr.mxu0 0.0
        %2282 = vmatpush1.msra.mxu0 %v2171
        %2283 = vmatprep.subr.mxu0 0.0
        %2284 = vmatpush1.msra.mxu0 %v2168
        %2285 = vmatprep.subr.mxu0 0.0
        %2286 = vmatpush1.msra.mxu0 %v2165
        %2287 = vmatprep.subr.mxu0 0.0
        %2288 = vmatpush1.msra.mxu0 %v2162
        %2289 = vmatprep.subr.mxu0 0.0
        %2290 = vmatpush1.msra.mxu0 %v2159
        %2291 = vmatprep.subr.mxu0 0.0
        %2292 = vmatpush1.msra.mxu0 %v2156
        %2293 = vmatprep.subr.mxu0 0.0
        %2294 = vmatpush1.msra.mxu0 %v2153
        %2295 = vmatprep.subr.mxu0 0.0
        %2296 = vmatpush1.msra.mxu0 %v2150
        %2297 = vmatprep.subr.mxu0 0.0
        %2298 = vmatpush1.msra.mxu0 %v2147
        %2299 = vmatprep.subr.mxu0 0.0
        %2300 = vmatpush1.msra.mxu0 %v2144
        %2301 = vmatprep.subr.mxu0 0.0
        %2302 = vmatpush1.msra.mxu0 %v2141
        %2303 = vmatprep.subr.mxu0 0.0
        %2304 = vmatpush1.msra.mxu0 %v2138
        %2305 = vmatprep.subr.mxu0 0.0
        %2306 = vmatpush2.msra.mxu0 0.0
        %2307 = vmatprep.subr.mxu0 0.0
        %2308 = vmatpush2.msra.mxu0 0.0
        %2309 = vmatprep.subr.mxu0 0.0
        %2310 = vmatpush2.msra.mxu0 0.0
        %2311 = vmatprep.subr.mxu0 0.0
        %2312 = vmatpush2.msra.mxu0 0.0
        %2313 = vmatprep.subr.mxu0 0.0
        %2314 = vmatpush2.msra.mxu0 0.0
        %2315 = vmatprep.subr.mxu0 0.0
        %2316 = vmatpush2.msra.mxu0 0.0
        %2317 = vmatprep.subr.mxu0 0.0
        %2318 = vmatpush2.msra.mxu0 0.0
        %2319 = vmatprep.subr.mxu0 0.0
        %2320 = vmatpush2.msra.mxu0 0.0
        %2321 = vmatprep.subr.mxu0 0.0
        %2322 = vmatpush2.msra.mxu0 0.0
        %2323 = vmatprep.subr.mxu0 0.0
        %2324 = vmatpush2.msra.mxu0 0.0
        %2325 = vmatprep.subr.mxu0 0.0
        %2326 = vmatpush2.msra.mxu0 0.0
        %2327 = vmatprep.subr.mxu0 0.0
        %2328 = vmatpush2.msra.mxu0 0.0
        %2329 = vmatprep.subr.mxu0 0.0
        %2330 = vmatpush2.msra.mxu0 0.0
        %2331 = vmatprep.subr.mxu0 0.0
        %2332 = vmatpush2.msra.mxu0 0.0
        %2333 = vmatprep.subr.mxu0 0.0
        %2334 = vmatpush2.msra.mxu0 0.0
        %2335 = vmatprep.subr.mxu0 0.0
        %2336 = vmatpush2.msra.mxu0 0.0
        %2337 = vmatprep.mubr.f32.mxu0 0.0
        %2338 = vmatmul.mubr.f32.gmra.mxu0 %v2134
        %v2339 = vpop.f32.mrf.mxu0
        %v2340 = vadd.f32 %v2198, %v2339
        %v2341 = vpop.f32.mrf.mxu0
        %2342 = vdwg.mxu0
        %v2344 = vsel %vm1077, %v2269, 0
        %v2347 = vsel %vm1077, %v2271, 0
        %2349 = vmatprep.subr.mxu0 0.0
        %2350 = vmatpush1.xpose.msra.mxu0 0.0
        %2351 = vmatprep.subr.mxu0 0.0
        %2352 = vmatpush1.xpose.msra.mxu0 0.0
        %2353 = vmatprep.subr.mxu0 0.0
        %2354 = vmatpush1.xpose.msra.mxu0 0.0
        %2355 = vmatprep.subr.mxu0 0.0
        %2356 = vmatpush1.xpose.msra.mxu0 0.0
        %2357 = vmatprep.subr.mxu0 0.0
        %2358 = vmatpush1.xpose.msra.mxu0 0.0
        %2359 = vmatprep.subr.mxu0 0.0
        %2360 = vmatpush1.xpose.msra.mxu0 0.0
        %2361 = vmatprep.subr.mxu0 0.0
        %2362 = vmatpush1.xpose.msra.mxu0 0.0
        %2363 = vmatprep.subr.mxu0 0.0
        %2364 = vmatpush1.xpose.msra.mxu0 0.0
        %2365 = vmatprep.subr.mxu0 0.0
        %2366 = vmatpush1.xpose.msra.mxu0 0.0
        %2367 = vmatprep.subr.mxu0 0.0
        %2368 = vmatpush1.xpose.msra.mxu0 0.0
        %2369 = vmatprep.subr.mxu0 0.0
        %2370 = vmatpush1.xpose.msra.mxu0 0.0
        %2371 = vmatprep.subr.mxu0 0.0
        %2372 = vmatpush1.xpose.msra.mxu0 0.0
        %2373 = vmatprep.subr.mxu0 0.0
        %2374 = vmatpush1.xpose.msra.mxu0 0.0
        %2375 = vmatprep.subr.mxu0 0.0
        %2376 = vmatpush1.xpose.msra.mxu0 0.0
        %2377 = vmatprep.subr.mxu0 0.0
        %2378 = vmatpush1.xpose.msra.mxu0 0.0
        %2379 = vmatprep.subr.mxu0 0.0
        %2380 = vmatpush1.xpose.msra.mxu0 %v2347
        %2381 = vmatprep.subr.mxu0 0.0
        %2382 = vmatpush2.xpose.msra.mxu0 0.0
        %2383 = vmatprep.subr.mxu0 0.0
        %2384 = vmatpush2.xpose.msra.mxu0 0.0
        %2385 = vmatprep.subr.mxu0 0.0
        %2386 = vmatpush2.xpose.msra.mxu0 0.0
        %2387 = vmatprep.subr.mxu0 0.0
        %2388 = vmatpush2.xpose.msra.mxu0 0.0
        %2389 = vmatprep.subr.mxu0 0.0
        %2390 = vmatpush2.xpose.msra.mxu0 0.0
        %2391 = vmatprep.subr.mxu0 0.0
        %2392 = vmatpush2.xpose.msra.mxu0 0.0
        %2393 = vmatprep.subr.mxu0 0.0
        %2394 = vmatpush2.xpose.msra.mxu0 0.0
        %2395 = vmatprep.subr.mxu0 0.0
        %2396 = vmatpush2.xpose.msra.mxu0 0.0
        %2397 = vmatprep.subr.mxu0 0.0
        %2398 = vmatpush2.xpose.msra.mxu0 0.0
        %2399 = vmatprep.subr.mxu0 0.0
        %2400 = vmatpush2.xpose.msra.mxu0 0.0
        %2401 = vmatprep.subr.mxu0 0.0
        %2402 = vmatpush2.xpose.msra.mxu0 0.0
        %2403 = vmatprep.subr.mxu0 0.0
        %2404 = vmatpush2.xpose.msra.mxu0 0.0
        %2405 = vmatprep.subr.mxu0 0.0
        %2406 = vmatpush2.xpose.msra.mxu0 0.0
        %2407 = vmatprep.subr.mxu0 0.0
        %2408 = vmatpush2.xpose.msra.mxu0 0.0
        %2409 = vmatprep.subr.mxu0 0.0
        %2410 = vmatpush2.xpose.msra.mxu0 0.0
        %2411 = vmatprep.subr.mxu0 0.0
        %2412 = vmatpush2.xpose.msra.mxu0 0.0
        %2413 = vmatprep.mubr.f32.mxu0 0.0
        %2414 = vmatmul.mubr.f32.gmra.mxu0 %v2344
        %v2415 = vpop.f32.mrf.mxu0
        %v2416 = vadd.f32 0.0, %v2415
        %v2417 = vpop.f32.mrf.mxu0
        %2418 = vdwg.mxu0
        %v2419 = vmul.f32 %v2416, 0.17677669
        %v2420 = vsel %vm1155, %v2419, -inf
        %2421 = vmax.xlane.f32.xlu0 %v2420
        %v2422 = vpop.xlane.xlu0 %2421
        %v2423 = vsub.f32 %v2419, %v2422
        %v2424 = vmul.f32 %v2423, 1.442695
        %v2425 = vpow.pop %v2424
        %v2426 = vsel %vm1155, %v2425, 0.0
        %2427 = vadd.xlane.f32.xlu0 %v2426
        %v2428 = vpop.xlane.xlu0 %2427
        %v2429 = vrcp.pop %v2428
        %v2430 = vmul.f32 %v2425, %v2429
        %v2432 = vsel %vm1155, %v2430, 0
        %2434 = vmatprep.subr.mxu0 0.0
        %2435 = vmatpush1.msra.mxu0 0.0
        %2436 = vmatprep.subr.mxu0 0.0
        %2437 = vmatpush1.msra.mxu0 0.0
        %2438 = vmatprep.subr.mxu0 0.0
        %2439 = vmatpush1.msra.mxu0 0.0
        %2440 = vmatprep.subr.mxu0 0.0
        %2441 = vmatpush1.msra.mxu0 0.0
        %2442 = vmatprep.subr.mxu0 0.0
        %2443 = vmatpush1.msra.mxu0 0.0
        %2444 = vmatprep.subr.mxu0 0.0
        %2445 = vmatpush1.msra.mxu0 0.0
        %2446 = vmatprep.subr.mxu0 0.0
        %2447 = vmatpush1.msra.mxu0 0.0
        %2448 = vmatprep.subr.mxu0 0.0
        %2449 = vmatpush1.msra.mxu0 0.0
        %2450 = vmatprep.subr.mxu0 0.0
        %2451 = vmatpush1.msra.mxu0 0.0
        %2452 = vmatprep.subr.mxu0 0.0
        %2453 = vmatpush1.msra.mxu0 0.0
        %2454 = vmatprep.subr.mxu0 0.0
        %2455 = vmatpush1.msra.mxu0 0.0
        %2456 = vmatprep.subr.mxu0 0.0
        %2457 = vmatpush1.msra.mxu0 0.0
        %2458 = vmatprep.subr.mxu0 0.0
        %2459 = vmatpush1.msra.mxu0 0.0
        %2460 = vmatprep.subr.mxu0 0.0
        %2461 = vmatpush1.msra.mxu0 0.0
        %2462 = vmatprep.subr.mxu0 0.0
        %2463 = vmatpush1.msra.mxu0 0.0
        %2464 = vmatprep.subr.mxu0 0.0
        %2465 = vmatpush1.msra.mxu0 %v2340
        %2466 = vmatprep.subr.mxu0 0.0
        %2467 = vmatpush2.msra.mxu0 0.0
        %2468 = vmatprep.subr.mxu0 0.0
        %2469 = vmatpush2.msra.mxu0 0.0
        %2470 = vmatprep.subr.mxu0 0.0
        %2471 = vmatpush2.msra.mxu0 0.0
        %2472 = vmatprep.subr.mxu0 0.0
        %2473 = vmatpush2.msra.mxu0 0.0
        %2474 = vmatprep.subr.mxu0 0.0
        %2475 = vmatpush2.msra.mxu0 0.0
        %2476 = vmatprep.subr.mxu0 0.0
        %2477 = vmatpush2.msra.mxu0 0.0
        %2478 = vmatprep.subr.mxu0 0.0
        %2479 = vmatpush2.msra.mxu0 0.0
        %2480 = vmatprep.subr.mxu0 0.0
        %2481 = vmatpush2.msra.mxu0 0.0
        %2482 = vmatprep.subr.mxu0 0.0
        %2483 = vmatpush2.msra.mxu0 0.0
        %2484 = vmatprep.subr.mxu0 0.0
        %2485 = vmatpush2.msra.mxu0 0.0
        %2486 = vmatprep.subr.mxu0 0.0
        %2487 = vmatpush2.msra.mxu0 0.0
        %2488 = vmatprep.subr.mxu0 0.0
        %2489 = vmatpush2.msra.mxu0 0.0
        %2490 = vmatprep.subr.mxu0 0.0
        %2491 = vmatpush2.msra.mxu0 0.0
        %2492 = vmatprep.subr.mxu0 0.0
        %2493 = vmatpush2.msra.mxu0 0.0
        %2494 = vmatprep.subr.mxu0 0.0
        %2495 = vmatpush2.msra.mxu0 0.0
        %2496 = vmatprep.subr.mxu0 0.0
        %2497 = vmatpush2.msra.mxu0 0.0
        %2498 = vmatprep.mubr.f32.mxu0 0.0
        %2499 = vmatmul.mubr.f32.gmra.mxu0 %v2432
        %v2500 = vpop.f32.mrf.mxu0
        %v2501 = vadd.f32 0.0, %v2500
        %v2502 = vpop.f32.mrf.mxu0
        %2503 = vdwg.mxu0
        %2504 = vst.msk [vmem:[#allocation2] sm:$0xff] %vm1077, %v2501
        %2505 = vrot.lane.b32.xlu0 %v2269, 96
        %v2506 = vpop.permute.xlu0 %2505
        %2507 = vrot.lane.b32.xlu0 %v2271, 96
        %v2508 = vpop.permute.xlu0 %2507
        %v2509 = vsel %vm1077, %v2506, 0
        %v2511 = vsel %vm1077, %v2508, 0
        %2513 = vmatprep.subr.mxu0 0.0
        %2514 = vmatpush1.xpose.msra.mxu0 0.0
        %2515 = vmatprep.subr.mxu0 0.0
        %2516 = vmatpush1.xpose.msra.mxu0 0.0
        %2517 = vmatprep.subr.mxu0 0.0
        %2518 = vmatpush1.xpose.msra.mxu0 0.0
        %2519 = vmatprep.subr.mxu0 0.0
        %2520 = vmatpush1.xpose.msra.mxu0 0.0
        %2521 = vmatprep.subr.mxu0 0.0
        %2522 = vmatpush1.xpose.msra.mxu0 0.0
        %2523 = vmatprep.subr.mxu0 0.0
        %2524 = vmatpush1.xpose.msra.mxu0 0.0
        %2525 = vmatprep.subr.mxu0 0.0
        %2526 = vmatpush1.xpose.msra.mxu0 0.0
        %2527 = vmatprep.subr.mxu0 0.0
        %2528 = vmatpush1.xpose.msra.mxu0 0.0
        %2529 = vmatprep.subr.mxu0 0.0
        %2530 = vmatpush1.xpose.msra.mxu0 0.0
        %2531 = vmatprep.subr.mxu0 0.0
        %2532 = vmatpush1.xpose.msra.mxu0 0.0
        %2533 = vmatprep.subr.mxu0 0.0
        %2534 = vmatpush1.xpose.msra.mxu0 0.0
        %2535 = vmatprep.subr.mxu0 0.0
        %2536 = vmatpush1.xpose.msra.mxu0 0.0
        %2537 = vmatprep.subr.mxu0 0.0
        %2538 = vmatpush1.xpose.msra.mxu0 0.0
        %2539 = vmatprep.subr.mxu0 0.0
        %2540 = vmatpush1.xpose.msra.mxu0 0.0
        %2541 = vmatprep.subr.mxu0 0.0
        %2542 = vmatpush1.xpose.msra.mxu0 0.0
        %2543 = vmatprep.subr.mxu0 0.0
        %2544 = vmatpush1.xpose.msra.mxu0 %v2511
        %2545 = vmatprep.subr.mxu0 0.0
        %2546 = vmatpush2.xpose.msra.mxu0 0.0
        %2547 = vmatprep.subr.mxu0 0.0
        %2548 = vmatpush2.xpose.msra.mxu0 0.0
        %2549 = vmatprep.subr.mxu0 0.0
        %2550 = vmatpush2.xpose.msra.mxu0 0.0
        %2551 = vmatprep.subr.mxu0 0.0
        %2552 = vmatpush2.xpose.msra.mxu0 0.0
        %2553 = vmatprep.subr.mxu0 0.0
        %2554 = vmatpush2.xpose.msra.mxu0 0.0
        %2555 = vmatprep.subr.mxu0 0.0
        %2556 = vmatpush2.xpose.msra.mxu0 0.0
        %2557 = vmatprep.subr.mxu0 0.0
        %2558 = vmatpush2.xpose.msra.mxu0 0.0
        %2559 = vmatprep.subr.mxu0 0.0
        %2560 = vmatpush2.xpose.msra.mxu0 0.0
        %2561 = vmatprep.subr.mxu0 0.0
        %2562 = vmatpush2.xpose.msra.mxu0 0.0
        %2563 = vmatprep.subr.mxu0 0.0
        %2564 = vmatpush2.xpose.msra.mxu0 0.0
        %2565 = vmatprep.subr.mxu0 0.0
        %2566 = vmatpush2.xpose.msra.mxu0 0.0
        %2567 = vmatprep.subr.mxu0 0.0
        %2568 = vmatpush2.xpose.msra.mxu0 0.0
        %2569 = vmatprep.subr.mxu0 0.0
        %2570 = vmatpush2.xpose.msra.mxu0 0.0
        %2571 = vmatprep.subr.mxu0 0.0
        %2572 = vmatpush2.xpose.msra.mxu0 0.0
        %2573 = vmatprep.subr.mxu0 0.0
        %2574 = vmatpush2.xpose.msra.mxu0 0.0
        %2575 = vmatprep.subr.mxu0 0.0
        %2576 = vmatpush2.xpose.msra.mxu0 0.0
        %2577 = vmatprep.mubr.f32.mxu0 0.0
        %2578 = vmatmul.mubr.f32.gmra.mxu0 %v2509
        %v2579 = vpop.f32.mrf.mxu0
        %v2580 = vadd.f32 0.0, %v2579
        %v2581 = vpop.f32.mrf.mxu0
        %2582 = vdwg.mxu0
        %v2583 = vmul.f32 %v2580, 0.17677669
        %v2584 = vsel %vm1155, %v2583, -inf
        %2585 = vmax.xlane.f32.xlu0 %v2584
        %v2586 = vpop.xlane.xlu0 %2585
        %v2587 = vsub.f32 %v2583, %v2586
        %v2588 = vmul.f32 %v2587, 1.442695
        %v2589 = vpow.pop %v2588
        %v2590 = vsel %vm1155, %v2589, 0.0
        %2591 = vadd.xlane.f32.xlu0 %v2590
        %v2592 = vpop.xlane.xlu0 %2591
        %v2593 = vrcp.pop %v2592
        %v2594 = vmul.f32 %v2589, %v2593
        %2596 = vrot.lane.b32.xlu0 %v2340, 96
        %v2597 = vpop.permute.xlu0 %2596
        %v2600 = vsel %vm1155, %v2594, 0
        %2602 = vmatprep.subr.mxu0 0.0
        %2603 = vmatpush1.msra.mxu0 0.0
        %2604 = vmatprep.subr.mxu0 0.0
        %2605 = vmatpush1.msra.mxu0 0.0
        %2606 = vmatprep.subr.mxu0 0.0
        %2607 = vmatpush1.msra.mxu0 0.0
        %2608 = vmatprep.subr.mxu0 0.0
        %2609 = vmatpush1.msra.mxu0 0.0
        %2610 = vmatprep.subr.mxu0 0.0
        %2611 = vmatpush1.msra.mxu0 0.0
        %2612 = vmatprep.subr.mxu0 0.0
        %2613 = vmatpush1.msra.mxu0 0.0
        %2614 = vmatprep.subr.mxu0 0.0
        %2615 = vmatpush1.msra.mxu0 0.0
        %2616 = vmatprep.subr.mxu0 0.0
        %2617 = vmatpush1.msra.mxu0 0.0
        %2618 = vmatprep.subr.mxu0 0.0
        %2619 = vmatpush1.msra.mxu0 0.0
        %2620 = vmatprep.subr.mxu0 0.0
        %2621 = vmatpush1.msra.mxu0 0.0
        %2622 = vmatprep.subr.mxu0 0.0
        %2623 = vmatpush1.msra.mxu0 0.0
        %2624 = vmatprep.subr.mxu0 0.0
        %2625 = vmatpush1.msra.mxu0 0.0
        %2626 = vmatprep.subr.mxu0 0.0
        %2627 = vmatpush1.msra.mxu0 0.0
        %2628 = vmatprep.subr.mxu0 0.0
        %2629 = vmatpush1.msra.mxu0 0.0
        %2630 = vmatprep.subr.mxu0 0.0
        %2631 = vmatpush1.msra.mxu0 0.0
        %2632 = vmatprep.subr.mxu0 0.0
        %2633 = vmatpush1.msra.mxu0 %v2597
        %2634 = vmatprep.subr.mxu0 0.0
        %2635 = vmatpush2.msra.mxu0 0.0
        %2636 = vmatprep.subr.mxu0 0.0
        %2637 = vmatpush2.msra.mxu0 0.0
        %2638 = vmatprep.subr.mxu0 0.0
        %2639 = vmatpush2.msra.mxu0 0.0
        %2640 = vmatprep.subr.mxu0 0.0
        %2641 = vmatpush2.msra.mxu0 0.0
        %2642 = vmatprep.subr.mxu0 0.0
        %2643 = vmatpush2.msra.mxu0 0.0
        %2644 = vmatprep.subr.mxu0 0.0
        %2645 = vmatpush2.msra.mxu0 0.0
        %2646 = vmatprep.subr.mxu0 0.0
        %2647 = vmatpush2.msra.mxu0 0.0
        %2648 = vmatprep.subr.mxu0 0.0
        %2649 = vmatpush2.msra.mxu0 0.0
        %2650 = vmatprep.subr.mxu0 0.0
        %2651 = vmatpush2.msra.mxu0 0.0
        %2652 = vmatprep.subr.mxu0 0.0
        %2653 = vmatpush2.msra.mxu0 0.0
        %2654 = vmatprep.subr.mxu0 0.0
        %2655 = vmatpush2.msra.mxu0 0.0
        %2656 = vmatprep.subr.mxu0 0.0
        %2657 = vmatpush2.msra.mxu0 0.0
        %2658 = vmatprep.subr.mxu0 0.0
        %2659 = vmatpush2.msra.mxu0 0.0
        %2660 = vmatprep.subr.mxu0 0.0
        %2661 = vmatpush2.msra.mxu0 0.0
        %2662 = vmatprep.subr.mxu0 0.0
        %2663 = vmatpush2.msra.mxu0 0.0
        %2664 = vmatprep.subr.mxu0 0.0
        %2665 = vmatpush2.msra.mxu0 0.0
        %2666 = vmatprep.mubr.f32.mxu0 0.0
        %2667 = vmatmul.mubr.f32.gmra.mxu0 %v2600
        %v2668 = vpop.f32.mrf.mxu0
        %v2669 = vadd.f32 0.0, %v2668
        %v2670 = vpop.f32.mrf.mxu0
        %2671 = vdwg.mxu0
        %2673 = vrot.lane.b32.xlu0 %v2669, 32
        %v2674 = vpop.permute.xlu0 %2673
        %2676 = vst.msk [vmem:[#allocation2] sm:$0xff] %vm1412, %v2674
        %2677 = vrot.lane.b32.xlu0 %v2269, 64
        %v2678 = vpop.permute.xlu0 %2677
        %2679 = vrot.lane.b32.xlu0 %v2271, 64
        %v2680 = vpop.permute.xlu0 %2679
        %v2681 = vsel %vm1077, %v2678, 0
        %v2683 = vsel %vm1077, %v2680, 0
        %2685 = vmatprep.subr.mxu0 0.0
        %2686 = vmatpush1.xpose.msra.mxu0 0.0
        %2687 = vmatprep.subr.mxu0 0.0
        %2688 = vmatpush1.xpose.msra.mxu0 0.0
        %2689 = vmatprep.subr.mxu0 0.0
        %2690 = vmatpush1.xpose.msra.mxu0 0.0
        %2691 = vmatprep.subr.mxu0 0.0
        %2692 = vmatpush1.xpose.msra.mxu0 0.0
        %2693 = vmatprep.subr.mxu0 0.0
        %2694 = vmatpush1.xpose.msra.mxu0 0.0
        %2695 = vmatprep.subr.mxu0 0.0
        %2696 = vmatpush1.xpose.msra.mxu0 0.0
        %2697 = vmatprep.subr.mxu0 0.0
        %2698 = vmatpush1.xpose.msra.mxu0 0.0
        %2699 = vmatprep.subr.mxu0 0.0
        %2700 = vmatpush1.xpose.msra.mxu0 0.0
        %2701 = vmatprep.subr.mxu0 0.0
        %2702 = vmatpush1.xpose.msra.mxu0 0.0
        %2703 = vmatprep.subr.mxu0 0.0
        %2704 = vmatpush1.xpose.msra.mxu0 0.0
        %2705 = vmatprep.subr.mxu0 0.0
        %2706 = vmatpush1.xpose.msra.mxu0 0.0
        %2707 = vmatprep.subr.mxu0 0.0
        %2708 = vmatpush1.xpose.msra.mxu0 0.0
        %2709 = vmatprep.subr.mxu0 0.0
        %2710 = vmatpush1.xpose.msra.mxu0 0.0
        %2711 = vmatprep.subr.mxu0 0.0
        %2712 = vmatpush1.xpose.msra.mxu0 0.0
        %2713 = vmatprep.subr.mxu0 0.0
        %2714 = vmatpush1.xpose.msra.mxu0 0.0
        %2715 = vmatprep.subr.mxu0 0.0
        %2716 = vmatpush1.xpose.msra.mxu0 %v2683
        %2717 = vmatprep.subr.mxu0 0.0
        %2718 = vmatpush2.xpose.msra.mxu0 0.0
        %2719 = vmatprep.subr.mxu0 0.0
        %2720 = vmatpush2.xpose.msra.mxu0 0.0
        %2721 = vmatprep.subr.mxu0 0.0
        %2722 = vmatpush2.xpose.msra.mxu0 0.0
        %2723 = vmatprep.subr.mxu0 0.0
        %2724 = vmatpush2.xpose.msra.mxu0 0.0
        %2725 = vmatprep.subr.mxu0 0.0
        %2726 = vmatpush2.xpose.msra.mxu0 0.0
        %2727 = vmatprep.subr.mxu0 0.0
        %2728 = vmatpush2.xpose.msra.mxu0 0.0
        %2729 = vmatprep.subr.mxu0 0.0
        %2730 = vmatpush2.xpose.msra.mxu0 0.0
        %2731 = vmatprep.subr.mxu0 0.0
        %2732 = vmatpush2.xpose.msra.mxu0 0.0
        %2733 = vmatprep.subr.mxu0 0.0
        %2734 = vmatpush2.xpose.msra.mxu0 0.0
        %2735 = vmatprep.subr.mxu0 0.0
        %2736 = vmatpush2.xpose.msra.mxu0 0.0
        %2737 = vmatprep.subr.mxu0 0.0
        %2738 = vmatpush2.xpose.msra.mxu0 0.0
        %2739 = vmatprep.subr.mxu0 0.0
        %2740 = vmatpush2.xpose.msra.mxu0 0.0
        %2741 = vmatprep.subr.mxu0 0.0
        %2742 = vmatpush2.xpose.msra.mxu0 0.0
        %2743 = vmatprep.subr.mxu0 0.0
        %2744 = vmatpush2.xpose.msra.mxu0 0.0
        %2745 = vmatprep.subr.mxu0 0.0
        %2746 = vmatpush2.xpose.msra.mxu0 0.0
        %2747 = vmatprep.subr.mxu0 0.0
        %2748 = vmatpush2.xpose.msra.mxu0 0.0
        %2749 = vmatprep.mubr.f32.mxu0 0.0
        %2750 = vmatmul.mubr.f32.gmra.mxu0 %v2681
        %v2751 = vpop.f32.mrf.mxu0
        %v2752 = vadd.f32 0.0, %v2751
        %v2753 = vpop.f32.mrf.mxu0
        %2754 = vdwg.mxu0
        %v2755 = vmul.f32 %v2752, 0.17677669
        %v2756 = vsel %vm1155, %v2755, -inf
        %2757 = vmax.xlane.f32.xlu0 %v2756
        %v2758 = vpop.xlane.xlu0 %2757
        %v2759 = vsub.f32 %v2755, %v2758
        %v2760 = vmul.f32 %v2759, 1.442695
        %v2761 = vpow.pop %v2760
        %v2762 = vsel %vm1155, %v2761, 0.0
        %2763 = vadd.xlane.f32.xlu0 %v2762
        %v2764 = vpop.xlane.xlu0 %2763
        %v2765 = vrcp.pop %v2764
        %v2766 = vmul.f32 %v2761, %v2765
        %2767 = vrot.lane.b32.xlu0 %v2340, 64
        %v2768 = vpop.permute.xlu0 %2767
        %v2771 = vsel %vm1155, %v2766, 0
        %2773 = vmatprep.subr.mxu0 0.0
        %2774 = vmatpush1.msra.mxu0 0.0
        %2775 = vmatprep.subr.mxu0 0.0
        %2776 = vmatpush1.msra.mxu0 0.0
        %2777 = vmatprep.subr.mxu0 0.0
        %2778 = vmatpush1.msra.mxu0 0.0
        %2779 = vmatprep.subr.mxu0 0.0
        %2780 = vmatpush1.msra.mxu0 0.0
        %2781 = vmatprep.subr.mxu0 0.0
        %2782 = vmatpush1.msra.mxu0 0.0
        %2783 = vmatprep.subr.mxu0 0.0
        %2784 = vmatpush1.msra.mxu0 0.0
        %2785 = vmatprep.subr.mxu0 0.0
        %2786 = vmatpush1.msra.mxu0 0.0
        %2787 = vmatprep.subr.mxu0 0.0
        %2788 = vmatpush1.msra.mxu0 0.0
        %2789 = vmatprep.subr.mxu0 0.0
        %2790 = vmatpush1.msra.mxu0 0.0
        %2791 = vmatprep.subr.mxu0 0.0
        %2792 = vmatpush1.msra.mxu0 0.0
        %2793 = vmatprep.subr.mxu0 0.0
        %2794 = vmatpush1.msra.mxu0 0.0
        %2795 = vmatprep.subr.mxu0 0.0
        %2796 = vmatpush1.msra.mxu0 0.0
        %2797 = vmatprep.subr.mxu0 0.0
        %2798 = vmatpush1.msra.mxu0 0.0
        %2799 = vmatprep.subr.mxu0 0.0
        %2800 = vmatpush1.msra.mxu0 0.0
        %2801 = vmatprep.subr.mxu0 0.0
        %2802 = vmatpush1.msra.mxu0 0.0
        %2803 = vmatprep.subr.mxu0 0.0
        %2804 = vmatpush1.msra.mxu0 %v2768
        %2805 = vmatprep.subr.mxu0 0.0
        %2806 = vmatpush2.msra.mxu0 0.0
        %2807 = vmatprep.subr.mxu0 0.0
        %2808 = vmatpush2.msra.mxu0 0.0
        %2809 = vmatprep.subr.mxu0 0.0
        %2810 = vmatpush2.msra.mxu0 0.0
        %2811 = vmatprep.subr.mxu0 0.0
        %2812 = vmatpush2.msra.mxu0 0.0
        %2813 = vmatprep.subr.mxu0 0.0
        %2814 = vmatpush2.msra.mxu0 0.0
        %2815 = vmatprep.subr.mxu0 0.0
        %2816 = vmatpush2.msra.mxu0 0.0
        %2817 = vmatprep.subr.mxu0 0.0
        %2818 = vmatpush2.msra.mxu0 0.0
        %2819 = vmatprep.subr.mxu0 0.0
        %2820 = vmatpush2.msra.mxu0 0.0
        %2821 = vmatprep.subr.mxu0 0.0
        %2822 = vmatpush2.msra.mxu0 0.0
        %2823 = vmatprep.subr.mxu0 0.0
        %2824 = vmatpush2.msra.mxu0 0.0
        %2825 = vmatprep.subr.mxu0 0.0
        %2826 = vmatpush2.msra.mxu0 0.0
        %2827 = vmatprep.subr.mxu0 0.0
        %2828 = vmatpush2.msra.mxu0 0.0
        %2829 = vmatprep.subr.mxu0 0.0
        %2830 = vmatpush2.msra.mxu0 0.0
        %2831 = vmatprep.subr.mxu0 0.0
        %2832 = vmatpush2.msra.mxu0 0.0
        %2833 = vmatprep.subr.mxu0 0.0
        %2834 = vmatpush2.msra.mxu0 0.0
        %2835 = vmatprep.subr.mxu0 0.0
        %2836 = vmatpush2.msra.mxu0 0.0
        %2837 = vmatprep.mubr.f32.mxu0 0.0
        %2838 = vmatmul.mubr.f32.gmra.mxu0 %v2771
        %v2839 = vpop.f32.mrf.mxu0
        %v2840 = vadd.f32 0.0, %v2839
        %v2841 = vpop.f32.mrf.mxu0
        %2842 = vdwg.mxu0
        %2844 = vrot.lane.b32.xlu0 %v2840, 64
        %v2845 = vpop.permute.xlu0 %2844
        %2847 = vst.msk [vmem:[#allocation2] sm:$0xff] %vm1584, %v2845
        %2848 = vrot.lane.b32.xlu0 %v2269, 32
        %v2849 = vpop.permute.xlu0 %2848
        %2850 = vrot.lane.b32.xlu0 %v2271, 32
        %v2851 = vpop.permute.xlu0 %2850
        %v2852 = vsel %vm1077, %v2849, 0
        %v2854 = vsel %vm1077, %v2851, 0
        %2856 = vmatprep.subr.mxu0 0.0
        %2857 = vmatpush1.xpose.msra.mxu0 0.0
        %2858 = vmatprep.subr.mxu0 0.0
        %2859 = vmatpush1.xpose.msra.mxu0 0.0
        %2860 = vmatprep.subr.mxu0 0.0
        %2861 = vmatpush1.xpose.msra.mxu0 0.0
        %2862 = vmatprep.subr.mxu0 0.0
        %2863 = vmatpush1.xpose.msra.mxu0 0.0
        %2864 = vmatprep.subr.mxu0 0.0
        %2865 = vmatpush1.xpose.msra.mxu0 0.0
        %2866 = vmatprep.subr.mxu0 0.0
        %2867 = vmatpush1.xpose.msra.mxu0 0.0
        %2868 = vmatprep.subr.mxu0 0.0
        %2869 = vmatpush1.xpose.msra.mxu0 0.0
        %2870 = vmatprep.subr.mxu0 0.0
        %2871 = vmatpush1.xpose.msra.mxu0 0.0
        %2872 = vmatprep.subr.mxu0 0.0
        %2873 = vmatpush1.xpose.msra.mxu0 0.0
        %2874 = vmatprep.subr.mxu0 0.0
        %2875 = vmatpush1.xpose.msra.mxu0 0.0
        %2876 = vmatprep.subr.mxu0 0.0
        %2877 = vmatpush1.xpose.msra.mxu0 0.0
        %2878 = vmatprep.subr.mxu0 0.0
        %2879 = vmatpush1.xpose.msra.mxu0 0.0
        %2880 = vmatprep.subr.mxu0 0.0
        %2881 = vmatpush1.xpose.msra.mxu0 0.0
        %2882 = vmatprep.subr.mxu0 0.0
        %2883 = vmatpush1.xpose.msra.mxu0 0.0
        %2884 = vmatprep.subr.mxu0 0.0
        %2885 = vmatpush1.xpose.msra.mxu0 0.0
        %2886 = vmatprep.subr.mxu0 0.0
        %2887 = vmatpush1.xpose.msra.mxu0 %v2854
        %2888 = vmatprep.subr.mxu0 0.0
        %2889 = vmatpush2.xpose.msra.mxu0 0.0
        %2890 = vmatprep.subr.mxu0 0.0
        %2891 = vmatpush2.xpose.msra.mxu0 0.0
        %2892 = vmatprep.subr.mxu0 0.0
        %2893 = vmatpush2.xpose.msra.mxu0 0.0
        %2894 = vmatprep.subr.mxu0 0.0
        %2895 = vmatpush2.xpose.msra.mxu0 0.0
        %2896 = vmatprep.subr.mxu0 0.0
        %2897 = vmatpush2.xpose.msra.mxu0 0.0
        %2898 = vmatprep.subr.mxu0 0.0
        %2899 = vmatpush2.xpose.msra.mxu0 0.0
        %2900 = vmatprep.subr.mxu0 0.0
        %2901 = vmatpush2.xpose.msra.mxu0 0.0
        %2902 = vmatprep.subr.mxu0 0.0
        %2903 = vmatpush2.xpose.msra.mxu0 0.0
        %2904 = vmatprep.subr.mxu0 0.0
        %2905 = vmatpush2.xpose.msra.mxu0 0.0
        %2906 = vmatprep.subr.mxu0 0.0
        %2907 = vmatpush2.xpose.msra.mxu0 0.0
        %2908 = vmatprep.subr.mxu0 0.0
        %2909 = vmatpush2.xpose.msra.mxu0 0.0
        %2910 = vmatprep.subr.mxu0 0.0
        %2911 = vmatpush2.xpose.msra.mxu0 0.0
        %2912 = vmatprep.subr.mxu0 0.0
        %2913 = vmatpush2.xpose.msra.mxu0 0.0
        %2914 = vmatprep.subr.mxu0 0.0
        %2915 = vmatpush2.xpose.msra.mxu0 0.0
        %2916 = vmatprep.subr.mxu0 0.0
        %2917 = vmatpush2.xpose.msra.mxu0 0.0
        %2918 = vmatprep.subr.mxu0 0.0
        %2919 = vmatpush2.xpose.msra.mxu0 0.0
        %2920 = vmatprep.mubr.f32.mxu0 0.0
        %2921 = vmatmul.mubr.f32.gmra.mxu0 %v2852
        %v2922 = vpop.f32.mrf.mxu0
        %v2923 = vadd.f32 0.0, %v2922
        %v2924 = vpop.f32.mrf.mxu0
        %2925 = vdwg.mxu0
        %v2926 = vmul.f32 %v2923, 0.17677669
        %v2927 = vsel %vm1155, %v2926, -inf
        %2928 = vmax.xlane.f32.xlu0 %v2927
        %v2929 = vpop.xlane.xlu0 %2928
        %v2930 = vsub.f32 %v2926, %v2929
        %v2931 = vmul.f32 %v2930, 1.442695
        %v2932 = vpow.pop %v2931
        %v2933 = vsel %vm1155, %v2932, 0.0
        %2934 = vadd.xlane.f32.xlu0 %v2933
        %v2935 = vpop.xlane.xlu0 %2934
        %v2936 = vrcp.pop %v2935
        %v2937 = vmul.f32 %v2932, %v2936
        %2938 = vrot.lane.b32.xlu0 %v2340, 32
        %v2939 = vpop.permute.xlu0 %2938
        %v2942 = vsel %vm1155, %v2937, 0
        %2944 = vmatprep.subr.mxu0 0.0
        %2945 = vmatpush1.msra.mxu0 0.0
        %2946 = vmatprep.subr.mxu0 0.0
        %2947 = vmatpush1.msra.mxu0 0.0
        %2948 = vmatprep.subr.mxu0 0.0
        %2949 = vmatpush1.msra.mxu0 0.0
        %2950 = vmatprep.subr.mxu0 0.0
        %2951 = vmatpush1.msra.mxu0 0.0
        %2952 = vmatprep.subr.mxu0 0.0
        %2953 = vmatpush1.msra.mxu0 0.0
        %2954 = vmatprep.subr.mxu0 0.0
        %2955 = vmatpush1.msra.mxu0 0.0
        %2956 = vmatprep.subr.mxu0 0.0
        %2957 = vmatpush1.msra.mxu0 0.0
        %2958 = vmatprep.subr.mxu0 0.0
        %2959 = vmatpush1.msra.mxu0 0.0
        %2960 = vmatprep.subr.mxu0 0.0
        %2961 = vmatpush1.msra.mxu0 0.0
        %2962 = vmatprep.subr.mxu0 0.0
        %2963 = vmatpush1.msra.mxu0 0.0
        %2964 = vmatprep.subr.mxu0 0.0
        %2965 = vmatpush1.msra.mxu0 0.0
        %2966 = vmatprep.subr.mxu0 0.0
        %2967 = vmatpush1.msra.mxu0 0.0
        %2968 = vmatprep.subr.mxu0 0.0
        %2969 = vmatpush1.msra.mxu0 0.0
        %2970 = vmatprep.subr.mxu0 0.0
        %2971 = vmatpush1.msra.mxu0 0.0
        %2972 = vmatprep.subr.mxu0 0.0
        %2973 = vmatpush1.msra.mxu0 0.0
        %2974 = vmatprep.subr.mxu0 0.0
        %2975 = vmatpush1.msra.mxu0 %v2939
        %2976 = vmatprep.subr.mxu0 0.0
        %2977 = vmatpush2.msra.mxu0 0.0
        %2978 = vmatprep.subr.mxu0 0.0
        %2979 = vmatpush2.msra.mxu0 0.0
        %2980 = vmatprep.subr.mxu0 0.0
        %2981 = vmatpush2.msra.mxu0 0.0
        %2982 = vmatprep.subr.mxu0 0.0
        %2983 = vmatpush2.msra.mxu0 0.0
        %2984 = vmatprep.subr.mxu0 0.0
        %2985 = vmatpush2.msra.mxu0 0.0
        %2986 = vmatprep.subr.mxu0 0.0
        %2987 = vmatpush2.msra.mxu0 0.0
        %2988 = vmatprep.subr.mxu0 0.0
        %2989 = vmatpush2.msra.mxu0 0.0
        %2990 = vmatprep.subr.mxu0 0.0
        %2991 = vmatpush2.msra.mxu0 0.0
        %2992 = vmatprep.subr.mxu0 0.0
        %2993 = vmatpush2.msra.mxu0 0.0
        %2994 = vmatprep.subr.mxu0 0.0
        %2995 = vmatpush2.msra.mxu0 0.0
        %2996 = vmatprep.subr.mxu0 0.0
        %2997 = vmatpush2.msra.mxu0 0.0
        %2998 = vmatprep.subr.mxu0 0.0
        %2999 = vmatpush2.msra.mxu0 0.0
        %3000 = vmatprep.subr.mxu0 0.0
        %3001 = vmatpush2.msra.mxu0 0.0
        %3002 = vmatprep.subr.mxu0 0.0
        %3003 = vmatpush2.msra.mxu0 0.0
        %3004 = vmatprep.subr.mxu0 0.0
        %3005 = vmatpush2.msra.mxu0 0.0
        %3006 = vmatprep.subr.mxu0 0.0
        %3007 = vmatpush2.msra.mxu0 0.0
        %3008 = vmatprep.mubr.f32.mxu0 0.0
        %3009 = vmatmul.mubr.f32.gmra.mxu0 %v2942
        %v3010 = vpop.f32.mrf.mxu0
        %v3011 = vadd.f32 0.0, %v3010
        %v3012 = vpop.f32.mrf.mxu0
        %3013 = vdwg.mxu0
        %3015 = vrot.lane.b32.xlu0 %v3011, 96
        %v3016 = vpop.permute.xlu0 %3015
        %3018 = vst.msk [vmem:[#allocation2] sm:$0xff] %vm1756, %v3016
        %v3019 = vld [vmem:[#allocation2] sm:$0xff]
        %s3020 = scalar_lea.vmem [#allocation8], 128
        %v3021 = vld [vmem:[%s3020] sm:$0xff]
        %v3022 = vld [vmem:[%s3020 + $0x8] sm:$0xff]
        %v3023 = vld [vmem:[%s3020 + $0x10] sm:$0xff]
        %v3024 = vld [vmem:[%s3020 + $0x18] sm:$0xff]
        %v3025 = vld [vmem:[%s3020 + $0x20] sm:$0xff]
        %v3026 = vld [vmem:[%s3020 + $0x28] sm:$0xff]
        %v3027 = vld [vmem:[%s3020 + $0x30] sm:$0xff]
        %v3028 = vld [vmem:[%s3020 + $0x38] sm:$0xff]
        %v3029 = vld [vmem:[%s3020 + $0x40] sm:$0xff]
        %v3030 = vld [vmem:[%s3020 + $0x48] sm:$0xff]
        %v3031 = vld [vmem:[%s3020 + $0x50] sm:$0xff]
        %v3032 = vld [vmem:[%s3020 + $0x58] sm:$0xff]
        %v3033 = vld [vmem:[%s3020 + $0x60] sm:$0xff]
        %v3034 = vld [vmem:[%s3020 + $0x68] sm:$0xff]
        %v3035 = vld [vmem:[%s3020 + $0x70] sm:$0xff]
        %v3036 = vld [vmem:[%s3020 + $0x78] sm:$0xff]
        %s3037 = scalar_lea.vmem %s9, 1
        %v3038 = vld [vmem:[%s3037] sm:$0x1]
        %v3040 = vlaneseq
        %v3041 = vshrl.u32 %v3040, 7
        %v3042 = vsub.s32 0, %v3041
        %v3043 = vrot.slane %v3038, %v3042
        %3045 = vmatprep.subr.mxu0 0.0
        %3046 = vmatpush1.msra.mxu0 %v3036
        %3047 = vmatprep.subr.mxu0 0.0
        %3048 = vmatpush1.msra.mxu0 %v3035
        %3049 = vmatprep.subr.mxu0 0.0
        %3050 = vmatpush1.msra.mxu0 %v3034
        %3051 = vmatprep.subr.mxu0 0.0
        %3052 = vmatpush1.msra.mxu0 %v3033
        %3053 = vmatprep.subr.mxu0 0.0
        %3054 = vmatpush1.msra.mxu0 %v3032
        %3055 = vmatprep.subr.mxu0 0.0
        %3056 = vmatpush1.msra.mxu0 %v3031
        %3057 = vmatprep.subr.mxu0 0.0
        %3058 = vmatpush1.msra.mxu0 %v3030
        %3059 = vmatprep.subr.mxu0 0.0
        %3060 = vmatpush1.msra.mxu0 %v3029
        %3061 = vmatprep.subr.mxu0 0.0
        %3062 = vmatpush1.msra.mxu0 %v3028
        %3063 = vmatprep.subr.mxu0 0.0
        %3064 = vmatpush1.msra.mxu0 %v3027
        %3065 = vmatprep.subr.mxu0 0.0
        %3066 = vmatpush1.msra.mxu0 %v3026
        %3067 = vmatprep.subr.mxu0 0.0
        %3068 = vmatpush1.msra.mxu0 %v3025
        %3069 = vmatprep.subr.mxu0 0.0
        %3070 = vmatpush1.msra.mxu0 %v3024
        %3071 = vmatprep.subr.mxu0 0.0
        %3072 = vmatpush1.msra.mxu0 %v3023
        %3073 = vmatprep.subr.mxu0 0.0
        %3074 = vmatpush1.msra.mxu0 %v3022
        %3075 = vmatprep.subr.mxu0 0.0
        %3076 = vmatpush1.msra.mxu0 %v3021
        %3077 = vmatprep.subr.mxu0 0.0
        %3078 = vmatpush2.msra.mxu0 0.0
        %3079 = vmatprep.subr.mxu0 0.0
        %3080 = vmatpush2.msra.mxu0 0.0
        %3081 = vmatprep.subr.mxu0 0.0
        %3082 = vmatpush2.msra.mxu0 0.0
        %3083 = vmatprep.subr.mxu0 0.0
        %3084 = vmatpush2.msra.mxu0 0.0
        %3085 = vmatprep.subr.mxu0 0.0
        %3086 = vmatpush2.msra.mxu0 0.0
        %3087 = vmatprep.subr.mxu0 0.0
        %3088 = vmatpush2.msra.mxu0 0.0
        %3089 = vmatprep.subr.mxu0 0.0
        %3090 = vmatpush2.msra.mxu0 0.0
        %3091 = vmatprep.subr.mxu0 0.0
        %3092 = vmatpush2.msra.mxu0 0.0
        %3093 = vmatprep.subr.mxu0 0.0
        %3094 = vmatpush2.msra.mxu0 0.0
        %3095 = vmatprep.subr.mxu0 0.0
        %3096 = vmatpush2.msra.mxu0 0.0
        %3097 = vmatprep.subr.mxu0 0.0
        %3098 = vmatpush2.msra.mxu0 0.0
        %3099 = vmatprep.subr.mxu0 0.0
        %3100 = vmatpush2.msra.mxu0 0.0
        %3101 = vmatprep.subr.mxu0 0.0
        %3102 = vmatpush2.msra.mxu0 0.0
        %3103 = vmatprep.subr.mxu0 0.0
        %3104 = vmatpush2.msra.mxu0 0.0
        %3105 = vmatprep.subr.mxu0 0.0
        %3106 = vmatpush2.msra.mxu0 0.0
        %3107 = vmatprep.subr.mxu0 0.0
        %3108 = vmatpush2.msra.mxu0 0.0
        %3109 = vmatprep.mubr.f32.mxu0 0.0
        %3110 = vmatmul.mubr.f32.gmra.mxu0 %v3019
        %v3111 = vpop.f32.mrf.mxu0
        %v3112 = vadd.f32 %v3043, %v3111
        %v3113 = vpop.f32.mrf.mxu0
        %3114 = vdwg.mxu0
        %v3115 = vadd.f32 %v3112, %v2134
        %s3116 = scalar_lea.vmem %s10, 1
        %v3117 = vld [vmem:[%s3116] sm:$0x1]
        %s3118 = scalar_lea.vmem %s11, 1
        %v3119 = vld [vmem:[%s3118] sm:$0x1]
        %3120 = vadd.xlane.f32.xlu0 %v3115
        %v3121 = vpop.xlane.xlu0 %3120
        %v3122 = vmul.f32 %v3121, %v1857
        %v3123 = vsub.f32 %v3115, %v3122
        %v3124 = vmul.f32 %v3123, %v3123
        %3125 = vadd.xlane.f32.xlu0 %v3124
        %v3126 = vpop.xlane.xlu0 %3125
        %v3127 = vmul.f32 %v3126, %v1857
        %v3128 = vadd.f32 %v3127, 1e-05
        %v3129 = vrsqrt.pop %v3128
        %v3130 = vmul.f32 %v3123, %v3129
        %v3132 = vlaneseq
        %v3133 = vshrl.u32 %v3132, 7
        %v3134 = vsub.s32 0, %v3133
        %v3135 = vrot.slane %v3117, %v3134
        %v3137 = vmul.f32 %v3130, %v3135
        %v3139 = vlaneseq
        %v3140 = vshrl.u32 %v3139, 7
        %v3141 = vsub.s32 0, %v3140
        %v3142 = vrot.slane %v3119, %v3141
        %v3144 = vadd.f32 %v3137, %v3142
        %s3145 = scalar_lea.vmem [#allocation10], 256
        %v3146 = vld [vmem:[%s3145] sm:$0xff]
        %v3147 = vld [vmem:[%s3145 + $0x8] sm:$0xff]
        %v3148 = vld [vmem:[%s3145 + $0x10] sm:$0xff]
        %v3149 = vld [vmem:[%s3145 + $0x18] sm:$0xff]
        %v3150 = vld [vmem:[%s3145 + $0x20] sm:$0xff]
        %v3151 = vld [vmem:[%s3145 + $0x28] sm:$0xff]
        %v3152 = vld [vmem:[%s3145 + $0x30] sm:$0xff]
        %v3153 = vld [vmem:[%s3145 + $0x38] sm:$0xff]
        %v3154 = vld [vmem:[%s3145 + $0x40] sm:$0xff]
        %v3155 = vld [vmem:[%s3145 + $0x48] sm:$0xff]
        %v3156 = vld [vmem:[%s3145 + $0x50] sm:$0xff]
        %v3157 = vld [vmem:[%s3145 + $0x58] sm:$0xff]
        %v3158 = vld [vmem:[%s3145 + $0x60] sm:$0xff]
        %v3159 = vld [vmem:[%s3145 + $0x68] sm:$0xff]
        %v3160 = vld [vmem:[%s3145 + $0x70] sm:$0xff]
        %v3161 = vld [vmem:[%s3145 + $0x78] sm:$0xff]
        %v3162 = vld [vmem:[%s3145 + $0x80] sm:$0xff]
        %v3163 = vld [vmem:[%s3145 + $0x88] sm:$0xff]
        %v3164 = vld [vmem:[%s3145 + $0x90] sm:$0xff]
        %v3165 = vld [vmem:[%s3145 + $0x98] sm:$0xff]
        %v3166 = vld [vmem:[%s3145 + $0xa0] sm:$0xff]
        %v3167 = vld [vmem:[%s3145 + $0xa8] sm:$0xff]
        %v3168 = vld [vmem:[%s3145 + $0xb0] sm:$0xff]
        %v3169 = vld [vmem:[%s3145 + $0xb8] sm:$0xff]
        %v3170 = vld [vmem:[%s3145 + $0xc0] sm:$0xff]
        %v3171 = vld [vmem:[%s3145 + $0xc8] sm:$0xff]
        %v3172 = vld [vmem:[%s3145 + $0xd0] sm:$0xff]
        %v3173 = vld [vmem:[%s3145 + $0xd8] sm:$0xff]
        %v3174 = vld [vmem:[%s3145 + $0xe0] sm:$0xff]
        %v3175 = vld [vmem:[%s3145 + $0xe8] sm:$0xff]
        %v3176 = vld [vmem:[%s3145 + $0xf0] sm:$0xff]
        %v3177 = vld [vmem:[%s3145 + $0xf8] sm:$0xff]
        %s3178 = scalar_lea.vmem %s13, 2
        %v3179 = vld [vmem:[%s3178] sm:$0x3]
        %v3181 = vlaneseq
        %v3182 = vshrl.u32 %v3181, 7
        %v3183 = vsub.s32 0, %v3182
        %v3184 = vrot.slane %v3179, %v3183
        %v3185 = vlaneseq
        %v3186 = vshrl.u32 %v3185, 7
        %v3187 = vsub.s32 1, %v3186
        %v3188 = vrot.slane %v3179, %v3187
        %3191 = vmatprep.subr.mxu0 %v3177
        %3192 = vmatpush1.msra.mxu0 %v3176
        %3193 = vmatprep.subr.mxu0 %v3175
        %3194 = vmatpush1.msra.mxu0 %v3174
        %3195 = vmatprep.subr.mxu0 %v3173
        %3196 = vmatpush1.msra.mxu0 %v3172
        %3197 = vmatprep.subr.mxu0 %v3171
        %3198 = vmatpush1.msra.mxu0 %v3170
        %3199 = vmatprep.subr.mxu0 %v3169
        %3200 = vmatpush1.msra.mxu0 %v3168
        %3201 = vmatprep.subr.mxu0 %v3167
        %3202 = vmatpush1.msra.mxu0 %v3166
        %3203 = vmatprep.subr.mxu0 %v3165
        %3204 = vmatpush1.msra.mxu0 %v3164
        %3205 = vmatprep.subr.mxu0 %v3163
        %3206 = vmatpush1.msra.mxu0 %v3162
        %3207 = vmatprep.subr.mxu0 %v3161
        %3208 = vmatpush1.msra.mxu0 %v3160
        %3209 = vmatprep.subr.mxu0 %v3159
        %3210 = vmatpush1.msra.mxu0 %v3158
        %3211 = vmatprep.subr.mxu0 %v3157
        %3212 = vmatpush1.msra.mxu0 %v3156
        %3213 = vmatprep.subr.mxu0 %v3155
        %3214 = vmatpush1.msra.mxu0 %v3154
        %3215 = vmatprep.subr.mxu0 %v3153
        %3216 = vmatpush1.msra.mxu0 %v3152
        %3217 = vmatprep.subr.mxu0 %v3151
        %3218 = vmatpush1.msra.mxu0 %v3150
        %3219 = vmatprep.subr.mxu0 %v3149
        %3220 = vmatpush1.msra.mxu0 %v3148
        %3221 = vmatprep.subr.mxu0 %v3147
        %3222 = vmatpush1.msra.mxu0 %v3146
        %3223 = vmatprep.subr.mxu0 0.0
        %3224 = vmatpush2.msra.mxu0 0.0
        %3225 = vmatprep.subr.mxu0 0.0
        %3226 = vmatpush2.msra.mxu0 0.0
        %3227 = vmatprep.subr.mxu0 0.0
        %3228 = vmatpush2.msra.mxu0 0.0
        %3229 = vmatprep.subr.mxu0 0.0
        %3230 = vmatpush2.msra.mxu0 0.0
        %3231 = vmatprep.subr.mxu0 0.0
        %3232 = vmatpush2.msra.mxu0 0.0
        %3233 = vmatprep.subr.mxu0 0.0
        %3234 = vmatpush2.msra.mxu0 0.0
        %3235 = vmatprep.subr.mxu0 0.0
        %3236 = vmatpush2.msra.mxu0 0.0
        %3237 = vmatprep.subr.mxu0 0.0
        %3238 = vmatpush2.msra.mxu0 0.0
        %3239 = vmatprep.subr.mxu0 0.0
        %3240 = vmatpush2.msra.mxu0 0.0
        %3241 = vmatprep.subr.mxu0 0.0
        %3242 = vmatpush2.msra.mxu0 0.0
        %3243 = vmatprep.subr.mxu0 0.0
        %3244 = vmatpush2.msra.mxu0 0.0
        %3245 = vmatprep.subr.mxu0 0.0
        %3246 = vmatpush2.msra.mxu0 0.0
        %3247 = vmatprep.subr.mxu0 0.0
        %3248 = vmatpush2.msra.mxu0 0.0
        %3249 = vmatprep.subr.mxu0 0.0
        %3250 = vmatpush2.msra.mxu0 0.0
        %3251 = vmatprep.subr.mxu0 0.0
        %3252 = vmatpush2.msra.mxu0 0.0
        %3253 = vmatprep.subr.mxu0 0.0
        %3254 = vmatpush2.msra.mxu0 0.0
        %3255 = vmatprep.mubr.f32.mxu0 0.0
        %3256 = vmatmul.mubr.f32.gmra.mxu0 %v3144
        %v3257 = vpop.f32.mrf.mxu0
        %v3258 = vadd.f32 %v3184, %v3257
        %v3259 = vpop.f32.mrf.mxu0
        %v3260 = vadd.f32 %v3188, %v3259
        %3261 = vdwg.mxu0
        %v3262 = vmax.f32 %v3258, 0.0
        %v3263 = vmax.f32 %v3260, 0.0
        %s3264 = scalar_lea.vmem [#allocation11], 256
        %v3265 = vld [vmem:[%s3264] sm:$0xff]
        %v3266 = vld [vmem:[%s3264 + $0x8] sm:$0xff]
        %v3267 = vld [vmem:[%s3264 + $0x10] sm:$0xff]
        %v3268 = vld [vmem:[%s3264 + $0x18] sm:$0xff]
        %v3269 = vld [vmem:[%s3264 + $0x20] sm:$0xff]
        %v3270 = vld [vmem:[%s3264 + $0x28] sm:$0xff]
        %v3271 = vld [vmem:[%s3264 + $0x30] sm:$0xff]
        %v3272 = vld [vmem:[%s3264 + $0x38] sm:$0xff]
        %v3273 = vld [vmem:[%s3264 + $0x40] sm:$0xff]
        %v3274 = vld [vmem:[%s3264 + $0x48] sm:$0xff]
        %v3275 = vld [vmem:[%s3264 + $0x50] sm:$0xff]
        %v3276 = vld [vmem:[%s3264 + $0x58] sm:$0xff]
        %v3277 = vld [vmem:[%s3264 + $0x60] sm:$0xff]
        %v3278 = vld [vmem:[%s3264 + $0x68] sm:$0xff]
        %v3279 = vld [vmem:[%s3264 + $0x70] sm:$0xff]
        %v3280 = vld [vmem:[%s3264 + $0x78] sm:$0xff]
        %v3281 = vld [vmem:[%s3264 + $0x80] sm:$0xff]
        %v3282 = vld [vmem:[%s3264 + $0x88] sm:$0xff]
        %v3283 = vld [vmem:[%s3264 + $0x90] sm:$0xff]
        %v3284 = vld [vmem:[%s3264 + $0x98] sm:$0xff]
        %v3285 = vld [vmem:[%s3264 + $0xa0] sm:$0xff]
        %v3286 = vld [vmem:[%s3264 + $0xa8] sm:$0xff]
        %v3287 = vld [vmem:[%s3264 + $0xb0] sm:$0xff]
        %v3288 = vld [vmem:[%s3264 + $0xb8] sm:$0xff]
        %v3289 = vld [vmem:[%s3264 + $0xc0] sm:$0xff]
        %v3290 = vld [vmem:[%s3264 + $0xc8] sm:$0xff]
        %v3291 = vld [vmem:[%s3264 + $0xd0] sm:$0xff]
        %v3292 = vld [vmem:[%s3264 + $0xd8] sm:$0xff]
        %v3293 = vld [vmem:[%s3264 + $0xe0] sm:$0xff]
        %v3294 = vld [vmem:[%s3264 + $0xe8] sm:$0xff]
        %v3295 = vld [vmem:[%s3264 + $0xf0] sm:$0xff]
        %v3296 = vld [vmem:[%s3264 + $0xf8] sm:$0xff]
        %s3297 = scalar_lea.vmem %s15, 1
        %v3298 = vld [vmem:[%s3297] sm:$0x1]
        %v3300 = vlaneseq
        %v3301 = vshrl.u32 %v3300, 7
        %v3302 = vsub.s32 0, %v3301
        %v3303 = vrot.slane %v3298, %v3302
        %3305 = vmatprep.subr.mxu0 0.0
        %3306 = vmatpush1.msra.mxu0 %v3280
        %3307 = vmatprep.subr.mxu0 0.0
        %3308 = vmatpush1.msra.mxu0 %v3279
        %3309 = vmatprep.subr.mxu0 0.0
        %3310 = vmatpush1.msra.mxu0 %v3278
        %3311 = vmatprep.subr.mxu0 0.0
        %3312 = vmatpush1.msra.mxu0 %v3277
        %3313 = vmatprep.subr.mxu0 0.0
        %3314 = vmatpush1.msra.mxu0 %v3276
        %3315 = vmatprep.subr.mxu0 0.0
        %3316 = vmatpush1.msra.mxu0 %v3275
        %3317 = vmatprep.subr.mxu0 0.0
        %3318 = vmatpush1.msra.mxu0 %v3274
        %3319 = vmatprep.subr.mxu0 0.0
        %3320 = vmatpush1.msra.mxu0 %v3273
        %3321 = vmatprep.subr.mxu0 0.0
        %3322 = vmatpush1.msra.mxu0 %v3272
        %3323 = vmatprep.subr.mxu0 0.0
        %3324 = vmatpush1.msra.mxu0 %v3271
        %3325 = vmatprep.subr.mxu0 0.0
        %3326 = vmatpush1.msra.mxu0 %v3270
        %3327 = vmatprep.subr.mxu0 0.0
        %3328 = vmatpush1.msra.mxu0 %v3269
        %3329 = vmatprep.subr.mxu0 0.0
        %3330 = vmatpush1.msra.mxu0 %v3268
        %3331 = vmatprep.subr.mxu0 0.0
        %3332 = vmatpush1.msra.mxu0 %v3267
        %3333 = vmatprep.subr.mxu0 0.0
        %3334 = vmatpush1.msra.mxu0 %v3266
        %3335 = vmatprep.subr.mxu0 0.0
        %3336 = vmatpush1.msra.mxu0 %v3265
        %3337 = vmatprep.subr.mxu0 0.0
        %3338 = vmatpush2.msra.mxu0 %v3296
        %3339 = vmatprep.subr.mxu0 0.0
        %3340 = vmatpush2.msra.mxu0 %v3295
        %3341 = vmatprep.subr.mxu0 0.0
        %3342 = vmatpush2.msra.mxu0 %v3294
        %3343 = vmatprep.subr.mxu0 0.0
        %3344 = vmatpush2.msra.mxu0 %v3293
        %3345 = vmatprep.subr.mxu0 0.0
        %3346 = vmatpush2.msra.mxu0 %v3292
        %3347 = vmatprep.subr.mxu0 0.0
        %3348 = vmatpush2.msra.mxu0 %v3291
        %3349 = vmatprep.subr.mxu0 0.0
        %3350 = vmatpush2.msra.mxu0 %v3290
        %3351 = vmatprep.subr.mxu0 0.0
        %3352 = vmatpush2.msra.mxu0 %v3289
        %3353 = vmatprep.subr.mxu0 0.0
        %3354 = vmatpush2.msra.mxu0 %v3288
        %3355 = vmatprep.subr.mxu0 0.0
        %3356 = vmatpush2.msra.mxu0 %v3287
        %3357 = vmatprep.subr.mxu0 0.0
        %3358 = vmatpush2.msra.mxu0 %v3286
        %3359 = vmatprep.subr.mxu0 0.0
        %3360 = vmatpush2.msra.mxu0 %v3285
        %3361 = vmatprep.subr.mxu0 0.0
        %3362 = vmatpush2.msra.mxu0 %v3284
        %3363 = vmatprep.subr.mxu0 0.0
        %3364 = vmatpush2.msra.mxu0 %v3283
        %3365 = vmatprep.subr.mxu0 0.0
        %3366 = vmatpush2.msra.mxu0 %v3282
        %3367 = vmatprep.subr.mxu0 0.0
        %3368 = vmatpush2.msra.mxu0 %v3281
        %3369 = vmatprep.mubr.f32.mxu0 %v3263
        %3370 = vmatmul.mubr.f32.gmra.mxu0 %v3262
        %v3371 = vpop.f32.mrf.mxu0
        %v3372 = vadd.f32 %v3303, %v3371
        %v3373 = vpop.f32.mrf.mxu0
        %3374 = vdwg.mxu0
        %v3375 = vadd.f32 %v3372, %v3144
        %s3376 = scalar_lea.vmem %s16, 1
        %v3377 = vld [vmem:[%s3376] sm:$0x1]
        %s3378 = scalar_lea.vmem %s17, 1
        %v3379 = vld [vmem:[%s3378] sm:$0x1]
        %3380 = vadd.xlane.f32.xlu0 %v3375
        %v3381 = vpop.xlane.xlu0 %3380
        %v3382 = vmul.f32 %v3381, %v1857
        %v3383 = vsub.f32 %v3375, %v3382
        %v3384 = vmul.f32 %v3383, %v3383
        %3385 = vadd.xlane.f32.xlu0 %v3384
        %v3386 = vpop.xlane.xlu0 %3385
        %v3387 = vmul.f32 %v3386, %v1857
        %v3388 = vadd.f32 %v3387, 1e-05
        %v3389 = vrsqrt.pop %v3388
        %v3390 = vmul.f32 %v3383, %v3389
        %v3392 = vlaneseq
        %v3393 = vshrl.u32 %v3392, 7
        %v3394 = vsub.s32 0, %v3393
        %v3395 = vrot.slane %v3377, %v3394
        %v3397 = vmul.f32 %v3390, %v3395
        %v3399 = vlaneseq
        %v3400 = vshrl.u32 %v3399, 7
        %v3401 = vsub.s32 0, %v3400
        %v3402 = vrot.slane %v3379, %v3401
        %v3404 = vadd.f32 %v3397, %v3402
        %3405 = vst [vmem:[%s661] sm:$0xff] %v3404
        %p3406 = scmp.lt.s32.totalorder %s33, 1
        %s3407 = scalar_select %p3406, %s33, 1
        %s3408 = smul.addr %s3407, 8
        %s3409 = scalar_lea.vmem %s18, %s3408
        // Predicated region
        $region117: #{_lambda_.1} parent=91 // pred_check
          %p3410 = pneg %p434
        $region118: #{_lambda_.1} parent=91 // pred_check_branch
          %3412 = sbr.rel (%p3410) target = $region120
        $region119: #{_lambda_.1} parent=91 // pred_region
          _
        $region120: #{_lambda_.1} parent=91 // pred_fallthru
          _
      $region92: #{_lambda_.1} parent=5 // pred_fallthru
        _
      %p3413 = scmp.le.s32.totalorder 2, %s28
      // Predicated region
      $region121: #{_lambda_.1} parent=5 // pred_check
        %p3414 = pneg %p3413
      $region122: #{_lambda_.1} parent=5 // pred_check_branch
        %3416 = sbr.rel (%p3414) target = $region124
      $region123: #{_lambda_.1} parent=5 // pred_region
        %s3417 = ssub.s32 %s28, 2
        // Predicated region
        $region125: #{_lambda_.1} parent=123 // pred_check
          %p3418 = pneg %p440
        $region126: #{_lambda_.1} parent=123 // pred_check_branch
          %3420 = sbr.rel (%p3418) target = $region128
        $region127: #{_lambda_.1} parent=123 // pred_region
          %p3421 = scmp.lt.s32.totalorder %s34, 1
          %s3422 = scalar_select %p3421, %s34, 1
          %s3423 = smul.addr %s3422, 8
          %s3424 = scalar_lea.vmem %s18, %s3423
        $region128: #{_lambda_.1} parent=123 // pred_fallthru
          _
      $region124: #{_lambda_.1} parent=5 // pred_fallthru
        _
    $region6: #{_lambda_.1} parent=1 // loop_footer
      %s32 = sadd.s32 1, %s28
    $region7: #{_lambda_.1} parent=1 // loop_footer_branch
      %27 = sbr.rel target = $region3
    $region8: #{_lambda_.1} parent=1 // loop_exit
      _
    %3425 = vsyncpa [#allocation4], 1
    %s3426 = scalar_lea.sflag [#allocation4], 1
    %3427 = vsyncpa %s3426, 1
    %3428 = vsyncpa [#allocation6], 1
    %3429 = vsyncpa [#allocation9], 1
    %3430 = vsyncpa [#allocation12], 1

</llo_original>
